<compile_context>
chip_gen: v7x
topology: tpu7x:2x2x1
jax: 0.10.0
libtpu: 0.0.40
codegen_flags: <defaults>
</compile_context>

<pallas_src>
import jax
import jax.numpy as jnp
from jax.experimental import pallas as pl
from jax.experimental.pallas import tpu as pltpu

D_IN = 32 * 32 * 3   # 3072
D_HID = 512
D_OUT = 100
D_OUT_PAD = 128      # lane-dense padded fc2 width


def mlp_kernel(x_ref, w1_ref, b1_ref, w2_ref, b2_ref, o_ref):
    # fc1 + tanh: MXU matmul with f32 accumulation; bias add on VPU, tanh on
    # EUP — both are free filler while the MXU is the binding unit.
    h = jnp.tanh(
        jnp.dot(x_ref[...], w1_ref[...], preferred_element_type=jnp.float32)
        + b1_ref[...]
    )
    # fc2 (output padded to 128 lanes -> unmasked stores, full MXU tile)
    o_ref[...] = (
        jnp.dot(h, w2_ref[...], preferred_element_type=jnp.float32) + b2_ref[...]
    ).astype(o_ref.dtype)


def prepare_params(w1, b1, w2, b2):
    """One-time parameter prep (hoisted out of the per-call path).

    w1: (512, 3072), b1: (512,), w2: (100, 512), b2: (100,)  [torch layout]
    Returns weights as (in, out) with fc2 padded to 128 output lanes.
    """
    w1t = jnp.asarray(w1).T                                    # (3072, 512)
    b1r = jnp.asarray(b1).reshape(1, D_HID)                    # (1, 512)
    w2t = jnp.pad(jnp.asarray(w2).T, ((0, 0), (0, D_OUT_PAD - D_OUT)))  # (512, 128)
    b2r = jnp.pad(jnp.asarray(b2).reshape(1, D_OUT),
                  ((0, 0), (0, D_OUT_PAD - D_OUT)))            # (1, 128)
    return w1t, b1r, w2t, b2r


def zenketugou_forward(x, w1t, b1r, w2t, b2r, *, tile_m=512):
    """x: (B, 3, 32, 32) or (B, 3072) float32.  Params from prepare_params().

    Returns (B, 100) float32.
    """
    B = x.shape[0]
    x2d = x.reshape(B, D_IN)                  # same flatten order as torch .view

    if B <= tile_m:
        # Single tile covering the whole (small) batch: block == full array dim,
        # which is legal for any B (no (8,128) divisibility requirement).
        tm = B
        b_pad = B
    else:
        # Tile the batch; pad rows up to a multiple of the tile so every block
        # is full (padded rows are discarded after the call).
        tm = tile_m
        b_pad = ((B + tm - 1) // tm) * tm
        if b_pad != B:
            x2d = jnp.pad(x2d, ((0, b_pad - B), (0, 0)))

    grid = (b_pad // tm,)

    out_padded = pl.pallas_call(
        mlp_kernel,
        out_shape=jax.ShapeDtypeStruct((b_pad, D_OUT_PAD), jnp.float32),
        grid_spec=pltpu.PrefetchScalarGridSpec(
            num_scalar_prefetch=0,
            grid=grid,
            in_specs=[
                pl.BlockSpec((tm, D_IN), lambda i: (i, 0)),          # x tile (pipelined)
                pl.BlockSpec((D_IN, D_HID), lambda i: (0, 0)),       # w1 resident
                pl.BlockSpec((1, D_HID), lambda i: (0, 0)),          # b1 resident
                pl.BlockSpec((D_HID, D_OUT_PAD), lambda i: (0, 0)),  # w2 resident
                pl.BlockSpec((1, D_OUT_PAD), lambda i: (0, 0)),      # b2 resident
            ],
            out_specs=pl.BlockSpec((tm, D_OUT_PAD), lambda i: (i, 0)),
        ),
        compiler_params=pltpu.CompilerParams(
            dimension_semantics=("parallel",),   # shard batch tiles across TCs (v7x)
            vmem_limit_bytes=48 << 20,           # headroom under v7x's 64 MiB VMEM
        ),
    )(x2d, w1t, b1r, w2t, b2r)

    # TODO(synk): optional bf16 fc1 inputs (x/w1) for v5e MXU peak — kept f32
    # here to preserve the 1e-4 numerical tolerance.
    return out_padded[:B, :D_OUT]


def init_params(key):
    """Deterministic init matching the nn.Linear shapes (Kaiming-uniform-ish)."""
    k1, k2, k3, k4 = jax.random.split(key, 4)
    lim1 = 1.0 / (D_IN ** 0.5)
    lim2 = 1.0 / (D_HID ** 0.5)
    w1 = jax.random.uniform(k1, (D_HID, D_IN), jnp.float32, -lim1, lim1)
    b1 = jax.random.uniform(k2, (D_HID,), jnp.float32, -lim1, lim1)
    w2 = jax.random.uniform(k3, (D_OUT, D_HID), jnp.float32, -lim2, lim2)
    b2 = jax.random.uniform(k4, (D_OUT,), jnp.float32, -lim2, lim2)
    return w1, b1, w2, b2


if __name__ == "__main__":
    key = jax.random.PRNGKey(0)
    kx, kp = jax.random.split(key)

    # small batch of 32x32 RGB images (NCHW), consistent with view(-1, 32*32*3)
    x = jax.random.normal(kx, (2, 3, 32, 32), jnp.float32)
    w1, b1, w2, b2 = init_params(kp)

    # one-time parameter prep (transpose + lane padding), outside the hot path
    w1t, b1r, w2t, b2r = prepare_params(w1, b1, w2, b2)

    out = zenketugou_forward(x, w1t, b1r, w2t, b2r)
    out = jax.block_until_ready(out)

    # reference check in plain JAX
    x2d = x.reshape(2, D_IN)
    ref = jnp.tanh(x2d @ w1.T + b1) @ w2.T + b2
    assert out.shape == (2, D_OUT)
    assert jnp.allclose(out, ref, atol=1e-4, rtol=1e-4)

    print("KERNEL_OK")
</pallas_src>

<mosaic_0001>
module attributes {stable_mosaic.version = 11 : i64} {
  func.func @mlp_kernel(%arg0: i32, %arg1: memref<2x3072xf32, #tpu.memory_space<vmem>>, %arg2: memref<3072x512xf32, #tpu.memory_space<vmem>>, %arg3: memref<1x512xf32, #tpu.memory_space<vmem>>, %arg4: memref<512x128xf32, #tpu.memory_space<vmem>>, %arg5: memref<1x128xf32, #tpu.memory_space<vmem>>, %arg6: memref<2x128xf32, #tpu.memory_space<vmem>>) attributes {dimension_semantics = [#tpu.dimension_semantics<parallel>], iteration_bounds = array<i64: 1>, scalar_prefetch = 0 : i64, scratch_operands = 0 : i64, tpu.core_type = #tpu.core_type<tc>, window_params = [{transform_indices = @transform_0, window_bounds = array<i64: 2, 3072>}, {pipeline_mode = #tpu.pipeline_mode<synchronous>, transform_indices = @transform_1, window_bounds = array<i64: 3072, 512>}, {pipeline_mode = #tpu.pipeline_mode<synchronous>, transform_indices = @transform_2, window_bounds = array<i64: 1, 512>}, {pipeline_mode = #tpu.pipeline_mode<synchronous>, transform_indices = @transform_3, window_bounds = array<i64: 512, 128>}, {pipeline_mode = #tpu.pipeline_mode<synchronous>, transform_indices = @transform_4, window_bounds = array<i64: 1, 128>}, {transform_indices = @transform_5, window_bounds = array<i64: 2, 128>}]} {
    %c0 = arith.constant 0 : index
    %c0_0 = arith.constant 0 : index
    %0 = vector.load %arg1[%c0, %c0_0] : memref<2x3072xf32, #tpu.memory_space<vmem>>, vector<2x3072xf32>
    %c0_1 = arith.constant 0 : index
    %c0_2 = arith.constant 0 : index
    %1 = vector.load %arg2[%c0_1, %c0_2] : memref<3072x512xf32, #tpu.memory_space<vmem>>, vector<3072x512xf32>
    %cst = arith.constant dense<0.000000e+00> : vector<2x512xf32>
    %2 = tpu.matmul %0, %1, %cst {dimension_numbers = #tpu.dot_dimension_numbers<[1], [0], [0], [1], [0, 0, 1, 1], [], []>} : vector<2x3072xf32>, vector<3072x512xf32>, vector<2x512xf32> -> vector<2x512xf32>
    %c0_3 = arith.constant 0 : index
    %c0_4 = arith.constant 0 : index
    %3 = vector.load %arg3[%c0_3, %c0_4] : memref<1x512xf32, #tpu.memory_space<vmem>>, vector<1x512xf32>
    %4 = vector.broadcast %3 : vector<1x512xf32> to vector<2x512xf32>
    %5 = arith.addf %2, %4 : vector<2x512xf32>
    %6 = math.tanh %5 : vector<2x512xf32>
    %c0_5 = arith.constant 0 : index
    %c0_6 = arith.constant 0 : index
    %7 = vector.load %arg4[%c0_5, %c0_6] : memref<512x128xf32, #tpu.memory_space<vmem>>, vector<512x128xf32>
    %cst_7 = arith.constant dense<0.000000e+00> : vector<2x128xf32>
    %8 = tpu.matmul %6, %7, %cst_7 {dimension_numbers = #tpu.dot_dimension_numbers<[1], [0], [0], [1], [0, 0, 1, 1], [], []>} : vector<2x512xf32>, vector<512x128xf32>, vector<2x128xf32> -> vector<2x128xf32>
    %c0_8 = arith.constant 0 : index
    %c0_9 = arith.constant 0 : index
    %9 = vector.load %arg5[%c0_8, %c0_9] : memref<1x128xf32, #tpu.memory_space<vmem>>, vector<1x128xf32>
    %10 = vector.broadcast %9 : vector<1x128xf32> to vector<2x128xf32>
    %11 = arith.addf %8, %10 : vector<2x128xf32>
    %c0_10 = arith.constant 0 : index
    %c0_11 = arith.constant 0 : index
    %12 = vector.load %arg6[%c0_10, %c0_11] : memref<2x128xf32, #tpu.memory_space<vmem>>, vector<2x128xf32>
    tpu.vector_store %arg6[%c0_10, %c0_11], %11 {strides = array<i32>} : memref<2x128xf32, #tpu.memory_space<vmem>>, vector<2x128xf32>,
    return
  }
  func.func @transform_0(%arg0: i32) -> (i32, i32) {
    %c0_i32 = arith.constant 0 : i32
    %c0_i32_0 = arith.constant 0 : i32
    return %arg0, %c0_i32 : i32, i32
  }
  func.func @transform_1(%arg0: i32) -> (i32, i32) {
    %c0_i32 = arith.constant 0 : i32
    %c0_i32_0 = arith.constant 0 : i32
    %c0_i32_1 = arith.constant 0 : i32
    return %c0_i32, %c0_i32_0 : i32, i32
  }
  func.func @transform_2(%arg0: i32) -> (i32, i32) {
    %c0_i32 = arith.constant 0 : i32
    %c0_i32_0 = arith.constant 0 : i32
    %c0_i32_1 = arith.constant 0 : i32
    return %c0_i32, %c0_i32_0 : i32, i32
  }
  func.func @transform_3(%arg0: i32) -> (i32, i32) {
    %c0_i32 = arith.constant 0 : i32
    %c0_i32_0 = arith.constant 0 : i32
    %c0_i32_1 = arith.constant 0 : i32
    return %c0_i32, %c0_i32_0 : i32, i32
  }
  func.func @transform_4(%arg0: i32) -> (i32, i32) {
    %c0_i32 = arith.constant 0 : i32
    %c0_i32_0 = arith.constant 0 : i32
    %c0_i32_1 = arith.constant 0 : i32
    return %c0_i32, %c0_i32_0 : i32, i32
  }
  func.func @transform_5(%arg0: i32) -> (i32, i32) {
    %c0_i32 = arith.constant 0 : i32
    %c0_i32_0 = arith.constant 0 : i32
    return %arg0, %c0_i32 : i32, i32
  }
}

</mosaic_0001>

<llo_original>
// kernel: tpu_custom_call.1
$region0: #{tpu_custom_call.1}
  #allocation0 [shape = 'u32[]', space=smem, size = 0x4, offset = 0x4, fixed_abs, tag = 'smem constant byte address 0x4 - core index']
  #allocation1 [shape = 'u32[144,128]{1,0:T(1,128)}', space=vmem, size = 0x12000, scoped, tag = 'internal scratch']
  %s0 = inlined_call_operand.hbm [shape: f32[2,3072], index: 0, kind: input, shape index: {}]
  %s1 = inlined_call_operand.hbm [shape: f32[3072,512], index: 1, kind: input, shape index: {}]
  %s2 = inlined_call_operand.hbm [shape: f32[1,512], index: 2, kind: input, shape index: {}]
  %s3 = inlined_call_operand.hbm [shape: f32[512,128], index: 3, kind: input, shape index: {}]
  %s4 = inlined_call_operand.hbm [shape: f32[1,128], index: 4, kind: input, shape index: {}]
  %s5 = inlined_call_operand.hbm [shape: f32[2,128], index: 5, kind: output, shape index: {}]
  %s6 = sld [smem:[#allocation0]]
  $region50: #{tpu_custom_call.1} parent=0
    _
  %s8 = ssub.s32 1, %s6
  %s9 = scalar_select 0, %s8, %s6
  $region1: #{tpu_custom_call.1} parent=0
    #allocation2 [shape = 'u8[24576]{0}', space=vmem, size = 0x6000, scoped, tag = 'input window, operand 0, single buffered']
    #allocation3 [shape = 's32[1]{0}', space=sflag, size = 0x4, scoped, tag = 'scoped memory for tpu_custom_call.1']
    #allocation4 [shape = 's32[1]{0}', space=sflag, size = 0x4, scoped, tag = 'scoped memory for tpu_custom_call.1']
    #allocation5 [shape = 'u8[6291456]{0}', space=vmem, size = 0x600000, scoped, tag = 'input window, operand 1, single buffered']
    #allocation6 [shape = 's32[1]{0}', space=sflag, size = 0x4, scoped, tag = 'scoped memory for tpu_custom_call.1']
    #allocation7 [shape = 'u8[2048]{0}', space=vmem, size = 0x800, scoped, tag = 'input window, operand 2, single buffered']
    #allocation8 [shape = 'u8[262144]{0}', space=vmem, size = 0x40000, scoped, tag = 'input window, operand 3, single buffered']
    #allocation9 [shape = 's32[1]{0}', space=sflag, size = 0x4, scoped, tag = 'scoped memory for tpu_custom_call.1']
    #allocation10 [shape = 'u8[512]{0}', space=vmem, size = 0x400, scoped, tag = 'input window, operand 4, single buffered']
    #allocation11 [shape = 'u8[1024]{0}', space=vmem, size = 0x400, scoped, tag = 'output window, operand 0, single buffered']
    %10 = vsyncpa [#allocation3], 0
    %11 = vsyncpa [#allocation6], 0
    %12 = vsyncpa [#allocation9], 0
    %13 = vsyncpa [#allocation4], 0
    // Predicated region
    $region2: #{tpu_custom_call.1} parent=1 // pred_check
      _
    $region3: #{tpu_custom_call.1} parent=1 // pred_check_branch
      %15 = sbr.rel (0) target = $region5
    $region4: #{tpu_custom_call.1} parent=1 // pred_region
      %s17 = ssub.s32 768, 768
      %18 = vsyncadd [#allocation3], %s17
      %s20 = sshll.u32 [#allocation2], 4
      %s21 = int_to_ptr.vmem [resolvable:$true] %s20
      %23 = dma.hbm_to_vmem [thread:$0]  %s0, 768, %s21, [#allocation3]
    $region5: #{tpu_custom_call.1} parent=1 // pred_fallthru
      _
    // Predicated region
    $region6: #{tpu_custom_call.1} parent=1 // pred_check
      _
    $region7: #{tpu_custom_call.1} parent=1 // pred_check_branch
      %25 = sbr.rel (0) target = $region9
    $region8: #{tpu_custom_call.1} parent=1 // pred_region
      %s27 = ssub.s32 196608, 196608
      %28 = vsyncadd [#allocation6], %s27
      %s29 = sshll.u32 [#allocation5], 4
      %s30 = int_to_ptr.vmem [resolvable:$true] %s29
      %35 = dma.hbm_to_vmem [thread:$0]  %s1, 196608, %s30, [#allocation6], 512, 512, 32
    $region9: #{tpu_custom_call.1} parent=1 // pred_fallthru
      _
    // Predicated region
    $region10: #{tpu_custom_call.1} parent=1 // pred_check
      _
    $region11: #{tpu_custom_call.1} parent=1 // pred_check_branch
      %37 = sbr.rel (0) target = $region13
    $region12: #{tpu_custom_call.1} parent=1 // pred_region
      %s39 = ssub.s32 64, 64
      %40 = vsyncadd [#allocation6], %s39
      %s42 = sshll.u32 [#allocation7], 4
      %s43 = int_to_ptr.vmem [resolvable:$true] %s42
      %45 = dma.hbm_to_vmem [thread:$0]  %s2, 64, %s43, [#allocation6]
    $region13: #{tpu_custom_call.1} parent=1 // pred_fallthru
      _
    // Predicated region
    $region14: #{tpu_custom_call.1} parent=1 // pred_check
      _
    $region15: #{tpu_custom_call.1} parent=1 // pred_check_branch
      %47 = sbr.rel (0) target = $region17
    $region16: #{tpu_custom_call.1} parent=1 // pred_region
      %s49 = ssub.s32 8192, 8192
      %50 = vsyncadd [#allocation9], %s49
      %s51 = sshll.u32 [#allocation8], 4
      %s52 = int_to_ptr.vmem [resolvable:$true] %s51
      %57 = dma.hbm_to_vmem [thread:$0]  %s3, 8192, %s52, [#allocation9], 128, 128, 8
    $region17: #{tpu_custom_call.1} parent=1 // pred_fallthru
      _
    // Predicated region
    $region18: #{tpu_custom_call.1} parent=1 // pred_check
      _
    $region19: #{tpu_custom_call.1} parent=1 // pred_check_branch
      %59 = sbr.rel (0) target = $region21
    $region20: #{tpu_custom_call.1} parent=1 // pred_region
      %s61 = ssub.s32 16, 16
      %62 = vsyncadd [#allocation9], %s61
      %s64 = sshll.u32 [#allocation10], 4
      %s65 = int_to_ptr.vmem [resolvable:$true] %s64
      %67 = dma.hbm_to_vmem [thread:$0]  %s4, 16, %s65, [#allocation9]
    $region21: #{tpu_custom_call.1} parent=1 // pred_fallthru
      _
    // Predicated region
    $region22: #{tpu_custom_call.1} parent=1 // pred_check
      _
    $region23: #{tpu_custom_call.1} parent=1 // pred_check_branch
      %69 = sbr.rel (0) target = $region25
    $region24: #{tpu_custom_call.1} parent=1 // pred_region
      %70 = dma.done [#allocation3], 768
    $region25: #{tpu_custom_call.1} parent=1 // pred_fallthru
      _
    // Predicated region
    $region26: #{tpu_custom_call.1} parent=1 // pred_check
      _
    $region27: #{tpu_custom_call.1} parent=1 // pred_check_branch
      %72 = sbr.rel (0) target = $region29
    $region28: #{tpu_custom_call.1} parent=1 // pred_region
      %73 = dma.done [#allocation6], 196608
    $region29: #{tpu_custom_call.1} parent=1 // pred_fallthru
      _
    // Predicated region
    $region30: #{tpu_custom_call.1} parent=1 // pred_check
      _
    $region31: #{tpu_custom_call.1} parent=1 // pred_check_branch
      %75 = sbr.rel (0) target = $region33
    $region32: #{tpu_custom_call.1} parent=1 // pred_region
      %76 = dma.done [#allocation6], 64
    $region33: #{tpu_custom_call.1} parent=1 // pred_fallthru
      _
    // Predicated region
    $region34: #{tpu_custom_call.1} parent=1 // pred_check
      _
    $region35: #{tpu_custom_call.1} parent=1 // pred_check_branch
      %78 = sbr.rel (0) target = $region37
    $region36: #{tpu_custom_call.1} parent=1 // pred_region
      %79 = dma.done [#allocation9], 8192
    $region37: #{tpu_custom_call.1} parent=1 // pred_fallthru
      _
    // Predicated region
    $region38: #{tpu_custom_call.1} parent=1 // pred_check
      _
    $region39: #{tpu_custom_call.1} parent=1 // pred_check_branch
      %81 = sbr.rel (0) target = $region41
    $region40: #{tpu_custom_call.1} parent=1 // pred_region
      %82 = dma.done [#allocation9], 16
    $region41: #{tpu_custom_call.1} parent=1 // pred_fallthru
      _
    %v83 = vld [vmem:[#allocation2] sm:$0xff]
    %v84 = vld [vmem:[#allocation2 + $0x8] sm:$0xff]
    %v85 = vld [vmem:[#allocation2 + $0x10] sm:$0xff]
    %v86 = vld [vmem:[#allocation2 + $0x18] sm:$0xff]
    %v87 = vld [vmem:[#allocation2 + $0x20] sm:$0xff]
    %v88 = vld [vmem:[#allocation2 + $0x28] sm:$0xff]
    %v89 = vld [vmem:[#allocation5] sm:$0xff]
    %v90 = vld [vmem:[#allocation5 + $0x8] sm:$0xff]
    %v91 = vld [vmem:[#allocation5 + $0x10] sm:$0xff]
    %v92 = vld [vmem:[#allocation5 + $0x18] sm:$0xff]
    %v93 = vld [vmem:[#allocation5 + $0x20] sm:$0xff]
    %v94 = vld [vmem:[#allocation5 + $0x28] sm:$0xff]
    %v95 = vld [vmem:[#allocation5 + $0x30] sm:$0xff]
    %v96 = vld [vmem:[#allocation5 + $0x38] sm:$0xff]
    %v97 = vld [vmem:[#allocation5 + $0x40] sm:$0xff]
    %v98 = vld [vmem:[#allocation5 + $0x48] sm:$0xff]
    %v99 = vld [vmem:[#allocation5 + $0x50] sm:$0xff]
    %v100 = vld [vmem:[#allocation5 + $0x58] sm:$0xff]
    %v101 = vld [vmem:[#allocation5 + $0x60] sm:$0xff]
    %v102 = vld [vmem:[#allocation5 + $0x68] sm:$0xff]
    %v103 = vld [vmem:[#allocation5 + $0x70] sm:$0xff]
    %v104 = vld [vmem:[#allocation5 + $0x78] sm:$0xff]
    %v105 = vld [vmem:[#allocation5 + $0x80] sm:$0xff]
    %v106 = vld [vmem:[#allocation5 + $0x88] sm:$0xff]
    %v107 = vld [vmem:[#allocation5 + $0x90] sm:$0xff]
    %v108 = vld [vmem:[#allocation5 + $0x98] sm:$0xff]
    %v109 = vld [vmem:[#allocation5 + $0xa0] sm:$0xff]
    %v110 = vld [vmem:[#allocation5 + $0xa8] sm:$0xff]
    %v111 = vld [vmem:[#allocation5 + $0xb0] sm:$0xff]
    %v112 = vld [vmem:[#allocation5 + $0xb8] sm:$0xff]
    %v113 = vld [vmem:[#allocation5 + $0xc0] sm:$0xff]
    %v114 = vld [vmem:[#allocation5 + $0xc8] sm:$0xff]
    %v115 = vld [vmem:[#allocation5 + $0xd0] sm:$0xff]
    %v116 = vld [vmem:[#allocation5 + $0xd8] sm:$0xff]
    %v117 = vld [vmem:[#allocation5 + $0xe0] sm:$0xff]
    %v118 = vld [vmem:[#allocation5 + $0xe8] sm:$0xff]
    %v119 = vld [vmem:[#allocation5 + $0xf0] sm:$0xff]
    %v120 = vld [vmem:[#allocation5 + $0xf8] sm:$0xff]
    %v121 = vld [vmem:[#allocation5 + $0x100] sm:$0xff]
    %v122 = vld [vmem:[#allocation5 + $0x108] sm:$0xff]
    %v123 = vld [vmem:[#allocation5 + $0x110] sm:$0xff]
    %v124 = vld [vmem:[#allocation5 + $0x118] sm:$0xff]
    %v125 = vld [vmem:[#allocation5 + $0x120] sm:$0xff]
    %v126 = vld [vmem:[#allocation5 + $0x128] sm:$0xff]
    %v127 = vld [vmem:[#allocation5 + $0x130] sm:$0xff]
    %v128 = vld [vmem:[#allocation5 + $0x138] sm:$0xff]
    %v129 = vld [vmem:[#allocation5 + $0x140] sm:$0xff]
    %v130 = vld [vmem:[#allocation5 + $0x148] sm:$0xff]
    %v131 = vld [vmem:[#allocation5 + $0x150] sm:$0xff]
    %v132 = vld [vmem:[#allocation5 + $0x158] sm:$0xff]
    %v133 = vld [vmem:[#allocation5 + $0x160] sm:$0xff]
    %v134 = vld [vmem:[#allocation5 + $0x168] sm:$0xff]
    %v135 = vld [vmem:[#allocation5 + $0x170] sm:$0xff]
    %v136 = vld [vmem:[#allocation5 + $0x178] sm:$0xff]
    %v137 = vld [vmem:[#allocation5 + $0x180] sm:$0xff]
    %v138 = vld [vmem:[#allocation5 + $0x188] sm:$0xff]
    %v139 = vld [vmem:[#allocation5 + $0x190] sm:$0xff]
    %v140 = vld [vmem:[#allocation5 + $0x198] sm:$0xff]
    %v141 = vld [vmem:[#allocation5 + $0x1a0] sm:$0xff]
    %v142 = vld [vmem:[#allocation5 + $0x1a8] sm:$0xff]
    %v143 = vld [vmem:[#allocation5 + $0x1b0] sm:$0xff]
    %v144 = vld [vmem:[#allocation5 + $0x1b8] sm:$0xff]
    %v145 = vld [vmem:[#allocation5 + $0x1c0] sm:$0xff]
    %v146 = vld [vmem:[#allocation5 + $0x1c8] sm:$0xff]
    %v147 = vld [vmem:[#allocation5 + $0x1d0] sm:$0xff]
    %v148 = vld [vmem:[#allocation5 + $0x1d8] sm:$0xff]
    %v149 = vld [vmem:[#allocation5 + $0x1e0] sm:$0xff]
    %v150 = vld [vmem:[#allocation5 + $0x1e8] sm:$0xff]
    %v151 = vld [vmem:[#allocation5 + $0x1f0] sm:$0xff]
    %v152 = vld [vmem:[#allocation5 + $0x1f8] sm:$0xff]
    %v153 = vld [vmem:[#allocation5 + $0x200] sm:$0xff]
    %v154 = vld [vmem:[#allocation5 + $0x208] sm:$0xff]
    %v155 = vld [vmem:[#allocation5 + $0x210] sm:$0xff]
    %v156 = vld [vmem:[#allocation5 + $0x218] sm:$0xff]
    %v157 = vld [vmem:[#allocation5 + $0x220] sm:$0xff]
    %v158 = vld [vmem:[#allocation5 + $0x228] sm:$0xff]
    %v159 = vld [vmem:[#allocation5 + $0x230] sm:$0xff]
    %v160 = vld [vmem:[#allocation5 + $0x238] sm:$0xff]
    %v161 = vld [vmem:[#allocation5 + $0x240] sm:$0xff]
    %v162 = vld [vmem:[#allocation5 + $0x248] sm:$0xff]
    %v163 = vld [vmem:[#allocation5 + $0x250] sm:$0xff]
    %v164 = vld [vmem:[#allocation5 + $0x258] sm:$0xff]
    %v165 = vld [vmem:[#allocation5 + $0x260] sm:$0xff]
    %v166 = vld [vmem:[#allocation5 + $0x268] sm:$0xff]
    %v167 = vld [vmem:[#allocation5 + $0x270] sm:$0xff]
    %v168 = vld [vmem:[#allocation5 + $0x278] sm:$0xff]
    %v169 = vld [vmem:[#allocation5 + $0x280] sm:$0xff]
    %v170 = vld [vmem:[#allocation5 + $0x288] sm:$0xff]
    %v171 = vld [vmem:[#allocation5 + $0x290] sm:$0xff]
    %v172 = vld [vmem:[#allocation5 + $0x298] sm:$0xff]
    %v173 = vld [vmem:[#allocation5 + $0x2a0] sm:$0xff]
    %v174 = vld [vmem:[#allocation5 + $0x2a8] sm:$0xff]
    %v175 = vld [vmem:[#allocation5 + $0x2b0] sm:$0xff]
    %v176 = vld [vmem:[#allocation5 + $0x2b8] sm:$0xff]
    %v177 = vld [vmem:[#allocation5 + $0x2c0] sm:$0xff]
    %v178 = vld [vmem:[#allocation5 + $0x2c8] sm:$0xff]
    %v179 = vld [vmem:[#allocation5 + $0x2d0] sm:$0xff]
    %v180 = vld [vmem:[#allocation5 + $0x2d8] sm:$0xff]
    %v181 = vld [vmem:[#allocation5 + $0x2e0] sm:$0xff]
    %v182 = vld [vmem:[#allocation5 + $0x2e8] sm:$0xff]
    %v183 = vld [vmem:[#allocation5 + $0x2f0] sm:$0xff]
    %v184 = vld [vmem:[#allocation5 + $0x2f8] sm:$0xff]
    %v185 = vld [vmem:[#allocation5 + $0x300] sm:$0xff]
    %v186 = vld [vmem:[#allocation5 + $0x308] sm:$0xff]
    %v187 = vld [vmem:[#allocation5 + $0x310] sm:$0xff]
    %v188 = vld [vmem:[#allocation5 + $0x318] sm:$0xff]
    %v189 = vld [vmem:[#allocation5 + $0x320] sm:$0xff]
    %v190 = vld [vmem:[#allocation5 + $0x328] sm:$0xff]
    %v191 = vld [vmem:[#allocation5 + $0x330] sm:$0xff]
    %v192 = vld [vmem:[#allocation5 + $0x338] sm:$0xff]
    %v193 = vld [vmem:[#allocation5 + $0x340] sm:$0xff]
    %v194 = vld [vmem:[#allocation5 + $0x348] sm:$0xff]
    %v195 = vld [vmem:[#allocation5 + $0x350] sm:$0xff]
    %v196 = vld [vmem:[#allocation5 + $0x358] sm:$0xff]
    %v197 = vld [vmem:[#allocation5 + $0x360] sm:$0xff]
    %v198 = vld [vmem:[#allocation5 + $0x368] sm:$0xff]
    %v199 = vld [vmem:[#allocation5 + $0x370] sm:$0xff]
    %v200 = vld [vmem:[#allocation5 + $0x378] sm:$0xff]
    %v201 = vld [vmem:[#allocation5 + $0x380] sm:$0xff]
    %v202 = vld [vmem:[#allocation5 + $0x388] sm:$0xff]
    %v203 = vld [vmem:[#allocation5 + $0x390] sm:$0xff]
    %v204 = vld [vmem:[#allocation5 + $0x398] sm:$0xff]
    %v205 = vld [vmem:[#allocation5 + $0x3a0] sm:$0xff]
    %v206 = vld [vmem:[#allocation5 + $0x3a8] sm:$0xff]
    %v207 = vld [vmem:[#allocation5 + $0x3b0] sm:$0xff]
    %v208 = vld [vmem:[#allocation5 + $0x3b8] sm:$0xff]
    %v209 = vld [vmem:[#allocation5 + $0x3c0] sm:$0xff]
    %v210 = vld [vmem:[#allocation5 + $0x3c8] sm:$0xff]
    %v211 = vld [vmem:[#allocation5 + $0x3d0] sm:$0xff]
    %v212 = vld [vmem:[#allocation5 + $0x3d8] sm:$0xff]
    %v213 = vld [vmem:[#allocation5 + $0x3e0] sm:$0xff]
    %v214 = vld [vmem:[#allocation5 + $0x3e8] sm:$0xff]
    %v215 = vld [vmem:[#allocation5 + $0x3f0] sm:$0xff]
    %v216 = vld [vmem:[#allocation5 + $0x3f8] sm:$0xff]
    %v217 = vld [vmem:[#allocation5 + $0x400] sm:$0xff]
    %v218 = vld [vmem:[#allocation5 + $0x408] sm:$0xff]
    %v219 = vld [vmem:[#allocation5 + $0x410] sm:$0xff]
    %v220 = vld [vmem:[#allocation5 + $0x418] sm:$0xff]
    %v221 = vld [vmem:[#allocation5 + $0x420] sm:$0xff]
    %v222 = vld [vmem:[#allocation5 + $0x428] sm:$0xff]
    %v223 = vld [vmem:[#allocation5 + $0x430] sm:$0xff]
    %v224 = vld [vmem:[#allocation5 + $0x438] sm:$0xff]
    %v225 = vld [vmem:[#allocation5 + $0x440] sm:$0xff]
    %v226 = vld [vmem:[#allocation5 + $0x448] sm:$0xff]
    %v227 = vld [vmem:[#allocation5 + $0x450] sm:$0xff]
    %v228 = vld [vmem:[#allocation5 + $0x458] sm:$0xff]
    %v229 = vld [vmem:[#allocation5 + $0x460] sm:$0xff]
    %v230 = vld [vmem:[#allocation5 + $0x468] sm:$0xff]
    %v231 = vld [vmem:[#allocation5 + $0x470] sm:$0xff]
    %v232 = vld [vmem:[#allocation5 + $0x478] sm:$0xff]
    %v233 = vld [vmem:[#allocation5 + $0x480] sm:$0xff]
    %v234 = vld [vmem:[#allocation5 + $0x488] sm:$0xff]
    %v235 = vld [vmem:[#allocation5 + $0x490] sm:$0xff]
    %v236 = vld [vmem:[#allocation5 + $0x498] sm:$0xff]
    %v237 = vld [vmem:[#allocation5 + $0x4a0] sm:$0xff]
    %v238 = vld [vmem:[#allocation5 + $0x4a8] sm:$0xff]
    %v239 = vld [vmem:[#allocation5 + $0x4b0] sm:$0xff]
    %v240 = vld [vmem:[#allocation5 + $0x4b8] sm:$0xff]
    %v241 = vld [vmem:[#allocation5 + $0x4c0] sm:$0xff]
    %v242 = vld [vmem:[#allocation5 + $0x4c8] sm:$0xff]
    %v243 = vld [vmem:[#allocation5 + $0x4d0] sm:$0xff]
    %v244 = vld [vmem:[#allocation5 + $0x4d8] sm:$0xff]
    %v245 = vld [vmem:[#allocation5 + $0x4e0] sm:$0xff]
    %v246 = vld [vmem:[#allocation5 + $0x4e8] sm:$0xff]
    %v247 = vld [vmem:[#allocation5 + $0x4f0] sm:$0xff]
    %v248 = vld [vmem:[#allocation5 + $0x4f8] sm:$0xff]
    %v249 = vld [vmem:[#allocation5 + $0x500] sm:$0xff]
    %v250 = vld [vmem:[#allocation5 + $0x508] sm:$0xff]
    %v251 = vld [vmem:[#allocation5 + $0x510] sm:$0xff]
    %v252 = vld [vmem:[#allocation5 + $0x518] sm:$0xff]
    %v253 = vld [vmem:[#allocation5 + $0x520] sm:$0xff]
    %v254 = vld [vmem:[#allocation5 + $0x528] sm:$0xff]
    %v255 = vld [vmem:[#allocation5 + $0x530] sm:$0xff]
    %v256 = vld [vmem:[#allocation5 + $0x538] sm:$0xff]
    %v257 = vld [vmem:[#allocation5 + $0x540] sm:$0xff]
    %v258 = vld [vmem:[#allocation5 + $0x548] sm:$0xff]
    %v259 = vld [vmem:[#allocation5 + $0x550] sm:$0xff]
    %v260 = vld [vmem:[#allocation5 + $0x558] sm:$0xff]
    %v261 = vld [vmem:[#allocation5 + $0x560] sm:$0xff]
    %v262 = vld [vmem:[#allocation5 + $0x568] sm:$0xff]
    %v263 = vld [vmem:[#allocation5 + $0x570] sm:$0xff]
    %v264 = vld [vmem:[#allocation5 + $0x578] sm:$0xff]
    %v265 = vld [vmem:[#allocation5 + $0x580] sm:$0xff]
    %v266 = vld [vmem:[#allocation5 + $0x588] sm:$0xff]
    %v267 = vld [vmem:[#allocation5 + $0x590] sm:$0xff]
    %v268 = vld [vmem:[#allocation5 + $0x598] sm:$0xff]
    %v269 = vld [vmem:[#allocation5 + $0x5a0] sm:$0xff]
    %v270 = vld [vmem:[#allocation5 + $0x5a8] sm:$0xff]
    %v271 = vld [vmem:[#allocation5 + $0x5b0] sm:$0xff]
    %v272 = vld [vmem:[#allocation5 + $0x5b8] sm:$0xff]
    %v273 = vld [vmem:[#allocation5 + $0x5c0] sm:$0xff]
    %v274 = vld [vmem:[#allocation5 + $0x5c8] sm:$0xff]
    %v275 = vld [vmem:[#allocation5 + $0x5d0] sm:$0xff]
    %v276 = vld [vmem:[#allocation5 + $0x5d8] sm:$0xff]
    %v277 = vld [vmem:[#allocation5 + $0x5e0] sm:$0xff]
    %v278 = vld [vmem:[#allocation5 + $0x5e8] sm:$0xff]
    %v279 = vld [vmem:[#allocation5 + $0x5f0] sm:$0xff]
    %v280 = vld [vmem:[#allocation5 + $0x5f8] sm:$0xff]
    %v281 = vld [vmem:[#allocation5 + $0x600] sm:$0xff]
    %v282 = vld [vmem:[#allocation5 + $0x608] sm:$0xff]
    %v283 = vld [vmem:[#allocation5 + $0x610] sm:$0xff]
    %v284 = vld [vmem:[#allocation5 + $0x618] sm:$0xff]
    %v285 = vld [vmem:[#allocation5 + $0x620] sm:$0xff]
    %v286 = vld [vmem:[#allocation5 + $0x628] sm:$0xff]
    %v287 = vld [vmem:[#allocation5 + $0x630] sm:$0xff]
    %v288 = vld [vmem:[#allocation5 + $0x638] sm:$0xff]
    %v289 = vld [vmem:[#allocation5 + $0x640] sm:$0xff]
    %v290 = vld [vmem:[#allocation5 + $0x648] sm:$0xff]
    %v291 = vld [vmem:[#allocation5 + $0x650] sm:$0xff]
    %v292 = vld [vmem:[#allocation5 + $0x658] sm:$0xff]
    %v293 = vld [vmem:[#allocation5 + $0x660] sm:$0xff]
    %v294 = vld [vmem:[#allocation5 + $0x668] sm:$0xff]
    %v295 = vld [vmem:[#allocation5 + $0x670] sm:$0xff]
    %v296 = vld [vmem:[#allocation5 + $0x678] sm:$0xff]
    %v297 = vld [vmem:[#allocation5 + $0x680] sm:$0xff]
    %v298 = vld [vmem:[#allocation5 + $0x688] sm:$0xff]
    %v299 = vld [vmem:[#allocation5 + $0x690] sm:$0xff]
    %v300 = vld [vmem:[#allocation5 + $0x698] sm:$0xff]
    %v301 = vld [vmem:[#allocation5 + $0x6a0] sm:$0xff]
    %v302 = vld [vmem:[#allocation5 + $0x6a8] sm:$0xff]
    %v303 = vld [vmem:[#allocation5 + $0x6b0] sm:$0xff]
    %v304 = vld [vmem:[#allocation5 + $0x6b8] sm:$0xff]
    %v305 = vld [vmem:[#allocation5 + $0x6c0] sm:$0xff]
    %v306 = vld [vmem:[#allocation5 + $0x6c8] sm:$0xff]
    %v307 = vld [vmem:[#allocation5 + $0x6d0] sm:$0xff]
    %v308 = vld [vmem:[#allocation5 + $0x6d8] sm:$0xff]
    %v309 = vld [vmem:[#allocation5 + $0x6e0] sm:$0xff]
    %v310 = vld [vmem:[#allocation5 + $0x6e8] sm:$0xff]
    %v311 = vld [vmem:[#allocation5 + $0x6f0] sm:$0xff]
    %v312 = vld [vmem:[#allocation5 + $0x6f8] sm:$0xff]
    %v313 = vld [vmem:[#allocation5 + $0x700] sm:$0xff]
    %v314 = vld [vmem:[#allocation5 + $0x708] sm:$0xff]
    %v315 = vld [vmem:[#allocation5 + $0x710] sm:$0xff]
    %v316 = vld [vmem:[#allocation5 + $0x718] sm:$0xff]
    %v317 = vld [vmem:[#allocation5 + $0x720] sm:$0xff]
    %v318 = vld [vmem:[#allocation5 + $0x728] sm:$0xff]
    %v319 = vld [vmem:[#allocation5 + $0x730] sm:$0xff]
    %v320 = vld [vmem:[#allocation5 + $0x738] sm:$0xff]
    %v321 = vld [vmem:[#allocation5 + $0x740] sm:$0xff]
    %v322 = vld [vmem:[#allocation5 + $0x748] sm:$0xff]
    %v323 = vld [vmem:[#allocation5 + $0x750] sm:$0xff]
    %v324 = vld [vmem:[#allocation5 + $0x758] sm:$0xff]
    %v325 = vld [vmem:[#allocation5 + $0x760] sm:$0xff]
    %v326 = vld [vmem:[#allocation5 + $0x768] sm:$0xff]
    %v327 = vld [vmem:[#allocation5 + $0x770] sm:$0xff]
    %v328 = vld [vmem:[#allocation5 + $0x778] sm:$0xff]
    %v329 = vld [vmem:[#allocation5 + $0x780] sm:$0xff]
    %v330 = vld [vmem:[#allocation5 + $0x788] sm:$0xff]
    %v331 = vld [vmem:[#allocation5 + $0x790] sm:$0xff]
    %v332 = vld [vmem:[#allocation5 + $0x798] sm:$0xff]
    %v333 = vld [vmem:[#allocation5 + $0x7a0] sm:$0xff]
    %v334 = vld [vmem:[#allocation5 + $0x7a8] sm:$0xff]
    %v335 = vld [vmem:[#allocation5 + $0x7b0] sm:$0xff]
    %v336 = vld [vmem:[#allocation5 + $0x7b8] sm:$0xff]
    %v337 = vld [vmem:[#allocation5 + $0x7c0] sm:$0xff]
    %v338 = vld [vmem:[#allocation5 + $0x7c8] sm:$0xff]
    %v339 = vld [vmem:[#allocation5 + $0x7d0] sm:$0xff]
    %v340 = vld [vmem:[#allocation5 + $0x7d8] sm:$0xff]
    %v341 = vld [vmem:[#allocation5 + $0x7e0] sm:$0xff]
    %v342 = vld [vmem:[#allocation5 + $0x7e8] sm:$0xff]
    %v343 = vld [vmem:[#allocation5 + $0x7f0] sm:$0xff]
    %v344 = vld [vmem:[#allocation5 + $0x7f8] sm:$0xff]
    %v345 = vld [vmem:[#allocation5 + $0x800] sm:$0xff]
    %v346 = vld [vmem:[#allocation5 + $0x808] sm:$0xff]
    %v347 = vld [vmem:[#allocation5 + $0x810] sm:$0xff]
    %v348 = vld [vmem:[#allocation5 + $0x818] sm:$0xff]
    %v349 = vld [vmem:[#allocation5 + $0x820] sm:$0xff]
    %v350 = vld [vmem:[#allocation5 + $0x828] sm:$0xff]
    %v351 = vld [vmem:[#allocation5 + $0x830] sm:$0xff]
    %v352 = vld [vmem:[#allocation5 + $0x838] sm:$0xff]
    %v353 = vld [vmem:[#allocation5 + $0x840] sm:$0xff]
    %v354 = vld [vmem:[#allocation5 + $0x848] sm:$0xff]
    %v355 = vld [vmem:[#allocation5 + $0x850] sm:$0xff]
    %v356 = vld [vmem:[#allocation5 + $0x858] sm:$0xff]
    %v357 = vld [vmem:[#allocation5 + $0x860] sm:$0xff]
    %v358 = vld [vmem:[#allocation5 + $0x868] sm:$0xff]
    %v359 = vld [vmem:[#allocation5 + $0x870] sm:$0xff]
    %v360 = vld [vmem:[#allocation5 + $0x878] sm:$0xff]
    %v361 = vld [vmem:[#allocation5 + $0x880] sm:$0xff]
    %v362 = vld [vmem:[#allocation5 + $0x888] sm:$0xff]
    %v363 = vld [vmem:[#allocation5 + $0x890] sm:$0xff]
    %v364 = vld [vmem:[#allocation5 + $0x898] sm:$0xff]
    %v365 = vld [vmem:[#allocation5 + $0x8a0] sm:$0xff]
    %v366 = vld [vmem:[#allocation5 + $0x8a8] sm:$0xff]
    %v367 = vld [vmem:[#allocation5 + $0x8b0] sm:$0xff]
    %v368 = vld [vmem:[#allocation5 + $0x8b8] sm:$0xff]
    %v369 = vld [vmem:[#allocation5 + $0x8c0] sm:$0xff]
    %v370 = vld [vmem:[#allocation5 + $0x8c8] sm:$0xff]
    %v371 = vld [vmem:[#allocation5 + $0x8d0] sm:$0xff]
    %v372 = vld [vmem:[#allocation5 + $0x8d8] sm:$0xff]
    %v373 = vld [vmem:[#allocation5 + $0x8e0] sm:$0xff]
    %v374 = vld [vmem:[#allocation5 + $0x8e8] sm:$0xff]
    %v375 = vld [vmem:[#allocation5 + $0x8f0] sm:$0xff]
    %v376 = vld [vmem:[#allocation5 + $0x8f8] sm:$0xff]
    %v377 = vld [vmem:[#allocation5 + $0x900] sm:$0xff]
    %v378 = vld [vmem:[#allocation5 + $0x908] sm:$0xff]
    %v379 = vld [vmem:[#allocation5 + $0x910] sm:$0xff]
    %v380 = vld [vmem:[#allocation5 + $0x918] sm:$0xff]
    %v381 = vld [vmem:[#allocation5 + $0x920] sm:$0xff]
    %v382 = vld [vmem:[#allocation5 + $0x928] sm:$0xff]
    %v383 = vld [vmem:[#allocation5 + $0x930] sm:$0xff]
    %v384 = vld [vmem:[#allocation5 + $0x938] sm:$0xff]
    %v385 = vld [vmem:[#allocation5 + $0x940] sm:$0xff]
    %v386 = vld [vmem:[#allocation5 + $0x948] sm:$0xff]
    %v387 = vld [vmem:[#allocation5 + $0x950] sm:$0xff]
    %v388 = vld [vmem:[#allocation5 + $0x958] sm:$0xff]
    %v389 = vld [vmem:[#allocation5 + $0x960] sm:$0xff]
    %v390 = vld [vmem:[#allocation5 + $0x968] sm:$0xff]
    %v391 = vld [vmem:[#allocation5 + $0x970] sm:$0xff]
    %v392 = vld [vmem:[#allocation5 + $0x978] sm:$0xff]
    %v393 = vld [vmem:[#allocation5 + $0x980] sm:$0xff]
    %v394 = vld [vmem:[#allocation5 + $0x988] sm:$0xff]
    %v395 = vld [vmem:[#allocation5 + $0x990] sm:$0xff]
    %v396 = vld [vmem:[#allocation5 + $0x998] sm:$0xff]
    %v397 = vld [vmem:[#allocation5 + $0x9a0] sm:$0xff]
    %v398 = vld [vmem:[#allocation5 + $0x9a8] sm:$0xff]
    %v399 = vld [vmem:[#allocation5 + $0x9b0] sm:$0xff]
    %v400 = vld [vmem:[#allocation5 + $0x9b8] sm:$0xff]
    %v401 = vld [vmem:[#allocation5 + $0x9c0] sm:$0xff]
    %v402 = vld [vmem:[#allocation5 + $0x9c8] sm:$0xff]
    %v403 = vld [vmem:[#allocation5 + $0x9d0] sm:$0xff]
    %v404 = vld [vmem:[#allocation5 + $0x9d8] sm:$0xff]
    %v405 = vld [vmem:[#allocation5 + $0x9e0] sm:$0xff]
    %v406 = vld [vmem:[#allocation5 + $0x9e8] sm:$0xff]
    %v407 = vld [vmem:[#allocation5 + $0x9f0] sm:$0xff]
    %v408 = vld [vmem:[#allocation5 + $0x9f8] sm:$0xff]
    %v409 = vld [vmem:[#allocation5 + $0xa00] sm:$0xff]
    %v410 = vld [vmem:[#allocation5 + $0xa08] sm:$0xff]
    %v411 = vld [vmem:[#allocation5 + $0xa10] sm:$0xff]
    %v412 = vld [vmem:[#allocation5 + $0xa18] sm:$0xff]
    %v413 = vld [vmem:[#allocation5 + $0xa20] sm:$0xff]
    %v414 = vld [vmem:[#allocation5 + $0xa28] sm:$0xff]
    %v415 = vld [vmem:[#allocation5 + $0xa30] sm:$0xff]
    %v416 = vld [vmem:[#allocation5 + $0xa38] sm:$0xff]
    %v417 = vld [vmem:[#allocation5 + $0xa40] sm:$0xff]
    %v418 = vld [vmem:[#allocation5 + $0xa48] sm:$0xff]
    %v419 = vld [vmem:[#allocation5 + $0xa50] sm:$0xff]
    %v420 = vld [vmem:[#allocation5 + $0xa58] sm:$0xff]
    %v421 = vld [vmem:[#allocation5 + $0xa60] sm:$0xff]
    %v422 = vld [vmem:[#allocation5 + $0xa68] sm:$0xff]
    %v423 = vld [vmem:[#allocation5 + $0xa70] sm:$0xff]
    %v424 = vld [vmem:[#allocation5 + $0xa78] sm:$0xff]
    %v425 = vld [vmem:[#allocation5 + $0xa80] sm:$0xff]
    %v426 = vld [vmem:[#allocation5 + $0xa88] sm:$0xff]
    %v427 = vld [vmem:[#allocation5 + $0xa90] sm:$0xff]
    %v428 = vld [vmem:[#allocation5 + $0xa98] sm:$0xff]
    %v429 = vld [vmem:[#allocation5 + $0xaa0] sm:$0xff]
    %v430 = vld [vmem:[#allocation5 + $0xaa8] sm:$0xff]
    %v431 = vld [vmem:[#allocation5 + $0xab0] sm:$0xff]
    %v432 = vld [vmem:[#allocation5 + $0xab8] sm:$0xff]
    %v433 = vld [vmem:[#allocation5 + $0xac0] sm:$0xff]
    %v434 = vld [vmem:[#allocation5 + $0xac8] sm:$0xff]
    %v435 = vld [vmem:[#allocation5 + $0xad0] sm:$0xff]
    %v436 = vld [vmem:[#allocation5 + $0xad8] sm:$0xff]
    %v437 = vld [vmem:[#allocation5 + $0xae0] sm:$0xff]
    %v438 = vld [vmem:[#allocation5 + $0xae8] sm:$0xff]
    %v439 = vld [vmem:[#allocation5 + $0xaf0] sm:$0xff]
    %v440 = vld [vmem:[#allocation5 + $0xaf8] sm:$0xff]
    %v441 = vld [vmem:[#allocation5 + $0xb00] sm:$0xff]
    %v442 = vld [vmem:[#allocation5 + $0xb08] sm:$0xff]
    %v443 = vld [vmem:[#allocation5 + $0xb10] sm:$0xff]
    %v444 = vld [vmem:[#allocation5 + $0xb18] sm:$0xff]
    %v445 = vld [vmem:[#allocation5 + $0xb20] sm:$0xff]
    %v446 = vld [vmem:[#allocation5 + $0xb28] sm:$0xff]
    %v447 = vld [vmem:[#allocation5 + $0xb30] sm:$0xff]
    %v448 = vld [vmem:[#allocation5 + $0xb38] sm:$0xff]
    %v449 = vld [vmem:[#allocation5 + $0xb40] sm:$0xff]
    %v450 = vld [vmem:[#allocation5 + $0xb48] sm:$0xff]
    %v451 = vld [vmem:[#allocation5 + $0xb50] sm:$0xff]
    %v452 = vld [vmem:[#allocation5 + $0xb58] sm:$0xff]
    %v453 = vld [vmem:[#allocation5 + $0xb60] sm:$0xff]
    %v454 = vld [vmem:[#allocation5 + $0xb68] sm:$0xff]
    %v455 = vld [vmem:[#allocation5 + $0xb70] sm:$0xff]
    %v456 = vld [vmem:[#allocation5 + $0xb78] sm:$0xff]
    %v457 = vld [vmem:[#allocation5 + $0xb80] sm:$0xff]
    %v458 = vld [vmem:[#allocation5 + $0xb88] sm:$0xff]
    %v459 = vld [vmem:[#allocation5 + $0xb90] sm:$0xff]
    %v460 = vld [vmem:[#allocation5 + $0xb98] sm:$0xff]
    %v461 = vld [vmem:[#allocation5 + $0xba0] sm:$0xff]
    %v462 = vld [vmem:[#allocation5 + $0xba8] sm:$0xff]
    %v463 = vld [vmem:[#allocation5 + $0xbb0] sm:$0xff]
    %v464 = vld [vmem:[#allocation5 + $0xbb8] sm:$0xff]
    %v465 = vld [vmem:[#allocation5 + $0xbc0] sm:$0xff]
    %v466 = vld [vmem:[#allocation5 + $0xbc8] sm:$0xff]
    %v467 = vld [vmem:[#allocation5 + $0xbd0] sm:$0xff]
    %v468 = vld [vmem:[#allocation5 + $0xbd8] sm:$0xff]
    %v469 = vld [vmem:[#allocation5 + $0xbe0] sm:$0xff]
    %v470 = vld [vmem:[#allocation5 + $0xbe8] sm:$0xff]
    %v471 = vld [vmem:[#allocation5 + $0xbf0] sm:$0xff]
    %v472 = vld [vmem:[#allocation5 + $0xbf8] sm:$0xff]
    %v473 = vld [vmem:[#allocation5 + $0xc00] sm:$0xff]
    %v474 = vld [vmem:[#allocation5 + $0xc08] sm:$0xff]
    %v475 = vld [vmem:[#allocation5 + $0xc10] sm:$0xff]
    %v476 = vld [vmem:[#allocation5 + $0xc18] sm:$0xff]
    %v477 = vld [vmem:[#allocation5 + $0xc20] sm:$0xff]
    %v478 = vld [vmem:[#allocation5 + $0xc28] sm:$0xff]
    %v479 = vld [vmem:[#allocation5 + $0xc30] sm:$0xff]
    %v480 = vld [vmem:[#allocation5 + $0xc38] sm:$0xff]
    %v481 = vld [vmem:[#allocation5 + $0xc40] sm:$0xff]
    %v482 = vld [vmem:[#allocation5 + $0xc48] sm:$0xff]
    %v483 = vld [vmem:[#allocation5 + $0xc50] sm:$0xff]
    %v484 = vld [vmem:[#allocation5 + $0xc58] sm:$0xff]
    %v485 = vld [vmem:[#allocation5 + $0xc60] sm:$0xff]
    %v486 = vld [vmem:[#allocation5 + $0xc68] sm:$0xff]
    %v487 = vld [vmem:[#allocation5 + $0xc70] sm:$0xff]
    %v488 = vld [vmem:[#allocation5 + $0xc78] sm:$0xff]
    %v489 = vld [vmem:[#allocation5 + $0xc80] sm:$0xff]
    %v490 = vld [vmem:[#allocation5 + $0xc88] sm:$0xff]
    %v491 = vld [vmem:[#allocation5 + $0xc90] sm:$0xff]
    %v492 = vld [vmem:[#allocation5 + $0xc98] sm:$0xff]
    %v493 = vld [vmem:[#allocation5 + $0xca0] sm:$0xff]
    %v494 = vld [vmem:[#allocation5 + $0xca8] sm:$0xff]
    %v495 = vld [vmem:[#allocation5 + $0xcb0] sm:$0xff]
    %v496 = vld [vmem:[#allocation5 + $0xcb8] sm:$0xff]
    %v497 = vld [vmem:[#allocation5 + $0xcc0] sm:$0xff]
    %v498 = vld [vmem:[#allocation5 + $0xcc8] sm:$0xff]
    %v499 = vld [vmem:[#allocation5 + $0xcd0] sm:$0xff]
    %v500 = vld [vmem:[#allocation5 + $0xcd8] sm:$0xff]
    %v501 = vld [vmem:[#allocation5 + $0xce0] sm:$0xff]
    %v502 = vld [vmem:[#allocation5 + $0xce8] sm:$0xff]
    %v503 = vld [vmem:[#allocation5 + $0xcf0] sm:$0xff]
    %v504 = vld [vmem:[#allocation5 + $0xcf8] sm:$0xff]
    %v505 = vld [vmem:[#allocation5 + $0xd00] sm:$0xff]
    %v506 = vld [vmem:[#allocation5 + $0xd08] sm:$0xff]
    %v507 = vld [vmem:[#allocation5 + $0xd10] sm:$0xff]
    %v508 = vld [vmem:[#allocation5 + $0xd18] sm:$0xff]
    %v509 = vld [vmem:[#allocation5 + $0xd20] sm:$0xff]
    %v510 = vld [vmem:[#allocation5 + $0xd28] sm:$0xff]
    %v511 = vld [vmem:[#allocation5 + $0xd30] sm:$0xff]
    %v512 = vld [vmem:[#allocation5 + $0xd38] sm:$0xff]
    %v513 = vld [vmem:[#allocation5 + $0xd40] sm:$0xff]
    %v514 = vld [vmem:[#allocation5 + $0xd48] sm:$0xff]
    %v515 = vld [vmem:[#allocation5 + $0xd50] sm:$0xff]
    %v516 = vld [vmem:[#allocation5 + $0xd58] sm:$0xff]
    %v517 = vld [vmem:[#allocation5 + $0xd60] sm:$0xff]
    %v518 = vld [vmem:[#allocation5 + $0xd68] sm:$0xff]
    %v519 = vld [vmem:[#allocation5 + $0xd70] sm:$0xff]
    %v520 = vld [vmem:[#allocation5 + $0xd78] sm:$0xff]
    %v521 = vld [vmem:[#allocation5 + $0xd80] sm:$0xff]
    %v522 = vld [vmem:[#allocation5 + $0xd88] sm:$0xff]
    %v523 = vld [vmem:[#allocation5 + $0xd90] sm:$0xff]
    %v524 = vld [vmem:[#allocation5 + $0xd98] sm:$0xff]
    %v525 = vld [vmem:[#allocation5 + $0xda0] sm:$0xff]
    %v526 = vld [vmem:[#allocation5 + $0xda8] sm:$0xff]
    %v527 = vld [vmem:[#allocation5 + $0xdb0] sm:$0xff]
    %v528 = vld [vmem:[#allocation5 + $0xdb8] sm:$0xff]
    %v529 = vld [vmem:[#allocation5 + $0xdc0] sm:$0xff]
    %v530 = vld [vmem:[#allocation5 + $0xdc8] sm:$0xff]
    %v531 = vld [vmem:[#allocation5 + $0xdd0] sm:$0xff]
    %v532 = vld [vmem:[#allocation5 + $0xdd8] sm:$0xff]
    %v533 = vld [vmem:[#allocation5 + $0xde0] sm:$0xff]
    %v534 = vld [vmem:[#allocation5 + $0xde8] sm:$0xff]
    %v535 = vld [vmem:[#allocation5 + $0xdf0] sm:$0xff]
    %v536 = vld [vmem:[#allocation5 + $0xdf8] sm:$0xff]
    %v537 = vld [vmem:[#allocation5 + $0xe00] sm:$0xff]
    %v538 = vld [vmem:[#allocation5 + $0xe08] sm:$0xff]
    %v539 = vld [vmem:[#allocation5 + $0xe10] sm:$0xff]
    %v540 = vld [vmem:[#allocation5 + $0xe18] sm:$0xff]
    %v541 = vld [vmem:[#allocation5 + $0xe20] sm:$0xff]
    %v542 = vld [vmem:[#allocation5 + $0xe28] sm:$0xff]
    %v543 = vld [vmem:[#allocation5 + $0xe30] sm:$0xff]
    %v544 = vld [vmem:[#allocation5 + $0xe38] sm:$0xff]
    %v545 = vld [vmem:[#allocation5 + $0xe40] sm:$0xff]
    %v546 = vld [vmem:[#allocation5 + $0xe48] sm:$0xff]
    %v547 = vld [vmem:[#allocation5 + $0xe50] sm:$0xff]
    %v548 = vld [vmem:[#allocation5 + $0xe58] sm:$0xff]
    %v549 = vld [vmem:[#allocation5 + $0xe60] sm:$0xff]
    %v550 = vld [vmem:[#allocation5 + $0xe68] sm:$0xff]
    %v551 = vld [vmem:[#allocation5 + $0xe70] sm:$0xff]
    %v552 = vld [vmem:[#allocation5 + $0xe78] sm:$0xff]
    %v553 = vld [vmem:[#allocation5 + $0xe80] sm:$0xff]
    %v554 = vld [vmem:[#allocation5 + $0xe88] sm:$0xff]
    %v555 = vld [vmem:[#allocation5 + $0xe90] sm:$0xff]
    %v556 = vld [vmem:[#allocation5 + $0xe98] sm:$0xff]
    %v557 = vld [vmem:[#allocation5 + $0xea0] sm:$0xff]
    %v558 = vld [vmem:[#allocation5 + $0xea8] sm:$0xff]
    %v559 = vld [vmem:[#allocation5 + $0xeb0] sm:$0xff]
    %v560 = vld [vmem:[#allocation5 + $0xeb8] sm:$0xff]
    %v561 = vld [vmem:[#allocation5 + $0xec0] sm:$0xff]
    %v562 = vld [vmem:[#allocation5 + $0xec8] sm:$0xff]
    %v563 = vld [vmem:[#allocation5 + $0xed0] sm:$0xff]
    %v564 = vld [vmem:[#allocation5 + $0xed8] sm:$0xff]
    %v565 = vld [vmem:[#allocation5 + $0xee0] sm:$0xff]
    %v566 = vld [vmem:[#allocation5 + $0xee8] sm:$0xff]
    %v567 = vld [vmem:[#allocation5 + $0xef0] sm:$0xff]
    %v568 = vld [vmem:[#allocation5 + $0xef8] sm:$0xff]
    %v569 = vld [vmem:[#allocation5 + $0xf00] sm:$0xff]
    %v570 = vld [vmem:[#allocation5 + $0xf08] sm:$0xff]
    %v571 = vld [vmem:[#allocation5 + $0xf10] sm:$0xff]
    %v572 = vld [vmem:[#allocation5 + $0xf18] sm:$0xff]
    %v573 = vld [vmem:[#allocation5 + $0xf20] sm:$0xff]
    %v574 = vld [vmem:[#allocation5 + $0xf28] sm:$0xff]
    %v575 = vld [vmem:[#allocation5 + $0xf30] sm:$0xff]
    %v576 = vld [vmem:[#allocation5 + $0xf38] sm:$0xff]
    %v577 = vld [vmem:[#allocation5 + $0xf40] sm:$0xff]
    %v578 = vld [vmem:[#allocation5 + $0xf48] sm:$0xff]
    %v579 = vld [vmem:[#allocation5 + $0xf50] sm:$0xff]
    %v580 = vld [vmem:[#allocation5 + $0xf58] sm:$0xff]
    %v581 = vld [vmem:[#allocation5 + $0xf60] sm:$0xff]
    %v582 = vld [vmem:[#allocation5 + $0xf68] sm:$0xff]
    %v583 = vld [vmem:[#allocation5 + $0xf70] sm:$0xff]
    %v584 = vld [vmem:[#allocation5 + $0xf78] sm:$0xff]
    %v585 = vld [vmem:[#allocation5 + $0xf80] sm:$0xff]
    %v586 = vld [vmem:[#allocation5 + $0xf88] sm:$0xff]
    %v587 = vld [vmem:[#allocation5 + $0xf90] sm:$0xff]
    %v588 = vld [vmem:[#allocation5 + $0xf98] sm:$0xff]
    %v589 = vld [vmem:[#allocation5 + $0xfa0] sm:$0xff]
    %v590 = vld [vmem:[#allocation5 + $0xfa8] sm:$0xff]
    %v591 = vld [vmem:[#allocation5 + $0xfb0] sm:$0xff]
    %v592 = vld [vmem:[#allocation5 + $0xfb8] sm:$0xff]
    %v593 = vld [vmem:[#allocation5 + $0xfc0] sm:$0xff]
    %v594 = vld [vmem:[#allocation5 + $0xfc8] sm:$0xff]
    %v595 = vld [vmem:[#allocation5 + $0xfd0] sm:$0xff]
    %v596 = vld [vmem:[#allocation5 + $0xfd8] sm:$0xff]
    %v597 = vld [vmem:[#allocation5 + $0xfe0] sm:$0xff]
    %v598 = vld [vmem:[#allocation5 + $0xfe8] sm:$0xff]
    %v599 = vld [vmem:[#allocation5 + $0xff0] sm:$0xff]
    %v600 = vld [vmem:[#allocation5 + $0xff8] sm:$0xff]
    %v601 = vld [vmem:[#allocation5 + $0x1000] sm:$0xff]
    %v602 = vld [vmem:[#allocation5 + $0x1008] sm:$0xff]
    %v603 = vld [vmem:[#allocation5 + $0x1010] sm:$0xff]
    %v604 = vld [vmem:[#allocation5 + $0x1018] sm:$0xff]
    %v605 = vld [vmem:[#allocation5 + $0x1020] sm:$0xff]
    %v606 = vld [vmem:[#allocation5 + $0x1028] sm:$0xff]
    %v607 = vld [vmem:[#allocation5 + $0x1030] sm:$0xff]
    %v608 = vld [vmem:[#allocation5 + $0x1038] sm:$0xff]
    %v609 = vld [vmem:[#allocation5 + $0x1040] sm:$0xff]
    %v610 = vld [vmem:[#allocation5 + $0x1048] sm:$0xff]
    %v611 = vld [vmem:[#allocation5 + $0x1050] sm:$0xff]
    %v612 = vld [vmem:[#allocation5 + $0x1058] sm:$0xff]
    %v613 = vld [vmem:[#allocation5 + $0x1060] sm:$0xff]
    %v614 = vld [vmem:[#allocation5 + $0x1068] sm:$0xff]
    %v615 = vld [vmem:[#allocation5 + $0x1070] sm:$0xff]
    %v616 = vld [vmem:[#allocation5 + $0x1078] sm:$0xff]
    %v617 = vld [vmem:[#allocation5 + $0x1080] sm:$0xff]
    %v618 = vld [vmem:[#allocation5 + $0x1088] sm:$0xff]
    %v619 = vld [vmem:[#allocation5 + $0x1090] sm:$0xff]
    %v620 = vld [vmem:[#allocation5 + $0x1098] sm:$0xff]
    %v621 = vld [vmem:[#allocation5 + $0x10a0] sm:$0xff]
    %v622 = vld [vmem:[#allocation5 + $0x10a8] sm:$0xff]
    %v623 = vld [vmem:[#allocation5 + $0x10b0] sm:$0xff]
    %v624 = vld [vmem:[#allocation5 + $0x10b8] sm:$0xff]
    %v625 = vld [vmem:[#allocation5 + $0x10c0] sm:$0xff]
    %v626 = vld [vmem:[#allocation5 + $0x10c8] sm:$0xff]
    %v627 = vld [vmem:[#allocation5 + $0x10d0] sm:$0xff]
    %v628 = vld [vmem:[#allocation5 + $0x10d8] sm:$0xff]
    %v629 = vld [vmem:[#allocation5 + $0x10e0] sm:$0xff]
    %v630 = vld [vmem:[#allocation5 + $0x10e8] sm:$0xff]
    %v631 = vld [vmem:[#allocation5 + $0x10f0] sm:$0xff]
    %v632 = vld [vmem:[#allocation5 + $0x10f8] sm:$0xff]
    %v633 = vld [vmem:[#allocation5 + $0x1100] sm:$0xff]
    %v634 = vld [vmem:[#allocation5 + $0x1108] sm:$0xff]
    %v635 = vld [vmem:[#allocation5 + $0x1110] sm:$0xff]
    %v636 = vld [vmem:[#allocation5 + $0x1118] sm:$0xff]
    %v637 = vld [vmem:[#allocation5 + $0x1120] sm:$0xff]
    %v638 = vld [vmem:[#allocation5 + $0x1128] sm:$0xff]
    %v639 = vld [vmem:[#allocation5 + $0x1130] sm:$0xff]
    %v640 = vld [vmem:[#allocation5 + $0x1138] sm:$0xff]
    %v641 = vld [vmem:[#allocation5 + $0x1140] sm:$0xff]
    %v642 = vld [vmem:[#allocation5 + $0x1148] sm:$0xff]
    %v643 = vld [vmem:[#allocation5 + $0x1150] sm:$0xff]
    %v644 = vld [vmem:[#allocation5 + $0x1158] sm:$0xff]
    %v645 = vld [vmem:[#allocation5 + $0x1160] sm:$0xff]
    %v646 = vld [vmem:[#allocation5 + $0x1168] sm:$0xff]
    %v647 = vld [vmem:[#allocation5 + $0x1170] sm:$0xff]
    %v648 = vld [vmem:[#allocation5 + $0x1178] sm:$0xff]
    %v649 = vld [vmem:[#allocation5 + $0x1180] sm:$0xff]
    %v650 = vld [vmem:[#allocation5 + $0x1188] sm:$0xff]
    %v651 = vld [vmem:[#allocation5 + $0x1190] sm:$0xff]
    %v652 = vld [vmem:[#allocation5 + $0x1198] sm:$0xff]
    %v653 = vld [vmem:[#allocation5 + $0x11a0] sm:$0xff]
    %v654 = vld [vmem:[#allocation5 + $0x11a8] sm:$0xff]
    %v655 = vld [vmem:[#allocation5 + $0x11b0] sm:$0xff]
    %v656 = vld [vmem:[#allocation5 + $0x11b8] sm:$0xff]
    %v657 = vld [vmem:[#allocation5 + $0x11c0] sm:$0xff]
    %v658 = vld [vmem:[#allocation5 + $0x11c8] sm:$0xff]
    %v659 = vld [vmem:[#allocation5 + $0x11d0] sm:$0xff]
    %v660 = vld [vmem:[#allocation5 + $0x11d8] sm:$0xff]
    %v661 = vld [vmem:[#allocation5 + $0x11e0] sm:$0xff]
    %v662 = vld [vmem:[#allocation5 + $0x11e8] sm:$0xff]
    %v663 = vld [vmem:[#allocation5 + $0x11f0] sm:$0xff]
    %v664 = vld [vmem:[#allocation5 + $0x11f8] sm:$0xff]
    %v665 = vld [vmem:[#allocation5 + $0x1200] sm:$0xff]
    %v666 = vld [vmem:[#allocation5 + $0x1208] sm:$0xff]
    %v667 = vld [vmem:[#allocation5 + $0x1210] sm:$0xff]
    %v668 = vld [vmem:[#allocation5 + $0x1218] sm:$0xff]
    %v669 = vld [vmem:[#allocation5 + $0x1220] sm:$0xff]
    %v670 = vld [vmem:[#allocation5 + $0x1228] sm:$0xff]
    %v671 = vld [vmem:[#allocation5 + $0x1230] sm:$0xff]
    %v672 = vld [vmem:[#allocation5 + $0x1238] sm:$0xff]
    %v673 = vld [vmem:[#allocation5 + $0x1240] sm:$0xff]
    %v674 = vld [vmem:[#allocation5 + $0x1248] sm:$0xff]
    %v675 = vld [vmem:[#allocation5 + $0x1250] sm:$0xff]
    %v676 = vld [vmem:[#allocation5 + $0x1258] sm:$0xff]
    %v677 = vld [vmem:[#allocation5 + $0x1260] sm:$0xff]
    %v678 = vld [vmem:[#allocation5 + $0x1268] sm:$0xff]
    %v679 = vld [vmem:[#allocation5 + $0x1270] sm:$0xff]
    %v680 = vld [vmem:[#allocation5 + $0x1278] sm:$0xff]
    %v681 = vld [vmem:[#allocation5 + $0x1280] sm:$0xff]
    %v682 = vld [vmem:[#allocation5 + $0x1288] sm:$0xff]
    %v683 = vld [vmem:[#allocation5 + $0x1290] sm:$0xff]
    %v684 = vld [vmem:[#allocation5 + $0x1298] sm:$0xff]
    %v685 = vld [vmem:[#allocation5 + $0x12a0] sm:$0xff]
    %v686 = vld [vmem:[#allocation5 + $0x12a8] sm:$0xff]
    %v687 = vld [vmem:[#allocation5 + $0x12b0] sm:$0xff]
    %v688 = vld [vmem:[#allocation5 + $0x12b8] sm:$0xff]
    %v689 = vld [vmem:[#allocation5 + $0x12c0] sm:$0xff]
    %v690 = vld [vmem:[#allocation5 + $0x12c8] sm:$0xff]
    %v691 = vld [vmem:[#allocation5 + $0x12d0] sm:$0xff]
    %v692 = vld [vmem:[#allocation5 + $0x12d8] sm:$0xff]
    %v693 = vld [vmem:[#allocation5 + $0x12e0] sm:$0xff]
    %v694 = vld [vmem:[#allocation5 + $0x12e8] sm:$0xff]
    %v695 = vld [vmem:[#allocation5 + $0x12f0] sm:$0xff]
    %v696 = vld [vmem:[#allocation5 + $0x12f8] sm:$0xff]
    %v697 = vld [vmem:[#allocation5 + $0x1300] sm:$0xff]
    %v698 = vld [vmem:[#allocation5 + $0x1308] sm:$0xff]
    %v699 = vld [vmem:[#allocation5 + $0x1310] sm:$0xff]
    %v700 = vld [vmem:[#allocation5 + $0x1318] sm:$0xff]
    %v701 = vld [vmem:[#allocation5 + $0x1320] sm:$0xff]
    %v702 = vld [vmem:[#allocation5 + $0x1328] sm:$0xff]
    %v703 = vld [vmem:[#allocation5 + $0x1330] sm:$0xff]
    %v704 = vld [vmem:[#allocation5 + $0x1338] sm:$0xff]
    %v705 = vld [vmem:[#allocation5 + $0x1340] sm:$0xff]
    %v706 = vld [vmem:[#allocation5 + $0x1348] sm:$0xff]
    %v707 = vld [vmem:[#allocation5 + $0x1350] sm:$0xff]
    %v708 = vld [vmem:[#allocation5 + $0x1358] sm:$0xff]
    %v709 = vld [vmem:[#allocation5 + $0x1360] sm:$0xff]
    %v710 = vld [vmem:[#allocation5 + $0x1368] sm:$0xff]
    %v711 = vld [vmem:[#allocation5 + $0x1370] sm:$0xff]
    %v712 = vld [vmem:[#allocation5 + $0x1378] sm:$0xff]
    %v713 = vld [vmem:[#allocation5 + $0x1380] sm:$0xff]
    %v714 = vld [vmem:[#allocation5 + $0x1388] sm:$0xff]
    %v715 = vld [vmem:[#allocation5 + $0x1390] sm:$0xff]
    %v716 = vld [vmem:[#allocation5 + $0x1398] sm:$0xff]
    %v717 = vld [vmem:[#allocation5 + $0x13a0] sm:$0xff]
    %v718 = vld [vmem:[#allocation5 + $0x13a8] sm:$0xff]
    %v719 = vld [vmem:[#allocation5 + $0x13b0] sm:$0xff]
    %v720 = vld [vmem:[#allocation5 + $0x13b8] sm:$0xff]
    %v721 = vld [vmem:[#allocation5 + $0x13c0] sm:$0xff]
    %v722 = vld [vmem:[#allocation5 + $0x13c8] sm:$0xff]
    %v723 = vld [vmem:[#allocation5 + $0x13d0] sm:$0xff]
    %v724 = vld [vmem:[#allocation5 + $0x13d8] sm:$0xff]
    %v725 = vld [vmem:[#allocation5 + $0x13e0] sm:$0xff]
    %v726 = vld [vmem:[#allocation5 + $0x13e8] sm:$0xff]
    %v727 = vld [vmem:[#allocation5 + $0x13f0] sm:$0xff]
    %v728 = vld [vmem:[#allocation5 + $0x13f8] sm:$0xff]
    %v729 = vld [vmem:[#allocation5 + $0x1400] sm:$0xff]
    %v730 = vld [vmem:[#allocation5 + $0x1408] sm:$0xff]
    %v731 = vld [vmem:[#allocation5 + $0x1410] sm:$0xff]
    %v732 = vld [vmem:[#allocation5 + $0x1418] sm:$0xff]
    %v733 = vld [vmem:[#allocation5 + $0x1420] sm:$0xff]
    %v734 = vld [vmem:[#allocation5 + $0x1428] sm:$0xff]
    %v735 = vld [vmem:[#allocation5 + $0x1430] sm:$0xff]
    %v736 = vld [vmem:[#allocation5 + $0x1438] sm:$0xff]
    %v737 = vld [vmem:[#allocation5 + $0x1440] sm:$0xff]
    %v738 = vld [vmem:[#allocation5 + $0x1448] sm:$0xff]
    %v739 = vld [vmem:[#allocation5 + $0x1450] sm:$0xff]
    %v740 = vld [vmem:[#allocation5 + $0x1458] sm:$0xff]
    %v741 = vld [vmem:[#allocation5 + $0x1460] sm:$0xff]
    %v742 = vld [vmem:[#allocation5 + $0x1468] sm:$0xff]
    %v743 = vld [vmem:[#allocation5 + $0x1470] sm:$0xff]
    %v744 = vld [vmem:[#allocation5 + $0x1478] sm:$0xff]
    %v745 = vld [vmem:[#allocation5 + $0x1480] sm:$0xff]
    %v746 = vld [vmem:[#allocation5 + $0x1488] sm:$0xff]
    %v747 = vld [vmem:[#allocation5 + $0x1490] sm:$0xff]
    %v748 = vld [vmem:[#allocation5 + $0x1498] sm:$0xff]
    %v749 = vld [vmem:[#allocation5 + $0x14a0] sm:$0xff]
    %v750 = vld [vmem:[#allocation5 + $0x14a8] sm:$0xff]
    %v751 = vld [vmem:[#allocation5 + $0x14b0] sm:$0xff]
    %v752 = vld [vmem:[#allocation5 + $0x14b8] sm:$0xff]
    %v753 = vld [vmem:[#allocation5 + $0x14c0] sm:$0xff]
    %v754 = vld [vmem:[#allocation5 + $0x14c8] sm:$0xff]
    %v755 = vld [vmem:[#allocation5 + $0x14d0] sm:$0xff]
    %v756 = vld [vmem:[#allocation5 + $0x14d8] sm:$0xff]
    %v757 = vld [vmem:[#allocation5 + $0x14e0] sm:$0xff]
    %v758 = vld [vmem:[#allocation5 + $0x14e8] sm:$0xff]
    %v759 = vld [vmem:[#allocation5 + $0x14f0] sm:$0xff]
    %v760 = vld [vmem:[#allocation5 + $0x14f8] sm:$0xff]
    %v761 = vld [vmem:[#allocation5 + $0x1500] sm:$0xff]
    %v762 = vld [vmem:[#allocation5 + $0x1508] sm:$0xff]
    %v763 = vld [vmem:[#allocation5 + $0x1510] sm:$0xff]
    %v764 = vld [vmem:[#allocation5 + $0x1518] sm:$0xff]
    %v765 = vld [vmem:[#allocation5 + $0x1520] sm:$0xff]
    %v766 = vld [vmem:[#allocation5 + $0x1528] sm:$0xff]
    %v767 = vld [vmem:[#allocation5 + $0x1530] sm:$0xff]
    %v768 = vld [vmem:[#allocation5 + $0x1538] sm:$0xff]
    %v769 = vld [vmem:[#allocation5 + $0x1540] sm:$0xff]
    %v770 = vld [vmem:[#allocation5 + $0x1548] sm:$0xff]
    %v771 = vld [vmem:[#allocation5 + $0x1550] sm:$0xff]
    %v772 = vld [vmem:[#allocation5 + $0x1558] sm:$0xff]
    %v773 = vld [vmem:[#allocation5 + $0x1560] sm:$0xff]
    %v774 = vld [vmem:[#allocation5 + $0x1568] sm:$0xff]
    %v775 = vld [vmem:[#allocation5 + $0x1570] sm:$0xff]
    %v776 = vld [vmem:[#allocation5 + $0x1578] sm:$0xff]
    %v777 = vld [vmem:[#allocation5 + $0x1580] sm:$0xff]
    %v778 = vld [vmem:[#allocation5 + $0x1588] sm:$0xff]
    %v779 = vld [vmem:[#allocation5 + $0x1590] sm:$0xff]
    %v780 = vld [vmem:[#allocation5 + $0x1598] sm:$0xff]
    %v781 = vld [vmem:[#allocation5 + $0x15a0] sm:$0xff]
    %v782 = vld [vmem:[#allocation5 + $0x15a8] sm:$0xff]
    %v783 = vld [vmem:[#allocation5 + $0x15b0] sm:$0xff]
    %v784 = vld [vmem:[#allocation5 + $0x15b8] sm:$0xff]
    %v785 = vld [vmem:[#allocation5 + $0x15c0] sm:$0xff]
    %v786 = vld [vmem:[#allocation5 + $0x15c8] sm:$0xff]
    %v787 = vld [vmem:[#allocation5 + $0x15d0] sm:$0xff]
    %v788 = vld [vmem:[#allocation5 + $0x15d8] sm:$0xff]
    %v789 = vld [vmem:[#allocation5 + $0x15e0] sm:$0xff]
    %v790 = vld [vmem:[#allocation5 + $0x15e8] sm:$0xff]
    %v791 = vld [vmem:[#allocation5 + $0x15f0] sm:$0xff]
    %v792 = vld [vmem:[#allocation5 + $0x15f8] sm:$0xff]
    %v793 = vld [vmem:[#allocation5 + $0x1600] sm:$0xff]
    %v794 = vld [vmem:[#allocation5 + $0x1608] sm:$0xff]
    %v795 = vld [vmem:[#allocation5 + $0x1610] sm:$0xff]
    %v796 = vld [vmem:[#allocation5 + $0x1618] sm:$0xff]
    %v797 = vld [vmem:[#allocation5 + $0x1620] sm:$0xff]
    %v798 = vld [vmem:[#allocation5 + $0x1628] sm:$0xff]
    %v799 = vld [vmem:[#allocation5 + $0x1630] sm:$0xff]
    %v800 = vld [vmem:[#allocation5 + $0x1638] sm:$0xff]
    %v801 = vld [vmem:[#allocation5 + $0x1640] sm:$0xff]
    %v802 = vld [vmem:[#allocation5 + $0x1648] sm:$0xff]
    %v803 = vld [vmem:[#allocation5 + $0x1650] sm:$0xff]
    %v804 = vld [vmem:[#allocation5 + $0x1658] sm:$0xff]
    %v805 = vld [vmem:[#allocation5 + $0x1660] sm:$0xff]
    %v806 = vld [vmem:[#allocation5 + $0x1668] sm:$0xff]
    %v807 = vld [vmem:[#allocation5 + $0x1670] sm:$0xff]
    %v808 = vld [vmem:[#allocation5 + $0x1678] sm:$0xff]
    %v809 = vld [vmem:[#allocation5 + $0x1680] sm:$0xff]
    %v810 = vld [vmem:[#allocation5 + $0x1688] sm:$0xff]
    %v811 = vld [vmem:[#allocation5 + $0x1690] sm:$0xff]
    %v812 = vld [vmem:[#allocation5 + $0x1698] sm:$0xff]
    %v813 = vld [vmem:[#allocation5 + $0x16a0] sm:$0xff]
    %v814 = vld [vmem:[#allocation5 + $0x16a8] sm:$0xff]
    %v815 = vld [vmem:[#allocation5 + $0x16b0] sm:$0xff]
    %v816 = vld [vmem:[#allocation5 + $0x16b8] sm:$0xff]
    %v817 = vld [vmem:[#allocation5 + $0x16c0] sm:$0xff]
    %v818 = vld [vmem:[#allocation5 + $0x16c8] sm:$0xff]
    %v819 = vld [vmem:[#allocation5 + $0x16d0] sm:$0xff]
    %v820 = vld [vmem:[#allocation5 + $0x16d8] sm:$0xff]
    %v821 = vld [vmem:[#allocation5 + $0x16e0] sm:$0xff]
    %v822 = vld [vmem:[#allocation5 + $0x16e8] sm:$0xff]
    %v823 = vld [vmem:[#allocation5 + $0x16f0] sm:$0xff]
    %v824 = vld [vmem:[#allocation5 + $0x16f8] sm:$0xff]
    %v825 = vld [vmem:[#allocation5 + $0x1700] sm:$0xff]
    %v826 = vld [vmem:[#allocation5 + $0x1708] sm:$0xff]
    %v827 = vld [vmem:[#allocation5 + $0x1710] sm:$0xff]
    %v828 = vld [vmem:[#allocation5 + $0x1718] sm:$0xff]
    %v829 = vld [vmem:[#allocation5 + $0x1720] sm:$0xff]
    %v830 = vld [vmem:[#allocation5 + $0x1728] sm:$0xff]
    %v831 = vld [vmem:[#allocation5 + $0x1730] sm:$0xff]
    %v832 = vld [vmem:[#allocation5 + $0x1738] sm:$0xff]
    %v833 = vld [vmem:[#allocation5 + $0x1740] sm:$0xff]
    %v834 = vld [vmem:[#allocation5 + $0x1748] sm:$0xff]
    %v835 = vld [vmem:[#allocation5 + $0x1750] sm:$0xff]
    %v836 = vld [vmem:[#allocation5 + $0x1758] sm:$0xff]
    %v837 = vld [vmem:[#allocation5 + $0x1760] sm:$0xff]
    %v838 = vld [vmem:[#allocation5 + $0x1768] sm:$0xff]
    %v839 = vld [vmem:[#allocation5 + $0x1770] sm:$0xff]
    %v840 = vld [vmem:[#allocation5 + $0x1778] sm:$0xff]
    %v841 = vld [vmem:[#allocation5 + $0x1780] sm:$0xff]
    %v842 = vld [vmem:[#allocation5 + $0x1788] sm:$0xff]
    %v843 = vld [vmem:[#allocation5 + $0x1790] sm:$0xff]
    %v844 = vld [vmem:[#allocation5 + $0x1798] sm:$0xff]
    %v845 = vld [vmem:[#allocation5 + $0x17a0] sm:$0xff]
    %v846 = vld [vmem:[#allocation5 + $0x17a8] sm:$0xff]
    %v847 = vld [vmem:[#allocation5 + $0x17b0] sm:$0xff]
    %v848 = vld [vmem:[#allocation5 + $0x17b8] sm:$0xff]
    %v849 = vld [vmem:[#allocation5 + $0x17c0] sm:$0xff]
    %v850 = vld [vmem:[#allocation5 + $0x17c8] sm:$0xff]
    %v851 = vld [vmem:[#allocation5 + $0x17d0] sm:$0xff]
    %v852 = vld [vmem:[#allocation5 + $0x17d8] sm:$0xff]
    %v853 = vld [vmem:[#allocation5 + $0x17e0] sm:$0xff]
    %v854 = vld [vmem:[#allocation5 + $0x17e8] sm:$0xff]
    %v855 = vld [vmem:[#allocation5 + $0x17f0] sm:$0xff]
    %v856 = vld [vmem:[#allocation5 + $0x17f8] sm:$0xff]
    %v857 = vld [vmem:[#allocation5 + $0x1800] sm:$0xff]
    %v858 = vld [vmem:[#allocation5 + $0x1808] sm:$0xff]
    %v859 = vld [vmem:[#allocation5 + $0x1810] sm:$0xff]
    %v860 = vld [vmem:[#allocation5 + $0x1818] sm:$0xff]
    %v861 = vld [vmem:[#allocation5 + $0x1820] sm:$0xff]
    %v862 = vld [vmem:[#allocation5 + $0x1828] sm:$0xff]
    %v863 = vld [vmem:[#allocation5 + $0x1830] sm:$0xff]
    %v864 = vld [vmem:[#allocation5 + $0x1838] sm:$0xff]
    %v865 = vld [vmem:[#allocation5 + $0x1840] sm:$0xff]
    %v866 = vld [vmem:[#allocation5 + $0x1848] sm:$0xff]
    %v867 = vld [vmem:[#allocation5 + $0x1850] sm:$0xff]
    %v868 = vld [vmem:[#allocation5 + $0x1858] sm:$0xff]
    %v869 = vld [vmem:[#allocation5 + $0x1860] sm:$0xff]
    %v870 = vld [vmem:[#allocation5 + $0x1868] sm:$0xff]
    %v871 = vld [vmem:[#allocation5 + $0x1870] sm:$0xff]
    %v872 = vld [vmem:[#allocation5 + $0x1878] sm:$0xff]
    %v873 = vld [vmem:[#allocation5 + $0x1880] sm:$0xff]
    %v874 = vld [vmem:[#allocation5 + $0x1888] sm:$0xff]
    %v875 = vld [vmem:[#allocation5 + $0x1890] sm:$0xff]
    %v876 = vld [vmem:[#allocation5 + $0x1898] sm:$0xff]
    %v877 = vld [vmem:[#allocation5 + $0x18a0] sm:$0xff]
    %v878 = vld [vmem:[#allocation5 + $0x18a8] sm:$0xff]
    %v879 = vld [vmem:[#allocation5 + $0x18b0] sm:$0xff]
    %v880 = vld [vmem:[#allocation5 + $0x18b8] sm:$0xff]
    %v881 = vld [vmem:[#allocation5 + $0x18c0] sm:$0xff]
    %v882 = vld [vmem:[#allocation5 + $0x18c8] sm:$0xff]
    %v883 = vld [vmem:[#allocation5 + $0x18d0] sm:$0xff]
    %v884 = vld [vmem:[#allocation5 + $0x18d8] sm:$0xff]
    %v885 = vld [vmem:[#allocation5 + $0x18e0] sm:$0xff]
    %v886 = vld [vmem:[#allocation5 + $0x18e8] sm:$0xff]
    %v887 = vld [vmem:[#allocation5 + $0x18f0] sm:$0xff]
    %v888 = vld [vmem:[#allocation5 + $0x18f8] sm:$0xff]
    %v889 = vld [vmem:[#allocation5 + $0x1900] sm:$0xff]
    %v890 = vld [vmem:[#allocation5 + $0x1908] sm:$0xff]
    %v891 = vld [vmem:[#allocation5 + $0x1910] sm:$0xff]
    %v892 = vld [vmem:[#allocation5 + $0x1918] sm:$0xff]
    %v893 = vld [vmem:[#allocation5 + $0x1920] sm:$0xff]
    %v894 = vld [vmem:[#allocation5 + $0x1928] sm:$0xff]
    %v895 = vld [vmem:[#allocation5 + $0x1930] sm:$0xff]
    %v896 = vld [vmem:[#allocation5 + $0x1938] sm:$0xff]
    %v897 = vld [vmem:[#allocation5 + $0x1940] sm:$0xff]
    %v898 = vld [vmem:[#allocation5 + $0x1948] sm:$0xff]
    %v899 = vld [vmem:[#allocation5 + $0x1950] sm:$0xff]
    %v900 = vld [vmem:[#allocation5 + $0x1958] sm:$0xff]
    %v901 = vld [vmem:[#allocation5 + $0x1960] sm:$0xff]
    %v902 = vld [vmem:[#allocation5 + $0x1968] sm:$0xff]
    %v903 = vld [vmem:[#allocation5 + $0x1970] sm:$0xff]
    %v904 = vld [vmem:[#allocation5 + $0x1978] sm:$0xff]
    %v905 = vld [vmem:[#allocation5 + $0x1980] sm:$0xff]
    %v906 = vld [vmem:[#allocation5 + $0x1988] sm:$0xff]
    %v907 = vld [vmem:[#allocation5 + $0x1990] sm:$0xff]
    %v908 = vld [vmem:[#allocation5 + $0x1998] sm:$0xff]
    %v909 = vld [vmem:[#allocation5 + $0x19a0] sm:$0xff]
    %v910 = vld [vmem:[#allocation5 + $0x19a8] sm:$0xff]
    %v911 = vld [vmem:[#allocation5 + $0x19b0] sm:$0xff]
    %v912 = vld [vmem:[#allocation5 + $0x19b8] sm:$0xff]
    %v913 = vld [vmem:[#allocation5 + $0x19c0] sm:$0xff]
    %v914 = vld [vmem:[#allocation5 + $0x19c8] sm:$0xff]
    %v915 = vld [vmem:[#allocation5 + $0x19d0] sm:$0xff]
    %v916 = vld [vmem:[#allocation5 + $0x19d8] sm:$0xff]
    %v917 = vld [vmem:[#allocation5 + $0x19e0] sm:$0xff]
    %v918 = vld [vmem:[#allocation5 + $0x19e8] sm:$0xff]
    %v919 = vld [vmem:[#allocation5 + $0x19f0] sm:$0xff]
    %v920 = vld [vmem:[#allocation5 + $0x19f8] sm:$0xff]
    %v921 = vld [vmem:[#allocation5 + $0x1a00] sm:$0xff]
    %v922 = vld [vmem:[#allocation5 + $0x1a08] sm:$0xff]
    %v923 = vld [vmem:[#allocation5 + $0x1a10] sm:$0xff]
    %v924 = vld [vmem:[#allocation5 + $0x1a18] sm:$0xff]
    %v925 = vld [vmem:[#allocation5 + $0x1a20] sm:$0xff]
    %v926 = vld [vmem:[#allocation5 + $0x1a28] sm:$0xff]
    %v927 = vld [vmem:[#allocation5 + $0x1a30] sm:$0xff]
    %v928 = vld [vmem:[#allocation5 + $0x1a38] sm:$0xff]
    %v929 = vld [vmem:[#allocation5 + $0x1a40] sm:$0xff]
    %v930 = vld [vmem:[#allocation5 + $0x1a48] sm:$0xff]
    %v931 = vld [vmem:[#allocation5 + $0x1a50] sm:$0xff]
    %v932 = vld [vmem:[#allocation5 + $0x1a58] sm:$0xff]
    %v933 = vld [vmem:[#allocation5 + $0x1a60] sm:$0xff]
    %v934 = vld [vmem:[#allocation5 + $0x1a68] sm:$0xff]
    %v935 = vld [vmem:[#allocation5 + $0x1a70] sm:$0xff]
    %v936 = vld [vmem:[#allocation5 + $0x1a78] sm:$0xff]
    %v937 = vld [vmem:[#allocation5 + $0x1a80] sm:$0xff]
    %v938 = vld [vmem:[#allocation5 + $0x1a88] sm:$0xff]
    %v939 = vld [vmem:[#allocation5 + $0x1a90] sm:$0xff]
    %v940 = vld [vmem:[#allocation5 + $0x1a98] sm:$0xff]
    %v941 = vld [vmem:[#allocation5 + $0x1aa0] sm:$0xff]
    %v942 = vld [vmem:[#allocation5 + $0x1aa8] sm:$0xff]
    %v943 = vld [vmem:[#allocation5 + $0x1ab0] sm:$0xff]
    %v944 = vld [vmem:[#allocation5 + $0x1ab8] sm:$0xff]
    %v945 = vld [vmem:[#allocation5 + $0x1ac0] sm:$0xff]
    %v946 = vld [vmem:[#allocation5 + $0x1ac8] sm:$0xff]
    %v947 = vld [vmem:[#allocation5 + $0x1ad0] sm:$0xff]
    %v948 = vld [vmem:[#allocation5 + $0x1ad8] sm:$0xff]
    %v949 = vld [vmem:[#allocation5 + $0x1ae0] sm:$0xff]
    %v950 = vld [vmem:[#allocation5 + $0x1ae8] sm:$0xff]
    %v951 = vld [vmem:[#allocation5 + $0x1af0] sm:$0xff]
    %v952 = vld [vmem:[#allocation5 + $0x1af8] sm:$0xff]
    %v953 = vld [vmem:[#allocation5 + $0x1b00] sm:$0xff]
    %v954 = vld [vmem:[#allocation5 + $0x1b08] sm:$0xff]
    %v955 = vld [vmem:[#allocation5 + $0x1b10] sm:$0xff]
    %v956 = vld [vmem:[#allocation5 + $0x1b18] sm:$0xff]
    %v957 = vld [vmem:[#allocation5 + $0x1b20] sm:$0xff]
    %v958 = vld [vmem:[#allocation5 + $0x1b28] sm:$0xff]
    %v959 = vld [vmem:[#allocation5 + $0x1b30] sm:$0xff]
    %v960 = vld [vmem:[#allocation5 + $0x1b38] sm:$0xff]
    %v961 = vld [vmem:[#allocation5 + $0x1b40] sm:$0xff]
    %v962 = vld [vmem:[#allocation5 + $0x1b48] sm:$0xff]
    %v963 = vld [vmem:[#allocation5 + $0x1b50] sm:$0xff]
    %v964 = vld [vmem:[#allocation5 + $0x1b58] sm:$0xff]
    %v965 = vld [vmem:[#allocation5 + $0x1b60] sm:$0xff]
    %v966 = vld [vmem:[#allocation5 + $0x1b68] sm:$0xff]
    %v967 = vld [vmem:[#allocation5 + $0x1b70] sm:$0xff]
    %v968 = vld [vmem:[#allocation5 + $0x1b78] sm:$0xff]
    %v969 = vld [vmem:[#allocation5 + $0x1b80] sm:$0xff]
    %v970 = vld [vmem:[#allocation5 + $0x1b88] sm:$0xff]
    %v971 = vld [vmem:[#allocation5 + $0x1b90] sm:$0xff]
    %v972 = vld [vmem:[#allocation5 + $0x1b98] sm:$0xff]
    %v973 = vld [vmem:[#allocation5 + $0x1ba0] sm:$0xff]
    %v974 = vld [vmem:[#allocation5 + $0x1ba8] sm:$0xff]
    %v975 = vld [vmem:[#allocation5 + $0x1bb0] sm:$0xff]
    %v976 = vld [vmem:[#allocation5 + $0x1bb8] sm:$0xff]
    %v977 = vld [vmem:[#allocation5 + $0x1bc0] sm:$0xff]
    %v978 = vld [vmem:[#allocation5 + $0x1bc8] sm:$0xff]
    %v979 = vld [vmem:[#allocation5 + $0x1bd0] sm:$0xff]
    %v980 = vld [vmem:[#allocation5 + $0x1bd8] sm:$0xff]
    %v981 = vld [vmem:[#allocation5 + $0x1be0] sm:$0xff]
    %v982 = vld [vmem:[#allocation5 + $0x1be8] sm:$0xff]
    %v983 = vld [vmem:[#allocation5 + $0x1bf0] sm:$0xff]
    %v984 = vld [vmem:[#allocation5 + $0x1bf8] sm:$0xff]
    %v985 = vld [vmem:[#allocation5 + $0x1c00] sm:$0xff]
    %v986 = vld [vmem:[#allocation5 + $0x1c08] sm:$0xff]
    %v987 = vld [vmem:[#allocation5 + $0x1c10] sm:$0xff]
    %v988 = vld [vmem:[#allocation5 + $0x1c18] sm:$0xff]
    %v989 = vld [vmem:[#allocation5 + $0x1c20] sm:$0xff]
    %v990 = vld [vmem:[#allocation5 + $0x1c28] sm:$0xff]
    %v991 = vld [vmem:[#allocation5 + $0x1c30] sm:$0xff]
    %v992 = vld [vmem:[#allocation5 + $0x1c38] sm:$0xff]
    %v993 = vld [vmem:[#allocation5 + $0x1c40] sm:$0xff]
    %v994 = vld [vmem:[#allocation5 + $0x1c48] sm:$0xff]
    %v995 = vld [vmem:[#allocation5 + $0x1c50] sm:$0xff]
    %v996 = vld [vmem:[#allocation5 + $0x1c58] sm:$0xff]
    %v997 = vld [vmem:[#allocation5 + $0x1c60] sm:$0xff]
    %v998 = vld [vmem:[#allocation5 + $0x1c68] sm:$0xff]
    %v999 = vld [vmem:[#allocation5 + $0x1c70] sm:$0xff]
    %v1000 = vld [vmem:[#allocation5 + $0x1c78] sm:$0xff]
    %v1001 = vld [vmem:[#allocation5 + $0x1c80] sm:$0xff]
    %v1002 = vld [vmem:[#allocation5 + $0x1c88] sm:$0xff]
    %v1003 = vld [vmem:[#allocation5 + $0x1c90] sm:$0xff]
    %v1004 = vld [vmem:[#allocation5 + $0x1c98] sm:$0xff]
    %v1005 = vld [vmem:[#allocation5 + $0x1ca0] sm:$0xff]
    %v1006 = vld [vmem:[#allocation5 + $0x1ca8] sm:$0xff]
    %v1007 = vld [vmem:[#allocation5 + $0x1cb0] sm:$0xff]
    %v1008 = vld [vmem:[#allocation5 + $0x1cb8] sm:$0xff]
    %v1009 = vld [vmem:[#allocation5 + $0x1cc0] sm:$0xff]
    %v1010 = vld [vmem:[#allocation5 + $0x1cc8] sm:$0xff]
    %v1011 = vld [vmem:[#allocation5 + $0x1cd0] sm:$0xff]
    %v1012 = vld [vmem:[#allocation5 + $0x1cd8] sm:$0xff]
    %v1013 = vld [vmem:[#allocation5 + $0x1ce0] sm:$0xff]
    %v1014 = vld [vmem:[#allocation5 + $0x1ce8] sm:$0xff]
    %v1015 = vld [vmem:[#allocation5 + $0x1cf0] sm:$0xff]
    %v1016 = vld [vmem:[#allocation5 + $0x1cf8] sm:$0xff]
    %v1017 = vld [vmem:[#allocation5 + $0x1d00] sm:$0xff]
    %v1018 = vld [vmem:[#allocation5 + $0x1d08] sm:$0xff]
    %v1019 = vld [vmem:[#allocation5 + $0x1d10] sm:$0xff]
    %v1020 = vld [vmem:[#allocation5 + $0x1d18] sm:$0xff]
    %v1021 = vld [vmem:[#allocation5 + $0x1d20] sm:$0xff]
    %v1022 = vld [vmem:[#allocation5 + $0x1d28] sm:$0xff]
    %v1023 = vld [vmem:[#allocation5 + $0x1d30] sm:$0xff]
    %v1024 = vld [vmem:[#allocation5 + $0x1d38] sm:$0xff]
    %v1025 = vld [vmem:[#allocation5 + $0x1d40] sm:$0xff]
    %v1026 = vld [vmem:[#allocation5 + $0x1d48] sm:$0xff]
    %v1027 = vld [vmem:[#allocation5 + $0x1d50] sm:$0xff]
    %v1028 = vld [vmem:[#allocation5 + $0x1d58] sm:$0xff]
    %v1029 = vld [vmem:[#allocation5 + $0x1d60] sm:$0xff]
    %v1030 = vld [vmem:[#allocation5 + $0x1d68] sm:$0xff]
    %v1031 = vld [vmem:[#allocation5 + $0x1d70] sm:$0xff]
    %v1032 = vld [vmem:[#allocation5 + $0x1d78] sm:$0xff]
    %v1033 = vld [vmem:[#allocation5 + $0x1d80] sm:$0xff]
    %v1034 = vld [vmem:[#allocation5 + $0x1d88] sm:$0xff]
    %v1035 = vld [vmem:[#allocation5 + $0x1d90] sm:$0xff]
    %v1036 = vld [vmem:[#allocation5 + $0x1d98] sm:$0xff]
    %v1037 = vld [vmem:[#allocation5 + $0x1da0] sm:$0xff]
    %v1038 = vld [vmem:[#allocation5 + $0x1da8] sm:$0xff]
    %v1039 = vld [vmem:[#allocation5 + $0x1db0] sm:$0xff]
    %v1040 = vld [vmem:[#allocation5 + $0x1db8] sm:$0xff]
    %v1041 = vld [vmem:[#allocation5 + $0x1dc0] sm:$0xff]
    %v1042 = vld [vmem:[#allocation5 + $0x1dc8] sm:$0xff]
    %v1043 = vld [vmem:[#allocation5 + $0x1dd0] sm:$0xff]
    %v1044 = vld [vmem:[#allocation5 + $0x1dd8] sm:$0xff]
    %v1045 = vld [vmem:[#allocation5 + $0x1de0] sm:$0xff]
    %v1046 = vld [vmem:[#allocation5 + $0x1de8] sm:$0xff]
    %v1047 = vld [vmem:[#allocation5 + $0x1df0] sm:$0xff]
    %v1048 = vld [vmem:[#allocation5 + $0x1df8] sm:$0xff]
    %v1049 = vld [vmem:[#allocation5 + $0x1e00] sm:$0xff]
    %v1050 = vld [vmem:[#allocation5 + $0x1e08] sm:$0xff]
    %v1051 = vld [vmem:[#allocation5 + $0x1e10] sm:$0xff]
    %v1052 = vld [vmem:[#allocation5 + $0x1e18] sm:$0xff]
    %v1053 = vld [vmem:[#allocation5 + $0x1e20] sm:$0xff]
    %v1054 = vld [vmem:[#allocation5 + $0x1e28] sm:$0xff]
    %v1055 = vld [vmem:[#allocation5 + $0x1e30] sm:$0xff]
    %v1056 = vld [vmem:[#allocation5 + $0x1e38] sm:$0xff]
    %v1057 = vld [vmem:[#allocation5 + $0x1e40] sm:$0xff]
    %v1058 = vld [vmem:[#allocation5 + $0x1e48] sm:$0xff]
    %v1059 = vld [vmem:[#allocation5 + $0x1e50] sm:$0xff]
    %v1060 = vld [vmem:[#allocation5 + $0x1e58] sm:$0xff]
    %v1061 = vld [vmem:[#allocation5 + $0x1e60] sm:$0xff]
    %v1062 = vld [vmem:[#allocation5 + $0x1e68] sm:$0xff]
    %v1063 = vld [vmem:[#allocation5 + $0x1e70] sm:$0xff]
    %v1064 = vld [vmem:[#allocation5 + $0x1e78] sm:$0xff]
    %v1065 = vld [vmem:[#allocation5 + $0x1e80] sm:$0xff]
    %v1066 = vld [vmem:[#allocation5 + $0x1e88] sm:$0xff]
    %v1067 = vld [vmem:[#allocation5 + $0x1e90] sm:$0xff]
    %v1068 = vld [vmem:[#allocation5 + $0x1e98] sm:$0xff]
    %v1069 = vld [vmem:[#allocation5 + $0x1ea0] sm:$0xff]
    %v1070 = vld [vmem:[#allocation5 + $0x1ea8] sm:$0xff]
    %v1071 = vld [vmem:[#allocation5 + $0x1eb0] sm:$0xff]
    %v1072 = vld [vmem:[#allocation5 + $0x1eb8] sm:$0xff]
    %v1073 = vld [vmem:[#allocation5 + $0x1ec0] sm:$0xff]
    %v1074 = vld [vmem:[#allocation5 + $0x1ec8] sm:$0xff]
    %v1075 = vld [vmem:[#allocation5 + $0x1ed0] sm:$0xff]
    %v1076 = vld [vmem:[#allocation5 + $0x1ed8] sm:$0xff]
    %v1077 = vld [vmem:[#allocation5 + $0x1ee0] sm:$0xff]
    %v1078 = vld [vmem:[#allocation5 + $0x1ee8] sm:$0xff]
    %v1079 = vld [vmem:[#allocation5 + $0x1ef0] sm:$0xff]
    %v1080 = vld [vmem:[#allocation5 + $0x1ef8] sm:$0xff]
    %v1081 = vld [vmem:[#allocation5 + $0x1f00] sm:$0xff]
    %v1082 = vld [vmem:[#allocation5 + $0x1f08] sm:$0xff]
    %v1083 = vld [vmem:[#allocation5 + $0x1f10] sm:$0xff]
    %v1084 = vld [vmem:[#allocation5 + $0x1f18] sm:$0xff]
    %v1085 = vld [vmem:[#allocation5 + $0x1f20] sm:$0xff]
    %v1086 = vld [vmem:[#allocation5 + $0x1f28] sm:$0xff]
    %v1087 = vld [vmem:[#allocation5 + $0x1f30] sm:$0xff]
    %v1088 = vld [vmem:[#allocation5 + $0x1f38] sm:$0xff]
    %v1089 = vld [vmem:[#allocation5 + $0x1f40] sm:$0xff]
    %v1090 = vld [vmem:[#allocation5 + $0x1f48] sm:$0xff]
    %v1091 = vld [vmem:[#allocation5 + $0x1f50] sm:$0xff]
    %v1092 = vld [vmem:[#allocation5 + $0x1f58] sm:$0xff]
    %v1093 = vld [vmem:[#allocation5 + $0x1f60] sm:$0xff]
    %v1094 = vld [vmem:[#allocation5 + $0x1f68] sm:$0xff]
    %v1095 = vld [vmem:[#allocation5 + $0x1f70] sm:$0xff]
    %v1096 = vld [vmem:[#allocation5 + $0x1f78] sm:$0xff]
    %v1097 = vld [vmem:[#allocation5 + $0x1f80] sm:$0xff]
    %v1098 = vld [vmem:[#allocation5 + $0x1f88] sm:$0xff]
    %v1099 = vld [vmem:[#allocation5 + $0x1f90] sm:$0xff]
    %v1100 = vld [vmem:[#allocation5 + $0x1f98] sm:$0xff]
    %v1101 = vld [vmem:[#allocation5 + $0x1fa0] sm:$0xff]
    %v1102 = vld [vmem:[#allocation5 + $0x1fa8] sm:$0xff]
    %v1103 = vld [vmem:[#allocation5 + $0x1fb0] sm:$0xff]
    %v1104 = vld [vmem:[#allocation5 + $0x1fb8] sm:$0xff]
    %v1105 = vld [vmem:[#allocation5 + $0x1fc0] sm:$0xff]
    %v1106 = vld [vmem:[#allocation5 + $0x1fc8] sm:$0xff]
    %v1107 = vld [vmem:[#allocation5 + $0x1fd0] sm:$0xff]
    %v1108 = vld [vmem:[#allocation5 + $0x1fd8] sm:$0xff]
    %v1109 = vld [vmem:[#allocation5 + $0x1fe0] sm:$0xff]
    %v1110 = vld [vmem:[#allocation5 + $0x1fe8] sm:$0xff]
    %v1111 = vld [vmem:[#allocation5 + $0x1ff0] sm:$0xff]
    %v1112 = vld [vmem:[#allocation5 + $0x1ff8] sm:$0xff]
    %v1113 = vld [vmem:[#allocation5 + $0x2000] sm:$0xff]
    %v1114 = vld [vmem:[#allocation5 + $0x2008] sm:$0xff]
    %v1115 = vld [vmem:[#allocation5 + $0x2010] sm:$0xff]
    %v1116 = vld [vmem:[#allocation5 + $0x2018] sm:$0xff]
    %v1117 = vld [vmem:[#allocation5 + $0x2020] sm:$0xff]
    %v1118 = vld [vmem:[#allocation5 + $0x2028] sm:$0xff]
    %v1119 = vld [vmem:[#allocation5 + $0x2030] sm:$0xff]
    %v1120 = vld [vmem:[#allocation5 + $0x2038] sm:$0xff]
    %v1121 = vld [vmem:[#allocation5 + $0x2040] sm:$0xff]
    %v1122 = vld [vmem:[#allocation5 + $0x2048] sm:$0xff]
    %v1123 = vld [vmem:[#allocation5 + $0x2050] sm:$0xff]
    %v1124 = vld [vmem:[#allocation5 + $0x2058] sm:$0xff]
    %v1125 = vld [vmem:[#allocation5 + $0x2060] sm:$0xff]
    %v1126 = vld [vmem:[#allocation5 + $0x2068] sm:$0xff]
    %v1127 = vld [vmem:[#allocation5 + $0x2070] sm:$0xff]
    %v1128 = vld [vmem:[#allocation5 + $0x2078] sm:$0xff]
    %v1129 = vld [vmem:[#allocation5 + $0x2080] sm:$0xff]
    %v1130 = vld [vmem:[#allocation5 + $0x2088] sm:$0xff]
    %v1131 = vld [vmem:[#allocation5 + $0x2090] sm:$0xff]
    %v1132 = vld [vmem:[#allocation5 + $0x2098] sm:$0xff]
    %v1133 = vld [vmem:[#allocation5 + $0x20a0] sm:$0xff]
    %v1134 = vld [vmem:[#allocation5 + $0x20a8] sm:$0xff]
    %v1135 = vld [vmem:[#allocation5 + $0x20b0] sm:$0xff]
    %v1136 = vld [vmem:[#allocation5 + $0x20b8] sm:$0xff]
    %v1137 = vld [vmem:[#allocation5 + $0x20c0] sm:$0xff]
    %v1138 = vld [vmem:[#allocation5 + $0x20c8] sm:$0xff]
    %v1139 = vld [vmem:[#allocation5 + $0x20d0] sm:$0xff]
    %v1140 = vld [vmem:[#allocation5 + $0x20d8] sm:$0xff]
    %v1141 = vld [vmem:[#allocation5 + $0x20e0] sm:$0xff]
    %v1142 = vld [vmem:[#allocation5 + $0x20e8] sm:$0xff]
    %v1143 = vld [vmem:[#allocation5 + $0x20f0] sm:$0xff]
    %v1144 = vld [vmem:[#allocation5 + $0x20f8] sm:$0xff]
    %v1145 = vld [vmem:[#allocation5 + $0x2100] sm:$0xff]
    %v1146 = vld [vmem:[#allocation5 + $0x2108] sm:$0xff]
    %v1147 = vld [vmem:[#allocation5 + $0x2110] sm:$0xff]
    %v1148 = vld [vmem:[#allocation5 + $0x2118] sm:$0xff]
    %v1149 = vld [vmem:[#allocation5 + $0x2120] sm:$0xff]
    %v1150 = vld [vmem:[#allocation5 + $0x2128] sm:$0xff]
    %v1151 = vld [vmem:[#allocation5 + $0x2130] sm:$0xff]
    %v1152 = vld [vmem:[#allocation5 + $0x2138] sm:$0xff]
    %v1153 = vld [vmem:[#allocation5 + $0x2140] sm:$0xff]
    %v1154 = vld [vmem:[#allocation5 + $0x2148] sm:$0xff]
    %v1155 = vld [vmem:[#allocation5 + $0x2150] sm:$0xff]
    %v1156 = vld [vmem:[#allocation5 + $0x2158] sm:$0xff]
    %v1157 = vld [vmem:[#allocation5 + $0x2160] sm:$0xff]
    %v1158 = vld [vmem:[#allocation5 + $0x2168] sm:$0xff]
    %v1159 = vld [vmem:[#allocation5 + $0x2170] sm:$0xff]
    %v1160 = vld [vmem:[#allocation5 + $0x2178] sm:$0xff]
    %v1161 = vld [vmem:[#allocation5 + $0x2180] sm:$0xff]
    %v1162 = vld [vmem:[#allocation5 + $0x2188] sm:$0xff]
    %v1163 = vld [vmem:[#allocation5 + $0x2190] sm:$0xff]
    %v1164 = vld [vmem:[#allocation5 + $0x2198] sm:$0xff]
    %v1165 = vld [vmem:[#allocation5 + $0x21a0] sm:$0xff]
    %v1166 = vld [vmem:[#allocation5 + $0x21a8] sm:$0xff]
    %v1167 = vld [vmem:[#allocation5 + $0x21b0] sm:$0xff]
    %v1168 = vld [vmem:[#allocation5 + $0x21b8] sm:$0xff]
    %v1169 = vld [vmem:[#allocation5 + $0x21c0] sm:$0xff]
    %v1170 = vld [vmem:[#allocation5 + $0x21c8] sm:$0xff]
    %v1171 = vld [vmem:[#allocation5 + $0x21d0] sm:$0xff]
    %v1172 = vld [vmem:[#allocation5 + $0x21d8] sm:$0xff]
    %v1173 = vld [vmem:[#allocation5 + $0x21e0] sm:$0xff]
    %v1174 = vld [vmem:[#allocation5 + $0x21e8] sm:$0xff]
    %v1175 = vld [vmem:[#allocation5 + $0x21f0] sm:$0xff]
    %v1176 = vld [vmem:[#allocation5 + $0x21f8] sm:$0xff]
    %v1177 = vld [vmem:[#allocation5 + $0x2200] sm:$0xff]
    %v1178 = vld [vmem:[#allocation5 + $0x2208] sm:$0xff]
    %v1179 = vld [vmem:[#allocation5 + $0x2210] sm:$0xff]
    %v1180 = vld [vmem:[#allocation5 + $0x2218] sm:$0xff]
    %v1181 = vld [vmem:[#allocation5 + $0x2220] sm:$0xff]
    %v1182 = vld [vmem:[#allocation5 + $0x2228] sm:$0xff]
    %v1183 = vld [vmem:[#allocation5 + $0x2230] sm:$0xff]
    %v1184 = vld [vmem:[#allocation5 + $0x2238] sm:$0xff]
    %v1185 = vld [vmem:[#allocation5 + $0x2240] sm:$0xff]
    %v1186 = vld [vmem:[#allocation5 + $0x2248] sm:$0xff]
    %v1187 = vld [vmem:[#allocation5 + $0x2250] sm:$0xff]
    %v1188 = vld [vmem:[#allocation5 + $0x2258] sm:$0xff]
    %v1189 = vld [vmem:[#allocation5 + $0x2260] sm:$0xff]
    %v1190 = vld [vmem:[#allocation5 + $0x2268] sm:$0xff]
    %v1191 = vld [vmem:[#allocation5 + $0x2270] sm:$0xff]
    %v1192 = vld [vmem:[#allocation5 + $0x2278] sm:$0xff]
    %v1193 = vld [vmem:[#allocation5 + $0x2280] sm:$0xff]
    %v1194 = vld [vmem:[#allocation5 + $0x2288] sm:$0xff]
    %v1195 = vld [vmem:[#allocation5 + $0x2290] sm:$0xff]
    %v1196 = vld [vmem:[#allocation5 + $0x2298] sm:$0xff]
    %v1197 = vld [vmem:[#allocation5 + $0x22a0] sm:$0xff]
    %v1198 = vld [vmem:[#allocation5 + $0x22a8] sm:$0xff]
    %v1199 = vld [vmem:[#allocation5 + $0x22b0] sm:$0xff]
    %v1200 = vld [vmem:[#allocation5 + $0x22b8] sm:$0xff]
    %v1201 = vld [vmem:[#allocation5 + $0x22c0] sm:$0xff]
    %v1202 = vld [vmem:[#allocation5 + $0x22c8] sm:$0xff]
    %v1203 = vld [vmem:[#allocation5 + $0x22d0] sm:$0xff]
    %v1204 = vld [vmem:[#allocation5 + $0x22d8] sm:$0xff]
    %v1205 = vld [vmem:[#allocation5 + $0x22e0] sm:$0xff]
    %v1206 = vld [vmem:[#allocation5 + $0x22e8] sm:$0xff]
    %v1207 = vld [vmem:[#allocation5 + $0x22f0] sm:$0xff]
    %v1208 = vld [vmem:[#allocation5 + $0x22f8] sm:$0xff]
    %v1209 = vld [vmem:[#allocation5 + $0x2300] sm:$0xff]
    %v1210 = vld [vmem:[#allocation5 + $0x2308] sm:$0xff]
    %v1211 = vld [vmem:[#allocation5 + $0x2310] sm:$0xff]
    %v1212 = vld [vmem:[#allocation5 + $0x2318] sm:$0xff]
    %v1213 = vld [vmem:[#allocation5 + $0x2320] sm:$0xff]
    %v1214 = vld [vmem:[#allocation5 + $0x2328] sm:$0xff]
    %v1215 = vld [vmem:[#allocation5 + $0x2330] sm:$0xff]
    %v1216 = vld [vmem:[#allocation5 + $0x2338] sm:$0xff]
    %v1217 = vld [vmem:[#allocation5 + $0x2340] sm:$0xff]
    %v1218 = vld [vmem:[#allocation5 + $0x2348] sm:$0xff]
    %v1219 = vld [vmem:[#allocation5 + $0x2350] sm:$0xff]
    %v1220 = vld [vmem:[#allocation5 + $0x2358] sm:$0xff]
    %v1221 = vld [vmem:[#allocation5 + $0x2360] sm:$0xff]
    %v1222 = vld [vmem:[#allocation5 + $0x2368] sm:$0xff]
    %v1223 = vld [vmem:[#allocation5 + $0x2370] sm:$0xff]
    %v1224 = vld [vmem:[#allocation5 + $0x2378] sm:$0xff]
    %v1225 = vld [vmem:[#allocation5 + $0x2380] sm:$0xff]
    %v1226 = vld [vmem:[#allocation5 + $0x2388] sm:$0xff]
    %v1227 = vld [vmem:[#allocation5 + $0x2390] sm:$0xff]
    %v1228 = vld [vmem:[#allocation5 + $0x2398] sm:$0xff]
    %v1229 = vld [vmem:[#allocation5 + $0x23a0] sm:$0xff]
    %v1230 = vld [vmem:[#allocation5 + $0x23a8] sm:$0xff]
    %v1231 = vld [vmem:[#allocation5 + $0x23b0] sm:$0xff]
    %v1232 = vld [vmem:[#allocation5 + $0x23b8] sm:$0xff]
    %v1233 = vld [vmem:[#allocation5 + $0x23c0] sm:$0xff]
    %v1234 = vld [vmem:[#allocation5 + $0x23c8] sm:$0xff]
    %v1235 = vld [vmem:[#allocation5 + $0x23d0] sm:$0xff]
    %v1236 = vld [vmem:[#allocation5 + $0x23d8] sm:$0xff]
    %v1237 = vld [vmem:[#allocation5 + $0x23e0] sm:$0xff]
    %v1238 = vld [vmem:[#allocation5 + $0x23e8] sm:$0xff]
    %v1239 = vld [vmem:[#allocation5 + $0x23f0] sm:$0xff]
    %v1240 = vld [vmem:[#allocation5 + $0x23f8] sm:$0xff]
    %v1241 = vld [vmem:[#allocation5 + $0x2400] sm:$0xff]
    %v1242 = vld [vmem:[#allocation5 + $0x2408] sm:$0xff]
    %v1243 = vld [vmem:[#allocation5 + $0x2410] sm:$0xff]
    %v1244 = vld [vmem:[#allocation5 + $0x2418] sm:$0xff]
    %v1245 = vld [vmem:[#allocation5 + $0x2420] sm:$0xff]
    %v1246 = vld [vmem:[#allocation5 + $0x2428] sm:$0xff]
    %v1247 = vld [vmem:[#allocation5 + $0x2430] sm:$0xff]
    %v1248 = vld [vmem:[#allocation5 + $0x2438] sm:$0xff]
    %v1249 = vld [vmem:[#allocation5 + $0x2440] sm:$0xff]
    %v1250 = vld [vmem:[#allocation5 + $0x2448] sm:$0xff]
    %v1251 = vld [vmem:[#allocation5 + $0x2450] sm:$0xff]
    %v1252 = vld [vmem:[#allocation5 + $0x2458] sm:$0xff]
    %v1253 = vld [vmem:[#allocation5 + $0x2460] sm:$0xff]
    %v1254 = vld [vmem:[#allocation5 + $0x2468] sm:$0xff]
    %v1255 = vld [vmem:[#allocation5 + $0x2470] sm:$0xff]
    %v1256 = vld [vmem:[#allocation5 + $0x2478] sm:$0xff]
    %v1257 = vld [vmem:[#allocation5 + $0x2480] sm:$0xff]
    %v1258 = vld [vmem:[#allocation5 + $0x2488] sm:$0xff]
    %v1259 = vld [vmem:[#allocation5 + $0x2490] sm:$0xff]
    %v1260 = vld [vmem:[#allocation5 + $0x2498] sm:$0xff]
    %v1261 = vld [vmem:[#allocation5 + $0x24a0] sm:$0xff]
    %v1262 = vld [vmem:[#allocation5 + $0x24a8] sm:$0xff]
    %v1263 = vld [vmem:[#allocation5 + $0x24b0] sm:$0xff]
    %v1264 = vld [vmem:[#allocation5 + $0x24b8] sm:$0xff]
    %v1265 = vld [vmem:[#allocation5 + $0x24c0] sm:$0xff]
    %v1266 = vld [vmem:[#allocation5 + $0x24c8] sm:$0xff]
    %v1267 = vld [vmem:[#allocation5 + $0x24d0] sm:$0xff]
    %v1268 = vld [vmem:[#allocation5 + $0x24d8] sm:$0xff]
    %v1269 = vld [vmem:[#allocation5 + $0x24e0] sm:$0xff]
    %v1270 = vld [vmem:[#allocation5 + $0x24e8] sm:$0xff]
    %v1271 = vld [vmem:[#allocation5 + $0x24f0] sm:$0xff]
    %v1272 = vld [vmem:[#allocation5 + $0x24f8] sm:$0xff]
    %v1273 = vld [vmem:[#allocation5 + $0x2500] sm:$0xff]
    %v1274 = vld [vmem:[#allocation5 + $0x2508] sm:$0xff]
    %v1275 = vld [vmem:[#allocation5 + $0x2510] sm:$0xff]
    %v1276 = vld [vmem:[#allocation5 + $0x2518] sm:$0xff]
    %v1277 = vld [vmem:[#allocation5 + $0x2520] sm:$0xff]
    %v1278 = vld [vmem:[#allocation5 + $0x2528] sm:$0xff]
    %v1279 = vld [vmem:[#allocation5 + $0x2530] sm:$0xff]
    %v1280 = vld [vmem:[#allocation5 + $0x2538] sm:$0xff]
    %v1281 = vld [vmem:[#allocation5 + $0x2540] sm:$0xff]
    %v1282 = vld [vmem:[#allocation5 + $0x2548] sm:$0xff]
    %v1283 = vld [vmem:[#allocation5 + $0x2550] sm:$0xff]
    %v1284 = vld [vmem:[#allocation5 + $0x2558] sm:$0xff]
    %v1285 = vld [vmem:[#allocation5 + $0x2560] sm:$0xff]
    %v1286 = vld [vmem:[#allocation5 + $0x2568] sm:$0xff]
    %v1287 = vld [vmem:[#allocation5 + $0x2570] sm:$0xff]
    %v1288 = vld [vmem:[#allocation5 + $0x2578] sm:$0xff]
    %v1289 = vld [vmem:[#allocation5 + $0x2580] sm:$0xff]
    %v1290 = vld [vmem:[#allocation5 + $0x2588] sm:$0xff]
    %v1291 = vld [vmem:[#allocation5 + $0x2590] sm:$0xff]
    %v1292 = vld [vmem:[#allocation5 + $0x2598] sm:$0xff]
    %v1293 = vld [vmem:[#allocation5 + $0x25a0] sm:$0xff]
    %v1294 = vld [vmem:[#allocation5 + $0x25a8] sm:$0xff]
    %v1295 = vld [vmem:[#allocation5 + $0x25b0] sm:$0xff]
    %v1296 = vld [vmem:[#allocation5 + $0x25b8] sm:$0xff]
    %v1297 = vld [vmem:[#allocation5 + $0x25c0] sm:$0xff]
    %v1298 = vld [vmem:[#allocation5 + $0x25c8] sm:$0xff]
    %v1299 = vld [vmem:[#allocation5 + $0x25d0] sm:$0xff]
    %v1300 = vld [vmem:[#allocation5 + $0x25d8] sm:$0xff]
    %v1301 = vld [vmem:[#allocation5 + $0x25e0] sm:$0xff]
    %v1302 = vld [vmem:[#allocation5 + $0x25e8] sm:$0xff]
    %v1303 = vld [vmem:[#allocation5 + $0x25f0] sm:$0xff]
    %v1304 = vld [vmem:[#allocation5 + $0x25f8] sm:$0xff]
    %v1305 = vld [vmem:[#allocation5 + $0x2600] sm:$0xff]
    %v1306 = vld [vmem:[#allocation5 + $0x2608] sm:$0xff]
    %v1307 = vld [vmem:[#allocation5 + $0x2610] sm:$0xff]
    %v1308 = vld [vmem:[#allocation5 + $0x2618] sm:$0xff]
    %v1309 = vld [vmem:[#allocation5 + $0x2620] sm:$0xff]
    %v1310 = vld [vmem:[#allocation5 + $0x2628] sm:$0xff]
    %v1311 = vld [vmem:[#allocation5 + $0x2630] sm:$0xff]
    %v1312 = vld [vmem:[#allocation5 + $0x2638] sm:$0xff]
    %v1313 = vld [vmem:[#allocation5 + $0x2640] sm:$0xff]
    %v1314 = vld [vmem:[#allocation5 + $0x2648] sm:$0xff]
    %v1315 = vld [vmem:[#allocation5 + $0x2650] sm:$0xff]
    %v1316 = vld [vmem:[#allocation5 + $0x2658] sm:$0xff]
    %v1317 = vld [vmem:[#allocation5 + $0x2660] sm:$0xff]
    %v1318 = vld [vmem:[#allocation5 + $0x2668] sm:$0xff]
    %v1319 = vld [vmem:[#allocation5 + $0x2670] sm:$0xff]
    %v1320 = vld [vmem:[#allocation5 + $0x2678] sm:$0xff]
    %v1321 = vld [vmem:[#allocation5 + $0x2680] sm:$0xff]
    %v1322 = vld [vmem:[#allocation5 + $0x2688] sm:$0xff]
    %v1323 = vld [vmem:[#allocation5 + $0x2690] sm:$0xff]
    %v1324 = vld [vmem:[#allocation5 + $0x2698] sm:$0xff]
    %v1325 = vld [vmem:[#allocation5 + $0x26a0] sm:$0xff]
    %v1326 = vld [vmem:[#allocation5 + $0x26a8] sm:$0xff]
    %v1327 = vld [vmem:[#allocation5 + $0x26b0] sm:$0xff]
    %v1328 = vld [vmem:[#allocation5 + $0x26b8] sm:$0xff]
    %v1329 = vld [vmem:[#allocation5 + $0x26c0] sm:$0xff]
    %v1330 = vld [vmem:[#allocation5 + $0x26c8] sm:$0xff]
    %v1331 = vld [vmem:[#allocation5 + $0x26d0] sm:$0xff]
    %v1332 = vld [vmem:[#allocation5 + $0x26d8] sm:$0xff]
    %v1333 = vld [vmem:[#allocation5 + $0x26e0] sm:$0xff]
    %v1334 = vld [vmem:[#allocation5 + $0x26e8] sm:$0xff]
    %v1335 = vld [vmem:[#allocation5 + $0x26f0] sm:$0xff]
    %v1336 = vld [vmem:[#allocation5 + $0x26f8] sm:$0xff]
    %v1337 = vld [vmem:[#allocation5 + $0x2700] sm:$0xff]
    %v1338 = vld [vmem:[#allocation5 + $0x2708] sm:$0xff]
    %v1339 = vld [vmem:[#allocation5 + $0x2710] sm:$0xff]
    %v1340 = vld [vmem:[#allocation5 + $0x2718] sm:$0xff]
    %v1341 = vld [vmem:[#allocation5 + $0x2720] sm:$0xff]
    %v1342 = vld [vmem:[#allocation5 + $0x2728] sm:$0xff]
    %v1343 = vld [vmem:[#allocation5 + $0x2730] sm:$0xff]
    %v1344 = vld [vmem:[#allocation5 + $0x2738] sm:$0xff]
    %v1345 = vld [vmem:[#allocation5 + $0x2740] sm:$0xff]
    %v1346 = vld [vmem:[#allocation5 + $0x2748] sm:$0xff]
    %v1347 = vld [vmem:[#allocation5 + $0x2750] sm:$0xff]
    %v1348 = vld [vmem:[#allocation5 + $0x2758] sm:$0xff]
    %v1349 = vld [vmem:[#allocation5 + $0x2760] sm:$0xff]
    %v1350 = vld [vmem:[#allocation5 + $0x2768] sm:$0xff]
    %v1351 = vld [vmem:[#allocation5 + $0x2770] sm:$0xff]
    %v1352 = vld [vmem:[#allocation5 + $0x2778] sm:$0xff]
    %v1353 = vld [vmem:[#allocation5 + $0x2780] sm:$0xff]
    %v1354 = vld [vmem:[#allocation5 + $0x2788] sm:$0xff]
    %v1355 = vld [vmem:[#allocation5 + $0x2790] sm:$0xff]
    %v1356 = vld [vmem:[#allocation5 + $0x2798] sm:$0xff]
    %v1357 = vld [vmem:[#allocation5 + $0x27a0] sm:$0xff]
    %v1358 = vld [vmem:[#allocation5 + $0x27a8] sm:$0xff]
    %v1359 = vld [vmem:[#allocation5 + $0x27b0] sm:$0xff]
    %v1360 = vld [vmem:[#allocation5 + $0x27b8] sm:$0xff]
    %v1361 = vld [vmem:[#allocation5 + $0x27c0] sm:$0xff]
    %v1362 = vld [vmem:[#allocation5 + $0x27c8] sm:$0xff]
    %v1363 = vld [vmem:[#allocation5 + $0x27d0] sm:$0xff]
    %v1364 = vld [vmem:[#allocation5 + $0x27d8] sm:$0xff]
    %v1365 = vld [vmem:[#allocation5 + $0x27e0] sm:$0xff]
    %v1366 = vld [vmem:[#allocation5 + $0x27e8] sm:$0xff]
    %v1367 = vld [vmem:[#allocation5 + $0x27f0] sm:$0xff]
    %v1368 = vld [vmem:[#allocation5 + $0x27f8] sm:$0xff]
    %v1369 = vld [vmem:[#allocation5 + $0x2800] sm:$0xff]
    %v1370 = vld [vmem:[#allocation5 + $0x2808] sm:$0xff]
    %v1371 = vld [vmem:[#allocation5 + $0x2810] sm:$0xff]
    %v1372 = vld [vmem:[#allocation5 + $0x2818] sm:$0xff]
    %v1373 = vld [vmem:[#allocation5 + $0x2820] sm:$0xff]
    %v1374 = vld [vmem:[#allocation5 + $0x2828] sm:$0xff]
    %v1375 = vld [vmem:[#allocation5 + $0x2830] sm:$0xff]
    %v1376 = vld [vmem:[#allocation5 + $0x2838] sm:$0xff]
    %v1377 = vld [vmem:[#allocation5 + $0x2840] sm:$0xff]
    %v1378 = vld [vmem:[#allocation5 + $0x2848] sm:$0xff]
    %v1379 = vld [vmem:[#allocation5 + $0x2850] sm:$0xff]
    %v1380 = vld [vmem:[#allocation5 + $0x2858] sm:$0xff]
    %v1381 = vld [vmem:[#allocation5 + $0x2860] sm:$0xff]
    %v1382 = vld [vmem:[#allocation5 + $0x2868] sm:$0xff]
    %v1383 = vld [vmem:[#allocation5 + $0x2870] sm:$0xff]
    %v1384 = vld [vmem:[#allocation5 + $0x2878] sm:$0xff]
    %v1385 = vld [vmem:[#allocation5 + $0x2880] sm:$0xff]
    %v1386 = vld [vmem:[#allocation5 + $0x2888] sm:$0xff]
    %v1387 = vld [vmem:[#allocation5 + $0x2890] sm:$0xff]
    %v1388 = vld [vmem:[#allocation5 + $0x2898] sm:$0xff]
    %v1389 = vld [vmem:[#allocation5 + $0x28a0] sm:$0xff]
    %v1390 = vld [vmem:[#allocation5 + $0x28a8] sm:$0xff]
    %v1391 = vld [vmem:[#allocation5 + $0x28b0] sm:$0xff]
    %v1392 = vld [vmem:[#allocation5 + $0x28b8] sm:$0xff]
    %v1393 = vld [vmem:[#allocation5 + $0x28c0] sm:$0xff]
    %v1394 = vld [vmem:[#allocation5 + $0x28c8] sm:$0xff]
    %v1395 = vld [vmem:[#allocation5 + $0x28d0] sm:$0xff]
    %v1396 = vld [vmem:[#allocation5 + $0x28d8] sm:$0xff]
    %v1397 = vld [vmem:[#allocation5 + $0x28e0] sm:$0xff]
    %v1398 = vld [vmem:[#allocation5 + $0x28e8] sm:$0xff]
    %v1399 = vld [vmem:[#allocation5 + $0x28f0] sm:$0xff]
    %v1400 = vld [vmem:[#allocation5 + $0x28f8] sm:$0xff]
    %v1401 = vld [vmem:[#allocation5 + $0x2900] sm:$0xff]
    %v1402 = vld [vmem:[#allocation5 + $0x2908] sm:$0xff]
    %v1403 = vld [vmem:[#allocation5 + $0x2910] sm:$0xff]
    %v1404 = vld [vmem:[#allocation5 + $0x2918] sm:$0xff]
    %v1405 = vld [vmem:[#allocation5 + $0x2920] sm:$0xff]
    %v1406 = vld [vmem:[#allocation5 + $0x2928] sm:$0xff]
    %v1407 = vld [vmem:[#allocation5 + $0x2930] sm:$0xff]
    %v1408 = vld [vmem:[#allocation5 + $0x2938] sm:$0xff]
    %v1409 = vld [vmem:[#allocation5 + $0x2940] sm:$0xff]
    %v1410 = vld [vmem:[#allocation5 + $0x2948] sm:$0xff]
    %v1411 = vld [vmem:[#allocation5 + $0x2950] sm:$0xff]
    %v1412 = vld [vmem:[#allocation5 + $0x2958] sm:$0xff]
    %v1413 = vld [vmem:[#allocation5 + $0x2960] sm:$0xff]
    %v1414 = vld [vmem:[#allocation5 + $0x2968] sm:$0xff]
    %v1415 = vld [vmem:[#allocation5 + $0x2970] sm:$0xff]
    %v1416 = vld [vmem:[#allocation5 + $0x2978] sm:$0xff]
    %v1417 = vld [vmem:[#allocation5 + $0x2980] sm:$0xff]
    %v1418 = vld [vmem:[#allocation5 + $0x2988] sm:$0xff]
    %v1419 = vld [vmem:[#allocation5 + $0x2990] sm:$0xff]
    %v1420 = vld [vmem:[#allocation5 + $0x2998] sm:$0xff]
    %v1421 = vld [vmem:[#allocation5 + $0x29a0] sm:$0xff]
    %v1422 = vld [vmem:[#allocation5 + $0x29a8] sm:$0xff]
    %v1423 = vld [vmem:[#allocation5 + $0x29b0] sm:$0xff]
    %v1424 = vld [vmem:[#allocation5 + $0x29b8] sm:$0xff]
    %v1425 = vld [vmem:[#allocation5 + $0x29c0] sm:$0xff]
    %v1426 = vld [vmem:[#allocation5 + $0x29c8] sm:$0xff]
    %v1427 = vld [vmem:[#allocation5 + $0x29d0] sm:$0xff]
    %v1428 = vld [vmem:[#allocation5 + $0x29d8] sm:$0xff]
    %v1429 = vld [vmem:[#allocation5 + $0x29e0] sm:$0xff]
    %v1430 = vld [vmem:[#allocation5 + $0x29e8] sm:$0xff]
    %v1431 = vld [vmem:[#allocation5 + $0x29f0] sm:$0xff]
    %v1432 = vld [vmem:[#allocation5 + $0x29f8] sm:$0xff]
    %v1433 = vld [vmem:[#allocation5 + $0x2a00] sm:$0xff]
    %v1434 = vld [vmem:[#allocation5 + $0x2a08] sm:$0xff]
    %v1435 = vld [vmem:[#allocation5 + $0x2a10] sm:$0xff]
    %v1436 = vld [vmem:[#allocation5 + $0x2a18] sm:$0xff]
    %v1437 = vld [vmem:[#allocation5 + $0x2a20] sm:$0xff]
    %v1438 = vld [vmem:[#allocation5 + $0x2a28] sm:$0xff]
    %v1439 = vld [vmem:[#allocation5 + $0x2a30] sm:$0xff]
    %v1440 = vld [vmem:[#allocation5 + $0x2a38] sm:$0xff]
    %v1441 = vld [vmem:[#allocation5 + $0x2a40] sm:$0xff]
    %v1442 = vld [vmem:[#allocation5 + $0x2a48] sm:$0xff]
    %v1443 = vld [vmem:[#allocation5 + $0x2a50] sm:$0xff]
    %v1444 = vld [vmem:[#allocation5 + $0x2a58] sm:$0xff]
    %v1445 = vld [vmem:[#allocation5 + $0x2a60] sm:$0xff]
    %v1446 = vld [vmem:[#allocation5 + $0x2a68] sm:$0xff]
    %v1447 = vld [vmem:[#allocation5 + $0x2a70] sm:$0xff]
    %v1448 = vld [vmem:[#allocation5 + $0x2a78] sm:$0xff]
    %v1449 = vld [vmem:[#allocation5 + $0x2a80] sm:$0xff]
    %v1450 = vld [vmem:[#allocation5 + $0x2a88] sm:$0xff]
    %v1451 = vld [vmem:[#allocation5 + $0x2a90] sm:$0xff]
    %v1452 = vld [vmem:[#allocation5 + $0x2a98] sm:$0xff]
    %v1453 = vld [vmem:[#allocation5 + $0x2aa0] sm:$0xff]
    %v1454 = vld [vmem:[#allocation5 + $0x2aa8] sm:$0xff]
    %v1455 = vld [vmem:[#allocation5 + $0x2ab0] sm:$0xff]
    %v1456 = vld [vmem:[#allocation5 + $0x2ab8] sm:$0xff]
    %v1457 = vld [vmem:[#allocation5 + $0x2ac0] sm:$0xff]
    %v1458 = vld [vmem:[#allocation5 + $0x2ac8] sm:$0xff]
    %v1459 = vld [vmem:[#allocation5 + $0x2ad0] sm:$0xff]
    %v1460 = vld [vmem:[#allocation5 + $0x2ad8] sm:$0xff]
    %v1461 = vld [vmem:[#allocation5 + $0x2ae0] sm:$0xff]
    %v1462 = vld [vmem:[#allocation5 + $0x2ae8] sm:$0xff]
    %v1463 = vld [vmem:[#allocation5 + $0x2af0] sm:$0xff]
    %v1464 = vld [vmem:[#allocation5 + $0x2af8] sm:$0xff]
    %v1465 = vld [vmem:[#allocation5 + $0x2b00] sm:$0xff]
    %v1466 = vld [vmem:[#allocation5 + $0x2b08] sm:$0xff]
    %v1467 = vld [vmem:[#allocation5 + $0x2b10] sm:$0xff]
    %v1468 = vld [vmem:[#allocation5 + $0x2b18] sm:$0xff]
    %v1469 = vld [vmem:[#allocation5 + $0x2b20] sm:$0xff]
    %v1470 = vld [vmem:[#allocation5 + $0x2b28] sm:$0xff]
    %v1471 = vld [vmem:[#allocation5 + $0x2b30] sm:$0xff]
    %v1472 = vld [vmem:[#allocation5 + $0x2b38] sm:$0xff]
    %v1473 = vld [vmem:[#allocation5 + $0x2b40] sm:$0xff]
    %v1474 = vld [vmem:[#allocation5 + $0x2b48] sm:$0xff]
    %v1475 = vld [vmem:[#allocation5 + $0x2b50] sm:$0xff]
    %v1476 = vld [vmem:[#allocation5 + $0x2b58] sm:$0xff]
    %v1477 = vld [vmem:[#allocation5 + $0x2b60] sm:$0xff]
    %v1478 = vld [vmem:[#allocation5 + $0x2b68] sm:$0xff]
    %v1479 = vld [vmem:[#allocation5 + $0x2b70] sm:$0xff]
    %v1480 = vld [vmem:[#allocation5 + $0x2b78] sm:$0xff]
    %v1481 = vld [vmem:[#allocation5 + $0x2b80] sm:$0xff]
    %v1482 = vld [vmem:[#allocation5 + $0x2b88] sm:$0xff]
    %v1483 = vld [vmem:[#allocation5 + $0x2b90] sm:$0xff]
    %v1484 = vld [vmem:[#allocation5 + $0x2b98] sm:$0xff]
    %v1485 = vld [vmem:[#allocation5 + $0x2ba0] sm:$0xff]
    %v1486 = vld [vmem:[#allocation5 + $0x2ba8] sm:$0xff]
    %v1487 = vld [vmem:[#allocation5 + $0x2bb0] sm:$0xff]
    %v1488 = vld [vmem:[#allocation5 + $0x2bb8] sm:$0xff]
    %v1489 = vld [vmem:[#allocation5 + $0x2bc0] sm:$0xff]
    %v1490 = vld [vmem:[#allocation5 + $0x2bc8] sm:$0xff]
    %v1491 = vld [vmem:[#allocation5 + $0x2bd0] sm:$0xff]
    %v1492 = vld [vmem:[#allocation5 + $0x2bd8] sm:$0xff]
    %v1493 = vld [vmem:[#allocation5 + $0x2be0] sm:$0xff]
    %v1494 = vld [vmem:[#allocation5 + $0x2be8] sm:$0xff]
    %v1495 = vld [vmem:[#allocation5 + $0x2bf0] sm:$0xff]
    %v1496 = vld [vmem:[#allocation5 + $0x2bf8] sm:$0xff]
    %v1497 = vld [vmem:[#allocation5 + $0x2c00] sm:$0xff]
    %v1498 = vld [vmem:[#allocation5 + $0x2c08] sm:$0xff]
    %v1499 = vld [vmem:[#allocation5 + $0x2c10] sm:$0xff]
    %v1500 = vld [vmem:[#allocation5 + $0x2c18] sm:$0xff]
    %v1501 = vld [vmem:[#allocation5 + $0x2c20] sm:$0xff]
    %v1502 = vld [vmem:[#allocation5 + $0x2c28] sm:$0xff]
    %v1503 = vld [vmem:[#allocation5 + $0x2c30] sm:$0xff]
    %v1504 = vld [vmem:[#allocation5 + $0x2c38] sm:$0xff]
    %v1505 = vld [vmem:[#allocation5 + $0x2c40] sm:$0xff]
    %v1506 = vld [vmem:[#allocation5 + $0x2c48] sm:$0xff]
    %v1507 = vld [vmem:[#allocation5 + $0x2c50] sm:$0xff]
    %v1508 = vld [vmem:[#allocation5 + $0x2c58] sm:$0xff]
    %v1509 = vld [vmem:[#allocation5 + $0x2c60] sm:$0xff]
    %v1510 = vld [vmem:[#allocation5 + $0x2c68] sm:$0xff]
    %v1511 = vld [vmem:[#allocation5 + $0x2c70] sm:$0xff]
    %v1512 = vld [vmem:[#allocation5 + $0x2c78] sm:$0xff]
    %v1513 = vld [vmem:[#allocation5 + $0x2c80] sm:$0xff]
    %v1514 = vld [vmem:[#allocation5 + $0x2c88] sm:$0xff]
    %v1515 = vld [vmem:[#allocation5 + $0x2c90] sm:$0xff]
    %v1516 = vld [vmem:[#allocation5 + $0x2c98] sm:$0xff]
    %v1517 = vld [vmem:[#allocation5 + $0x2ca0] sm:$0xff]
    %v1518 = vld [vmem:[#allocation5 + $0x2ca8] sm:$0xff]
    %v1519 = vld [vmem:[#allocation5 + $0x2cb0] sm:$0xff]
    %v1520 = vld [vmem:[#allocation5 + $0x2cb8] sm:$0xff]
    %v1521 = vld [vmem:[#allocation5 + $0x2cc0] sm:$0xff]
    %v1522 = vld [vmem:[#allocation5 + $0x2cc8] sm:$0xff]
    %v1523 = vld [vmem:[#allocation5 + $0x2cd0] sm:$0xff]
    %v1524 = vld [vmem:[#allocation5 + $0x2cd8] sm:$0xff]
    %v1525 = vld [vmem:[#allocation5 + $0x2ce0] sm:$0xff]
    %v1526 = vld [vmem:[#allocation5 + $0x2ce8] sm:$0xff]
    %v1527 = vld [vmem:[#allocation5 + $0x2cf0] sm:$0xff]
    %v1528 = vld [vmem:[#allocation5 + $0x2cf8] sm:$0xff]
    %v1529 = vld [vmem:[#allocation5 + $0x2d00] sm:$0xff]
    %v1530 = vld [vmem:[#allocation5 + $0x2d08] sm:$0xff]
    %v1531 = vld [vmem:[#allocation5 + $0x2d10] sm:$0xff]
    %v1532 = vld [vmem:[#allocation5 + $0x2d18] sm:$0xff]
    %v1533 = vld [vmem:[#allocation5 + $0x2d20] sm:$0xff]
    %v1534 = vld [vmem:[#allocation5 + $0x2d28] sm:$0xff]
    %v1535 = vld [vmem:[#allocation5 + $0x2d30] sm:$0xff]
    %v1536 = vld [vmem:[#allocation5 + $0x2d38] sm:$0xff]
    %v1537 = vld [vmem:[#allocation5 + $0x2d40] sm:$0xff]
    %v1538 = vld [vmem:[#allocation5 + $0x2d48] sm:$0xff]
    %v1539 = vld [vmem:[#allocation5 + $0x2d50] sm:$0xff]
    %v1540 = vld [vmem:[#allocation5 + $0x2d58] sm:$0xff]
    %v1541 = vld [vmem:[#allocation5 + $0x2d60] sm:$0xff]
    %v1542 = vld [vmem:[#allocation5 + $0x2d68] sm:$0xff]
    %v1543 = vld [vmem:[#allocation5 + $0x2d70] sm:$0xff]
    %v1544 = vld [vmem:[#allocation5 + $0x2d78] sm:$0xff]
    %v1545 = vld [vmem:[#allocation5 + $0x2d80] sm:$0xff]
    %v1546 = vld [vmem:[#allocation5 + $0x2d88] sm:$0xff]
    %v1547 = vld [vmem:[#allocation5 + $0x2d90] sm:$0xff]
    %v1548 = vld [vmem:[#allocation5 + $0x2d98] sm:$0xff]
    %v1549 = vld [vmem:[#allocation5 + $0x2da0] sm:$0xff]
    %v1550 = vld [vmem:[#allocation5 + $0x2da8] sm:$0xff]
    %v1551 = vld [vmem:[#allocation5 + $0x2db0] sm:$0xff]
    %v1552 = vld [vmem:[#allocation5 + $0x2db8] sm:$0xff]
    %v1553 = vld [vmem:[#allocation5 + $0x2dc0] sm:$0xff]
    %v1554 = vld [vmem:[#allocation5 + $0x2dc8] sm:$0xff]
    %v1555 = vld [vmem:[#allocation5 + $0x2dd0] sm:$0xff]
    %v1556 = vld [vmem:[#allocation5 + $0x2dd8] sm:$0xff]
    %v1557 = vld [vmem:[#allocation5 + $0x2de0] sm:$0xff]
    %v1558 = vld [vmem:[#allocation5 + $0x2de8] sm:$0xff]
    %v1559 = vld [vmem:[#allocation5 + $0x2df0] sm:$0xff]
    %v1560 = vld [vmem:[#allocation5 + $0x2df8] sm:$0xff]
    %v1561 = vld [vmem:[#allocation5 + $0x2e00] sm:$0xff]
    %v1562 = vld [vmem:[#allocation5 + $0x2e08] sm:$0xff]
    %v1563 = vld [vmem:[#allocation5 + $0x2e10] sm:$0xff]
    %v1564 = vld [vmem:[#allocation5 + $0x2e18] sm:$0xff]
    %v1565 = vld [vmem:[#allocation5 + $0x2e20] sm:$0xff]
    %v1566 = vld [vmem:[#allocation5 + $0x2e28] sm:$0xff]
    %v1567 = vld [vmem:[#allocation5 + $0x2e30] sm:$0xff]
    %v1568 = vld [vmem:[#allocation5 + $0x2e38] sm:$0xff]
    %v1569 = vld [vmem:[#allocation5 + $0x2e40] sm:$0xff]
    %v1570 = vld [vmem:[#allocation5 + $0x2e48] sm:$0xff]
    %v1571 = vld [vmem:[#allocation5 + $0x2e50] sm:$0xff]
    %v1572 = vld [vmem:[#allocation5 + $0x2e58] sm:$0xff]
    %v1573 = vld [vmem:[#allocation5 + $0x2e60] sm:$0xff]
    %v1574 = vld [vmem:[#allocation5 + $0x2e68] sm:$0xff]
    %v1575 = vld [vmem:[#allocation5 + $0x2e70] sm:$0xff]
    %v1576 = vld [vmem:[#allocation5 + $0x2e78] sm:$0xff]
    %v1577 = vld [vmem:[#allocation5 + $0x2e80] sm:$0xff]
    %v1578 = vld [vmem:[#allocation5 + $0x2e88] sm:$0xff]
    %v1579 = vld [vmem:[#allocation5 + $0x2e90] sm:$0xff]
    %v1580 = vld [vmem:[#allocation5 + $0x2e98] sm:$0xff]
    %v1581 = vld [vmem:[#allocation5 + $0x2ea0] sm:$0xff]
    %v1582 = vld [vmem:[#allocation5 + $0x2ea8] sm:$0xff]
    %v1583 = vld [vmem:[#allocation5 + $0x2eb0] sm:$0xff]
    %v1584 = vld [vmem:[#allocation5 + $0x2eb8] sm:$0xff]
    %v1585 = vld [vmem:[#allocation5 + $0x2ec0] sm:$0xff]
    %v1586 = vld [vmem:[#allocation5 + $0x2ec8] sm:$0xff]
    %v1587 = vld [vmem:[#allocation5 + $0x2ed0] sm:$0xff]
    %v1588 = vld [vmem:[#allocation5 + $0x2ed8] sm:$0xff]
    %v1589 = vld [vmem:[#allocation5 + $0x2ee0] sm:$0xff]
    %v1590 = vld [vmem:[#allocation5 + $0x2ee8] sm:$0xff]
    %v1591 = vld [vmem:[#allocation5 + $0x2ef0] sm:$0xff]
    %v1592 = vld [vmem:[#allocation5 + $0x2ef8] sm:$0xff]
    %v1593 = vld [vmem:[#allocation5 + $0x2f00] sm:$0xff]
    %v1594 = vld [vmem:[#allocation5 + $0x2f08] sm:$0xff]
    %v1595 = vld [vmem:[#allocation5 + $0x2f10] sm:$0xff]
    %v1596 = vld [vmem:[#allocation5 + $0x2f18] sm:$0xff]
    %v1597 = vld [vmem:[#allocation5 + $0x2f20] sm:$0xff]
    %v1598 = vld [vmem:[#allocation5 + $0x2f28] sm:$0xff]
    %v1599 = vld [vmem:[#allocation5 + $0x2f30] sm:$0xff]
    %v1600 = vld [vmem:[#allocation5 + $0x2f38] sm:$0xff]
    %v1601 = vld [vmem:[#allocation5 + $0x2f40] sm:$0xff]
    %v1602 = vld [vmem:[#allocation5 + $0x2f48] sm:$0xff]
    %v1603 = vld [vmem:[#allocation5 + $0x2f50] sm:$0xff]
    %v1604 = vld [vmem:[#allocation5 + $0x2f58] sm:$0xff]
    %v1605 = vld [vmem:[#allocation5 + $0x2f60] sm:$0xff]
    %v1606 = vld [vmem:[#allocation5 + $0x2f68] sm:$0xff]
    %v1607 = vld [vmem:[#allocation5 + $0x2f70] sm:$0xff]
    %v1608 = vld [vmem:[#allocation5 + $0x2f78] sm:$0xff]
    %v1609 = vld [vmem:[#allocation5 + $0x2f80] sm:$0xff]
    %v1610 = vld [vmem:[#allocation5 + $0x2f88] sm:$0xff]
    %v1611 = vld [vmem:[#allocation5 + $0x2f90] sm:$0xff]
    %v1612 = vld [vmem:[#allocation5 + $0x2f98] sm:$0xff]
    %v1613 = vld [vmem:[#allocation5 + $0x2fa0] sm:$0xff]
    %v1614 = vld [vmem:[#allocation5 + $0x2fa8] sm:$0xff]
    %v1615 = vld [vmem:[#allocation5 + $0x2fb0] sm:$0xff]
    %v1616 = vld [vmem:[#allocation5 + $0x2fb8] sm:$0xff]
    %v1617 = vld [vmem:[#allocation5 + $0x2fc0] sm:$0xff]
    %v1618 = vld [vmem:[#allocation5 + $0x2fc8] sm:$0xff]
    %v1619 = vld [vmem:[#allocation5 + $0x2fd0] sm:$0xff]
    %v1620 = vld [vmem:[#allocation5 + $0x2fd8] sm:$0xff]
    %v1621 = vld [vmem:[#allocation5 + $0x2fe0] sm:$0xff]
    %v1622 = vld [vmem:[#allocation5 + $0x2fe8] sm:$0xff]
    %v1623 = vld [vmem:[#allocation5 + $0x2ff0] sm:$0xff]
    %v1624 = vld [vmem:[#allocation5 + $0x2ff8] sm:$0xff]
    %v1625 = vld [vmem:[#allocation7] sm:$0xf]
    %v1627 = vlaneseq
    %v1628 = vshrl.u32 %v1627, 7
    %v1629 = vsub.s32 0, %v1628
    %v1630 = vrot.slane %v1625, %v1629
    %v1631 = vlaneseq
    %v1632 = vshrl.u32 %v1631, 7
    %v1633 = vsub.s32 1, %v1632
    %v1634 = vrot.slane %v1625, %v1633
    %v1635 = vlaneseq
    %v1636 = vshrl.u32 %v1635, 7
    %v1637 = vsub.s32 2, %v1636
    %v1638 = vrot.slane %v1625, %v1637
    %v1639 = vlaneseq
    %v1640 = vshrl.u32 %v1639, 7
    %v1641 = vsub.s32 3, %v1640
    %v1642 = vrot.slane %v1625, %v1641
    %v1653 = vcombine.high %v83, %v83
    %v1655 = vunpack.c.l.s4 1983009808
    %v1656 = vunpack.c.0.s8 %v1655
    %v1657 = vlaneseq
    %v1658 = vshrl.u32 %v1657, 7
    %v1659 = vsub.s32 %v1656, %v1658
    %v1660 = vrot.slane %v83, %v1659
    %v1662 = vunpack.c.l.s4 1983009808
    %v1663 = vunpack.c.0.s8 %v1662
    %v1664 = vlaneseq
    %v1665 = vshrl.u32 %v1664, 7
    %v1666 = vsub.s32 %v1663, %v1665
    %v1667 = vrot.slane %v1653, %v1666
    %v1668 = vcombine.high %v1660, %v1660
    %v1669 = vcombine.high %v1667, %v1667
    %v1670 = vcombine.high %v84, %v84
    %v1672 = vunpack.c.l.s4 1983009808
    %v1673 = vunpack.c.0.s8 %v1672
    %v1674 = vlaneseq
    %v1675 = vshrl.u32 %v1674, 7
    %v1676 = vsub.s32 %v1673, %v1675
    %v1677 = vrot.slane %v84, %v1676
    %v1679 = vunpack.c.l.s4 1983009808
    %v1680 = vunpack.c.0.s8 %v1679
    %v1681 = vlaneseq
    %v1682 = vshrl.u32 %v1681, 7
    %v1683 = vsub.s32 %v1680, %v1682
    %v1684 = vrot.slane %v1670, %v1683
    %v1685 = vcombine.high %v1677, %v1677
    %v1686 = vcombine.high %v1684, %v1684
    %v1687 = vcombine.high %v85, %v85
    %v1689 = vunpack.c.l.s4 1983009808
    %v1690 = vunpack.c.0.s8 %v1689
    %v1691 = vlaneseq
    %v1692 = vshrl.u32 %v1691, 7
    %v1693 = vsub.s32 %v1690, %v1692
    %v1694 = vrot.slane %v85, %v1693
    %v1696 = vunpack.c.l.s4 1983009808
    %v1697 = vunpack.c.0.s8 %v1696
    %v1698 = vlaneseq
    %v1699 = vshrl.u32 %v1698, 7
    %v1700 = vsub.s32 %v1697, %v1699
    %v1701 = vrot.slane %v1687, %v1700
    %v1702 = vcombine.high %v1694, %v1694
    %v1703 = vcombine.high %v1701, %v1701
    %v1704 = vcombine.high %v86, %v86
    %v1706 = vunpack.c.l.s4 1983009808
    %v1707 = vunpack.c.0.s8 %v1706
    %v1708 = vlaneseq
    %v1709 = vshrl.u32 %v1708, 7
    %v1710 = vsub.s32 %v1707, %v1709
    %v1711 = vrot.slane %v86, %v1710
    %v1713 = vunpack.c.l.s4 1983009808
    %v1714 = vunpack.c.0.s8 %v1713
    %v1715 = vlaneseq
    %v1716 = vshrl.u32 %v1715, 7
    %v1717 = vsub.s32 %v1714, %v1716
    %v1718 = vrot.slane %v1704, %v1717
    %v1719 = vcombine.high %v1711, %v1711
    %v1720 = vcombine.high %v1718, %v1718
    %v1721 = vcombine.high %v87, %v87
    %v1723 = vunpack.c.l.s4 1983009808
    %v1724 = vunpack.c.0.s8 %v1723
    %v1725 = vlaneseq
    %v1726 = vshrl.u32 %v1725, 7
    %v1727 = vsub.s32 %v1724, %v1726
    %v1728 = vrot.slane %v87, %v1727
    %v1730 = vunpack.c.l.s4 1983009808
    %v1731 = vunpack.c.0.s8 %v1730
    %v1732 = vlaneseq
    %v1733 = vshrl.u32 %v1732, 7
    %v1734 = vsub.s32 %v1731, %v1733
    %v1735 = vrot.slane %v1721, %v1734
    %v1736 = vcombine.high %v1728, %v1728
    %v1737 = vcombine.high %v1735, %v1735
    %v1738 = vcombine.high %v88, %v88
    %v1740 = vunpack.c.l.s4 1983009808
    %v1741 = vunpack.c.0.s8 %v1740
    %v1742 = vlaneseq
    %v1743 = vshrl.u32 %v1742, 7
    %v1744 = vsub.s32 %v1741, %v1743
    %v1745 = vrot.slane %v88, %v1744
    %v1747 = vunpack.c.l.s4 1983009808
    %v1748 = vunpack.c.0.s8 %v1747
    %v1749 = vlaneseq
    %v1750 = vshrl.u32 %v1749, 7
    %v1751 = vsub.s32 %v1748, %v1750
    %v1752 = vrot.slane %v1738, %v1751
    %v1753 = vcombine.high %v1745, %v1745
    %v1754 = vcombine.high %v1752, %v1752
    %1779 = vmatprep.subr.mxu0 %v90
    %1780 = vmatpush1.msra.mxu0 %v89
    %1781 = vmatprep.subr.mxu0 %v94
    %1782 = vmatpush1.msra.mxu0 %v93
    %1783 = vmatprep.subr.mxu0 %v98
    %1784 = vmatpush1.msra.mxu0 %v97
    %1785 = vmatprep.subr.mxu0 %v102
    %1786 = vmatpush1.msra.mxu0 %v101
    %1787 = vmatprep.subr.mxu0 %v106
    %1788 = vmatpush1.msra.mxu0 %v105
    %1789 = vmatprep.subr.mxu0 %v110
    %1790 = vmatpush1.msra.mxu0 %v109
    %1791 = vmatprep.subr.mxu0 %v114
    %1792 = vmatpush1.msra.mxu0 %v113
    %1793 = vmatprep.subr.mxu0 %v118
    %1794 = vmatpush1.msra.mxu0 %v117
    %1795 = vmatprep.subr.mxu0 %v122
    %1796 = vmatpush1.msra.mxu0 %v121
    %1797 = vmatprep.subr.mxu0 %v126
    %1798 = vmatpush1.msra.mxu0 %v125
    %1799 = vmatprep.subr.mxu0 %v130
    %1800 = vmatpush1.msra.mxu0 %v129
    %1801 = vmatprep.subr.mxu0 %v134
    %1802 = vmatpush1.msra.mxu0 %v133
    %1803 = vmatprep.subr.mxu0 %v138
    %1804 = vmatpush1.msra.mxu0 %v137
    %1805 = vmatprep.subr.mxu0 %v142
    %1806 = vmatpush1.msra.mxu0 %v141
    %1807 = vmatprep.subr.mxu0 %v146
    %1808 = vmatpush1.msra.mxu0 %v145
    %1809 = vmatprep.subr.mxu0 %v150
    %1810 = vmatpush1.msra.mxu0 %v149
    %1811 = vmatprep.subr.mxu0 %v154
    %1812 = vmatpush1.msra.mxu0 %v153
    %1813 = vmatprep.subr.mxu0 %v158
    %1814 = vmatpush1.msra.mxu0 %v157
    %1815 = vmatprep.subr.mxu0 %v162
    %1816 = vmatpush1.msra.mxu0 %v161
    %1817 = vmatprep.subr.mxu0 %v166
    %1818 = vmatpush1.msra.mxu0 %v165
    %1819 = vmatprep.subr.mxu0 %v170
    %1820 = vmatpush1.msra.mxu0 %v169
    %1821 = vmatprep.subr.mxu0 %v174
    %1822 = vmatpush1.msra.mxu0 %v173
    %1823 = vmatprep.subr.mxu0 %v178
    %1824 = vmatpush1.msra.mxu0 %v177
    %1825 = vmatprep.subr.mxu0 %v182
    %1826 = vmatpush1.msra.mxu0 %v181
    %1827 = vmatprep.subr.mxu0 %v186
    %1828 = vmatpush1.msra.mxu0 %v185
    %1829 = vmatprep.subr.mxu0 %v190
    %1830 = vmatpush1.msra.mxu0 %v189
    %1831 = vmatprep.subr.mxu0 %v194
    %1832 = vmatpush1.msra.mxu0 %v193
    %1833 = vmatprep.subr.mxu0 %v198
    %1834 = vmatpush1.msra.mxu0 %v197
    %1835 = vmatprep.subr.mxu0 %v202
    %1836 = vmatpush1.msra.mxu0 %v201
    %1837 = vmatprep.subr.mxu0 %v206
    %1838 = vmatpush1.msra.mxu0 %v205
    %1839 = vmatprep.subr.mxu0 %v210
    %1840 = vmatpush1.msra.mxu0 %v209
    %1841 = vmatprep.subr.mxu0 %v214
    %1842 = vmatpush1.msra.mxu0 %v213
    %1843 = vmatprep.mubr.f32.mxu0 %v1668
    %1844 = vmatmul.mubr.f32.gmra.mrb[0].mxu0 %v1660
    %v1845 = vpop.f32.mrb[0].mxu0
    %v1846 = vadd.f32 %v1630, %v1845
    %v1847 = vpop.f32.mrb[0].mxu0
    %v1848 = vadd.f32 %v1634, %v1847
    %1849 = vdwg.mxu0
    %1850 = vmatprep.subr.mxu0 %v218
    %1851 = vmatpush1.msra.mxu0 %v217
    %1852 = vmatprep.subr.mxu0 %v222
    %1853 = vmatpush1.msra.mxu0 %v221
    %1854 = vmatprep.subr.mxu0 %v226
    %1855 = vmatpush1.msra.mxu0 %v225
    %1856 = vmatprep.subr.mxu0 %v230
    %1857 = vmatpush1.msra.mxu0 %v229
    %1858 = vmatprep.subr.mxu0 %v234
    %1859 = vmatpush1.msra.mxu0 %v233
    %1860 = vmatprep.subr.mxu0 %v238
    %1861 = vmatpush1.msra.mxu0 %v237
    %1862 = vmatprep.subr.mxu0 %v242
    %1863 = vmatpush1.msra.mxu0 %v241
    %1864 = vmatprep.subr.mxu0 %v246
    %1865 = vmatpush1.msra.mxu0 %v245
    %1866 = vmatprep.subr.mxu0 %v250
    %1867 = vmatpush1.msra.mxu0 %v249
    %1868 = vmatprep.subr.mxu0 %v254
    %1869 = vmatpush1.msra.mxu0 %v253
    %1870 = vmatprep.subr.mxu0 %v258
    %1871 = vmatpush1.msra.mxu0 %v257
    %1872 = vmatprep.subr.mxu0 %v262
    %1873 = vmatpush1.msra.mxu0 %v261
    %1874 = vmatprep.subr.mxu0 %v266
    %1875 = vmatpush1.msra.mxu0 %v265
    %1876 = vmatprep.subr.mxu0 %v270
    %1877 = vmatpush1.msra.mxu0 %v269
    %1878 = vmatprep.subr.mxu0 %v274
    %1879 = vmatpush1.msra.mxu0 %v273
    %1880 = vmatprep.subr.mxu0 %v278
    %1881 = vmatpush1.msra.mxu0 %v277
    %1882 = vmatprep.subr.mxu0 %v282
    %1883 = vmatpush1.msra.mxu0 %v281
    %1884 = vmatprep.subr.mxu0 %v286
    %1885 = vmatpush1.msra.mxu0 %v285
    %1886 = vmatprep.subr.mxu0 %v290
    %1887 = vmatpush1.msra.mxu0 %v289
    %1888 = vmatprep.subr.mxu0 %v294
    %1889 = vmatpush1.msra.mxu0 %v293
    %1890 = vmatprep.subr.mxu0 %v298
    %1891 = vmatpush1.msra.mxu0 %v297
    %1892 = vmatprep.subr.mxu0 %v302
    %1893 = vmatpush1.msra.mxu0 %v301
    %1894 = vmatprep.subr.mxu0 %v306
    %1895 = vmatpush1.msra.mxu0 %v305
    %1896 = vmatprep.subr.mxu0 %v310
    %1897 = vmatpush1.msra.mxu0 %v309
    %1898 = vmatprep.subr.mxu0 %v314
    %1899 = vmatpush1.msra.mxu0 %v313
    %1900 = vmatprep.subr.mxu0 %v318
    %1901 = vmatpush1.msra.mxu0 %v317
    %1902 = vmatprep.subr.mxu0 %v322
    %1903 = vmatpush1.msra.mxu0 %v321
    %1904 = vmatprep.subr.mxu0 %v326
    %1905 = vmatpush1.msra.mxu0 %v325
    %1906 = vmatprep.subr.mxu0 %v330
    %1907 = vmatpush1.msra.mxu0 %v329
    %1908 = vmatprep.subr.mxu0 %v334
    %1909 = vmatpush1.msra.mxu0 %v333
    %1910 = vmatprep.subr.mxu0 %v338
    %1911 = vmatpush1.msra.mxu0 %v337
    %1912 = vmatprep.subr.mxu0 %v342
    %1913 = vmatpush1.msra.mxu0 %v341
    %1914 = vmatprep.mubr.f32.mxu0 %v1669
    %1915 = vmatmul.mubr.f32.gmra.mrb[0].mxu0 %v1667
    %v1916 = vpop.f32.mrb[0].mxu0
    %v1917 = vadd.f32 %v1846, %v1916
    %v1918 = vpop.f32.mrb[0].mxu0
    %v1919 = vadd.f32 %v1848, %v1918
    %1920 = vdwg.mxu0
    %1921 = vmatprep.subr.mxu0 %v346
    %1922 = vmatpush1.msra.mxu0 %v345
    %1923 = vmatprep.subr.mxu0 %v350
    %1924 = vmatpush1.msra.mxu0 %v349
    %1925 = vmatprep.subr.mxu0 %v354
    %1926 = vmatpush1.msra.mxu0 %v353
    %1927 = vmatprep.subr.mxu0 %v358
    %1928 = vmatpush1.msra.mxu0 %v357
    %1929 = vmatprep.subr.mxu0 %v362
    %1930 = vmatpush1.msra.mxu0 %v361
    %1931 = vmatprep.subr.mxu0 %v366
    %1932 = vmatpush1.msra.mxu0 %v365
    %1933 = vmatprep.subr.mxu0 %v370
    %1934 = vmatpush1.msra.mxu0 %v369
    %1935 = vmatprep.subr.mxu0 %v374
    %1936 = vmatpush1.msra.mxu0 %v373
    %1937 = vmatprep.subr.mxu0 %v378
    %1938 = vmatpush1.msra.mxu0 %v377
    %1939 = vmatprep.subr.mxu0 %v382
    %1940 = vmatpush1.msra.mxu0 %v381
    %1941 = vmatprep.subr.mxu0 %v386
    %1942 = vmatpush1.msra.mxu0 %v385
    %1943 = vmatprep.subr.mxu0 %v390
    %1944 = vmatpush1.msra.mxu0 %v389
    %1945 = vmatprep.subr.mxu0 %v394
    %1946 = vmatpush1.msra.mxu0 %v393
    %1947 = vmatprep.subr.mxu0 %v398
    %1948 = vmatpush1.msra.mxu0 %v397
    %1949 = vmatprep.subr.mxu0 %v402
    %1950 = vmatpush1.msra.mxu0 %v401
    %1951 = vmatprep.subr.mxu0 %v406
    %1952 = vmatpush1.msra.mxu0 %v405
    %1953 = vmatprep.subr.mxu0 %v410
    %1954 = vmatpush1.msra.mxu0 %v409
    %1955 = vmatprep.subr.mxu0 %v414
    %1956 = vmatpush1.msra.mxu0 %v413
    %1957 = vmatprep.subr.mxu0 %v418
    %1958 = vmatpush1.msra.mxu0 %v417
    %1959 = vmatprep.subr.mxu0 %v422
    %1960 = vmatpush1.msra.mxu0 %v421
    %1961 = vmatprep.subr.mxu0 %v426
    %1962 = vmatpush1.msra.mxu0 %v425
    %1963 = vmatprep.subr.mxu0 %v430
    %1964 = vmatpush1.msra.mxu0 %v429
    %1965 = vmatprep.subr.mxu0 %v434
    %1966 = vmatpush1.msra.mxu0 %v433
    %1967 = vmatprep.subr.mxu0 %v438
    %1968 = vmatpush1.msra.mxu0 %v437
    %1969 = vmatprep.subr.mxu0 %v442
    %1970 = vmatpush1.msra.mxu0 %v441
    %1971 = vmatprep.subr.mxu0 %v446
    %1972 = vmatpush1.msra.mxu0 %v445
    %1973 = vmatprep.subr.mxu0 %v450
    %1974 = vmatpush1.msra.mxu0 %v449
    %1975 = vmatprep.subr.mxu0 %v454
    %1976 = vmatpush1.msra.mxu0 %v453
    %1977 = vmatprep.subr.mxu0 %v458
    %1978 = vmatpush1.msra.mxu0 %v457
    %1979 = vmatprep.subr.mxu0 %v462
    %1980 = vmatpush1.msra.mxu0 %v461
    %1981 = vmatprep.subr.mxu0 %v466
    %1982 = vmatpush1.msra.mxu0 %v465
    %1983 = vmatprep.subr.mxu0 %v470
    %1984 = vmatpush1.msra.mxu0 %v469
    %1985 = vmatprep.mubr.f32.mxu0 %v1685
    %1986 = vmatmul.mubr.f32.gmra.mrb[0].mxu0 %v1677
    %v1987 = vpop.f32.mrb[0].mxu0
    %v1988 = vadd.f32 %v1917, %v1987
    %v1989 = vpop.f32.mrb[0].mxu0
    %v1990 = vadd.f32 %v1919, %v1989
    %1991 = vdwg.mxu0
    %1992 = vmatprep.subr.mxu0 %v474
    %1993 = vmatpush1.msra.mxu0 %v473
    %1994 = vmatprep.subr.mxu0 %v478
    %1995 = vmatpush1.msra.mxu0 %v477
    %1996 = vmatprep.subr.mxu0 %v482
    %1997 = vmatpush1.msra.mxu0 %v481
    %1998 = vmatprep.subr.mxu0 %v486
    %1999 = vmatpush1.msra.mxu0 %v485
    %2000 = vmatprep.subr.mxu0 %v490
    %2001 = vmatpush1.msra.mxu0 %v489
    %2002 = vmatprep.subr.mxu0 %v494
    %2003 = vmatpush1.msra.mxu0 %v493
    %2004 = vmatprep.subr.mxu0 %v498
    %2005 = vmatpush1.msra.mxu0 %v497
    %2006 = vmatprep.subr.mxu0 %v502
    %2007 = vmatpush1.msra.mxu0 %v501
    %2008 = vmatprep.subr.mxu0 %v506
    %2009 = vmatpush1.msra.mxu0 %v505
    %2010 = vmatprep.subr.mxu0 %v510
    %2011 = vmatpush1.msra.mxu0 %v509
    %2012 = vmatprep.subr.mxu0 %v514
    %2013 = vmatpush1.msra.mxu0 %v513
    %2014 = vmatprep.subr.mxu0 %v518
    %2015 = vmatpush1.msra.mxu0 %v517
    %2016 = vmatprep.subr.mxu0 %v522
    %2017 = vmatpush1.msra.mxu0 %v521
    %2018 = vmatprep.subr.mxu0 %v526
    %2019 = vmatpush1.msra.mxu0 %v525
    %2020 = vmatprep.subr.mxu0 %v530
    %2021 = vmatpush1.msra.mxu0 %v529
    %2022 = vmatprep.subr.mxu0 %v534
    %2023 = vmatpush1.msra.mxu0 %v533
    %2024 = vmatprep.subr.mxu0 %v538
    %2025 = vmatpush1.msra.mxu0 %v537
    %2026 = vmatprep.subr.mxu0 %v542
    %2027 = vmatpush1.msra.mxu0 %v541
    %2028 = vmatprep.subr.mxu0 %v546
    %2029 = vmatpush1.msra.mxu0 %v545
    %2030 = vmatprep.subr.mxu0 %v550
    %2031 = vmatpush1.msra.mxu0 %v549
    %2032 = vmatprep.subr.mxu0 %v554
    %2033 = vmatpush1.msra.mxu0 %v553
    %2034 = vmatprep.subr.mxu0 %v558
    %2035 = vmatpush1.msra.mxu0 %v557
    %2036 = vmatprep.subr.mxu0 %v562
    %2037 = vmatpush1.msra.mxu0 %v561
    %2038 = vmatprep.subr.mxu0 %v566
    %2039 = vmatpush1.msra.mxu0 %v565
    %2040 = vmatprep.subr.mxu0 %v570
    %2041 = vmatpush1.msra.mxu0 %v569
    %2042 = vmatprep.subr.mxu0 %v574
    %2043 = vmatpush1.msra.mxu0 %v573
    %2044 = vmatprep.subr.mxu0 %v578
    %2045 = vmatpush1.msra.mxu0 %v577
    %2046 = vmatprep.subr.mxu0 %v582
    %2047 = vmatpush1.msra.mxu0 %v581
    %2048 = vmatprep.subr.mxu0 %v586
    %2049 = vmatpush1.msra.mxu0 %v585
    %2050 = vmatprep.subr.mxu0 %v590
    %2051 = vmatpush1.msra.mxu0 %v589
    %2052 = vmatprep.subr.mxu0 %v594
    %2053 = vmatpush1.msra.mxu0 %v593
    %2054 = vmatprep.subr.mxu0 %v598
    %2055 = vmatpush1.msra.mxu0 %v597
    %2056 = vmatprep.mubr.f32.mxu0 %v1686
    %2057 = vmatmul.mubr.f32.gmra.mrb[0].mxu0 %v1684
    %v2058 = vpop.f32.mrb[0].mxu0
    %v2059 = vadd.f32 %v1988, %v2058
    %v2060 = vpop.f32.mrb[0].mxu0
    %v2061 = vadd.f32 %v1990, %v2060
    %2062 = vdwg.mxu0
    %2063 = vmatprep.subr.mxu0 %v602
    %2064 = vmatpush1.msra.mxu0 %v601
    %2065 = vmatprep.subr.mxu0 %v606
    %2066 = vmatpush1.msra.mxu0 %v605
    %2067 = vmatprep.subr.mxu0 %v610
    %2068 = vmatpush1.msra.mxu0 %v609
    %2069 = vmatprep.subr.mxu0 %v614
    %2070 = vmatpush1.msra.mxu0 %v613
    %2071 = vmatprep.subr.mxu0 %v618
    %2072 = vmatpush1.msra.mxu0 %v617
    %2073 = vmatprep.subr.mxu0 %v622
    %2074 = vmatpush1.msra.mxu0 %v621
    %2075 = vmatprep.subr.mxu0 %v626
    %2076 = vmatpush1.msra.mxu0 %v625
    %2077 = vmatprep.subr.mxu0 %v630
    %2078 = vmatpush1.msra.mxu0 %v629
    %2079 = vmatprep.subr.mxu0 %v634
    %2080 = vmatpush1.msra.mxu0 %v633
    %2081 = vmatprep.subr.mxu0 %v638
    %2082 = vmatpush1.msra.mxu0 %v637
    %2083 = vmatprep.subr.mxu0 %v642
    %2084 = vmatpush1.msra.mxu0 %v641
    %2085 = vmatprep.subr.mxu0 %v646
    %2086 = vmatpush1.msra.mxu0 %v645
    %2087 = vmatprep.subr.mxu0 %v650
    %2088 = vmatpush1.msra.mxu0 %v649
    %2089 = vmatprep.subr.mxu0 %v654
    %2090 = vmatpush1.msra.mxu0 %v653
    %2091 = vmatprep.subr.mxu0 %v658
    %2092 = vmatpush1.msra.mxu0 %v657
    %2093 = vmatprep.subr.mxu0 %v662
    %2094 = vmatpush1.msra.mxu0 %v661
    %2095 = vmatprep.subr.mxu0 %v666
    %2096 = vmatpush1.msra.mxu0 %v665
    %2097 = vmatprep.subr.mxu0 %v670
    %2098 = vmatpush1.msra.mxu0 %v669
    %2099 = vmatprep.subr.mxu0 %v674
    %2100 = vmatpush1.msra.mxu0 %v673
    %2101 = vmatprep.subr.mxu0 %v678
    %2102 = vmatpush1.msra.mxu0 %v677
    %2103 = vmatprep.subr.mxu0 %v682
    %2104 = vmatpush1.msra.mxu0 %v681
    %2105 = vmatprep.subr.mxu0 %v686
    %2106 = vmatpush1.msra.mxu0 %v685
    %2107 = vmatprep.subr.mxu0 %v690
    %2108 = vmatpush1.msra.mxu0 %v689
    %2109 = vmatprep.subr.mxu0 %v694
    %2110 = vmatpush1.msra.mxu0 %v693
    %2111 = vmatprep.subr.mxu0 %v698
    %2112 = vmatpush1.msra.mxu0 %v697
    %2113 = vmatprep.subr.mxu0 %v702
    %2114 = vmatpush1.msra.mxu0 %v701
    %2115 = vmatprep.subr.mxu0 %v706
    %2116 = vmatpush1.msra.mxu0 %v705
    %2117 = vmatprep.subr.mxu0 %v710
    %2118 = vmatpush1.msra.mxu0 %v709
    %2119 = vmatprep.subr.mxu0 %v714
    %2120 = vmatpush1.msra.mxu0 %v713
    %2121 = vmatprep.subr.mxu0 %v718
    %2122 = vmatpush1.msra.mxu0 %v717
    %2123 = vmatprep.subr.mxu0 %v722
    %2124 = vmatpush1.msra.mxu0 %v721
    %2125 = vmatprep.subr.mxu0 %v726
    %2126 = vmatpush1.msra.mxu0 %v725
    %2127 = vmatprep.mubr.f32.mxu0 %v1702
    %2128 = vmatmul.mubr.f32.gmra.mrb[0].mxu0 %v1694
    %v2129 = vpop.f32.mrb[0].mxu0
    %v2130 = vadd.f32 %v2059, %v2129
    %v2131 = vpop.f32.mrb[0].mxu0
    %v2132 = vadd.f32 %v2061, %v2131
    %2133 = vdwg.mxu0
    %2134 = vmatprep.subr.mxu0 %v730
    %2135 = vmatpush1.msra.mxu0 %v729
    %2136 = vmatprep.subr.mxu0 %v734
    %2137 = vmatpush1.msra.mxu0 %v733
    %2138 = vmatprep.subr.mxu0 %v738
    %2139 = vmatpush1.msra.mxu0 %v737
    %2140 = vmatprep.subr.mxu0 %v742
    %2141 = vmatpush1.msra.mxu0 %v741
    %2142 = vmatprep.subr.mxu0 %v746
    %2143 = vmatpush1.msra.mxu0 %v745
    %2144 = vmatprep.subr.mxu0 %v750
    %2145 = vmatpush1.msra.mxu0 %v749
    %2146 = vmatprep.subr.mxu0 %v754
    %2147 = vmatpush1.msra.mxu0 %v753
    %2148 = vmatprep.subr.mxu0 %v758
    %2149 = vmatpush1.msra.mxu0 %v757
    %2150 = vmatprep.subr.mxu0 %v762
    %2151 = vmatpush1.msra.mxu0 %v761
    %2152 = vmatprep.subr.mxu0 %v766
    %2153 = vmatpush1.msra.mxu0 %v765
    %2154 = vmatprep.subr.mxu0 %v770
    %2155 = vmatpush1.msra.mxu0 %v769
    %2156 = vmatprep.subr.mxu0 %v774
    %2157 = vmatpush1.msra.mxu0 %v773
    %2158 = vmatprep.subr.mxu0 %v778
    %2159 = vmatpush1.msra.mxu0 %v777
    %2160 = vmatprep.subr.mxu0 %v782
    %2161 = vmatpush1.msra.mxu0 %v781
    %2162 = vmatprep.subr.mxu0 %v786
    %2163 = vmatpush1.msra.mxu0 %v785
    %2164 = vmatprep.subr.mxu0 %v790
    %2165 = vmatpush1.msra.mxu0 %v789
    %2166 = vmatprep.subr.mxu0 %v794
    %2167 = vmatpush1.msra.mxu0 %v793
    %2168 = vmatprep.subr.mxu0 %v798
    %2169 = vmatpush1.msra.mxu0 %v797
    %2170 = vmatprep.subr.mxu0 %v802
    %2171 = vmatpush1.msra.mxu0 %v801
    %2172 = vmatprep.subr.mxu0 %v806
    %2173 = vmatpush1.msra.mxu0 %v805
    %2174 = vmatprep.subr.mxu0 %v810
    %2175 = vmatpush1.msra.mxu0 %v809
    %2176 = vmatprep.subr.mxu0 %v814
    %2177 = vmatpush1.msra.mxu0 %v813
    %2178 = vmatprep.subr.mxu0 %v818
    %2179 = vmatpush1.msra.mxu0 %v817
    %2180 = vmatprep.subr.mxu0 %v822
    %2181 = vmatpush1.msra.mxu0 %v821
    %2182 = vmatprep.subr.mxu0 %v826
    %2183 = vmatpush1.msra.mxu0 %v825
    %2184 = vmatprep.subr.mxu0 %v830
    %2185 = vmatpush1.msra.mxu0 %v829
    %2186 = vmatprep.subr.mxu0 %v834
    %2187 = vmatpush1.msra.mxu0 %v833
    %2188 = vmatprep.subr.mxu0 %v838
    %2189 = vmatpush1.msra.mxu0 %v837
    %2190 = vmatprep.subr.mxu0 %v842
    %2191 = vmatpush1.msra.mxu0 %v841
    %2192 = vmatprep.subr.mxu0 %v846
    %2193 = vmatpush1.msra.mxu0 %v845
    %2194 = vmatprep.subr.mxu0 %v850
    %2195 = vmatpush1.msra.mxu0 %v849
    %2196 = vmatprep.subr.mxu0 %v854
    %2197 = vmatpush1.msra.mxu0 %v853
    %2198 = vmatprep.mubr.f32.mxu0 %v1703
    %2199 = vmatmul.mubr.f32.gmra.mrb[0].mxu0 %v1701
    %v2200 = vpop.f32.mrb[0].mxu0
    %v2201 = vadd.f32 %v2130, %v2200
    %v2202 = vpop.f32.mrb[0].mxu0
    %v2203 = vadd.f32 %v2132, %v2202
    %2204 = vdwg.mxu0
    %2205 = vmatprep.subr.mxu0 %v858
    %2206 = vmatpush1.msra.mxu0 %v857
    %2207 = vmatprep.subr.mxu0 %v862
    %2208 = vmatpush1.msra.mxu0 %v861
    %2209 = vmatprep.subr.mxu0 %v866
    %2210 = vmatpush1.msra.mxu0 %v865
    %2211 = vmatprep.subr.mxu0 %v870
    %2212 = vmatpush1.msra.mxu0 %v869
    %2213 = vmatprep.subr.mxu0 %v874
    %2214 = vmatpush1.msra.mxu0 %v873
    %2215 = vmatprep.subr.mxu0 %v878
    %2216 = vmatpush1.msra.mxu0 %v877
    %2217 = vmatprep.subr.mxu0 %v882
    %2218 = vmatpush1.msra.mxu0 %v881
    %2219 = vmatprep.subr.mxu0 %v886
    %2220 = vmatpush1.msra.mxu0 %v885
    %2221 = vmatprep.subr.mxu0 %v890
    %2222 = vmatpush1.msra.mxu0 %v889
    %2223 = vmatprep.subr.mxu0 %v894
    %2224 = vmatpush1.msra.mxu0 %v893
    %2225 = vmatprep.subr.mxu0 %v898
    %2226 = vmatpush1.msra.mxu0 %v897
    %2227 = vmatprep.subr.mxu0 %v902
    %2228 = vmatpush1.msra.mxu0 %v901
    %2229 = vmatprep.subr.mxu0 %v906
    %2230 = vmatpush1.msra.mxu0 %v905
    %2231 = vmatprep.subr.mxu0 %v910
    %2232 = vmatpush1.msra.mxu0 %v909
    %2233 = vmatprep.subr.mxu0 %v914
    %2234 = vmatpush1.msra.mxu0 %v913
    %2235 = vmatprep.subr.mxu0 %v918
    %2236 = vmatpush1.msra.mxu0 %v917
    %2237 = vmatprep.subr.mxu0 %v922
    %2238 = vmatpush1.msra.mxu0 %v921
    %2239 = vmatprep.subr.mxu0 %v926
    %2240 = vmatpush1.msra.mxu0 %v925
    %2241 = vmatprep.subr.mxu0 %v930
    %2242 = vmatpush1.msra.mxu0 %v929
    %2243 = vmatprep.subr.mxu0 %v934
    %2244 = vmatpush1.msra.mxu0 %v933
    %2245 = vmatprep.subr.mxu0 %v938
    %2246 = vmatpush1.msra.mxu0 %v937
    %2247 = vmatprep.subr.mxu0 %v942
    %2248 = vmatpush1.msra.mxu0 %v941
    %2249 = vmatprep.subr.mxu0 %v946
    %2250 = vmatpush1.msra.mxu0 %v945
    %2251 = vmatprep.subr.mxu0 %v950
    %2252 = vmatpush1.msra.mxu0 %v949
    %2253 = vmatprep.subr.mxu0 %v954
    %2254 = vmatpush1.msra.mxu0 %v953
    %2255 = vmatprep.subr.mxu0 %v958
    %2256 = vmatpush1.msra.mxu0 %v957
    %2257 = vmatprep.subr.mxu0 %v962
    %2258 = vmatpush1.msra.mxu0 %v961
    %2259 = vmatprep.subr.mxu0 %v966
    %2260 = vmatpush1.msra.mxu0 %v965
    %2261 = vmatprep.subr.mxu0 %v970
    %2262 = vmatpush1.msra.mxu0 %v969
    %2263 = vmatprep.subr.mxu0 %v974
    %2264 = vmatpush1.msra.mxu0 %v973
    %2265 = vmatprep.subr.mxu0 %v978
    %2266 = vmatpush1.msra.mxu0 %v977
    %2267 = vmatprep.subr.mxu0 %v982
    %2268 = vmatpush1.msra.mxu0 %v981
    %2269 = vmatprep.mubr.f32.mxu0 %v1719
    %2270 = vmatmul.mubr.f32.gmra.mrb[0].mxu0 %v1711
    %v2271 = vpop.f32.mrb[0].mxu0
    %v2272 = vadd.f32 %v2201, %v2271
    %v2273 = vpop.f32.mrb[0].mxu0
    %v2274 = vadd.f32 %v2203, %v2273
    %2275 = vdwg.mxu0
    %2276 = vmatprep.subr.mxu0 %v986
    %2277 = vmatpush1.msra.mxu0 %v985
    %2278 = vmatprep.subr.mxu0 %v990
    %2279 = vmatpush1.msra.mxu0 %v989
    %2280 = vmatprep.subr.mxu0 %v994
    %2281 = vmatpush1.msra.mxu0 %v993
    %2282 = vmatprep.subr.mxu0 %v998
    %2283 = vmatpush1.msra.mxu0 %v997
    %2284 = vmatprep.subr.mxu0 %v1002
    %2285 = vmatpush1.msra.mxu0 %v1001
    %2286 = vmatprep.subr.mxu0 %v1006
    %2287 = vmatpush1.msra.mxu0 %v1005
    %2288 = vmatprep.subr.mxu0 %v1010
    %2289 = vmatpush1.msra.mxu0 %v1009
    %2290 = vmatprep.subr.mxu0 %v1014
    %2291 = vmatpush1.msra.mxu0 %v1013
    %2292 = vmatprep.subr.mxu0 %v1018
    %2293 = vmatpush1.msra.mxu0 %v1017
    %2294 = vmatprep.subr.mxu0 %v1022
    %2295 = vmatpush1.msra.mxu0 %v1021
    %2296 = vmatprep.subr.mxu0 %v1026
    %2297 = vmatpush1.msra.mxu0 %v1025
    %2298 = vmatprep.subr.mxu0 %v1030
    %2299 = vmatpush1.msra.mxu0 %v1029
    %2300 = vmatprep.subr.mxu0 %v1034
    %2301 = vmatpush1.msra.mxu0 %v1033
    %2302 = vmatprep.subr.mxu0 %v1038
    %2303 = vmatpush1.msra.mxu0 %v1037
    %2304 = vmatprep.subr.mxu0 %v1042
    %2305 = vmatpush1.msra.mxu0 %v1041
    %2306 = vmatprep.subr.mxu0 %v1046
    %2307 = vmatpush1.msra.mxu0 %v1045
    %2308 = vmatprep.subr.mxu0 %v1050
    %2309 = vmatpush1.msra.mxu0 %v1049
    %2310 = vmatprep.subr.mxu0 %v1054
    %2311 = vmatpush1.msra.mxu0 %v1053
    %2312 = vmatprep.subr.mxu0 %v1058
    %2313 = vmatpush1.msra.mxu0 %v1057
    %2314 = vmatprep.subr.mxu0 %v1062
    %2315 = vmatpush1.msra.mxu0 %v1061
    %2316 = vmatprep.subr.mxu0 %v1066
    %2317 = vmatpush1.msra.mxu0 %v1065
    %2318 = vmatprep.subr.mxu0 %v1070
    %2319 = vmatpush1.msra.mxu0 %v1069
    %2320 = vmatprep.subr.mxu0 %v1074
    %2321 = vmatpush1.msra.mxu0 %v1073
    %2322 = vmatprep.subr.mxu0 %v1078
    %2323 = vmatpush1.msra.mxu0 %v1077
    %2324 = vmatprep.subr.mxu0 %v1082
    %2325 = vmatpush1.msra.mxu0 %v1081
    %2326 = vmatprep.subr.mxu0 %v1086
    %2327 = vmatpush1.msra.mxu0 %v1085
    %2328 = vmatprep.subr.mxu0 %v1090
    %2329 = vmatpush1.msra.mxu0 %v1089
    %2330 = vmatprep.subr.mxu0 %v1094
    %2331 = vmatpush1.msra.mxu0 %v1093
    %2332 = vmatprep.subr.mxu0 %v1098
    %2333 = vmatpush1.msra.mxu0 %v1097
    %2334 = vmatprep.subr.mxu0 %v1102
    %2335 = vmatpush1.msra.mxu0 %v1101
    %2336 = vmatprep.subr.mxu0 %v1106
    %2337 = vmatpush1.msra.mxu0 %v1105
    %2338 = vmatprep.subr.mxu0 %v1110
    %2339 = vmatpush1.msra.mxu0 %v1109
    %2340 = vmatprep.mubr.f32.mxu0 %v1720
    %2341 = vmatmul.mubr.f32.gmra.mrb[0].mxu0 %v1718
    %v2342 = vpop.f32.mrb[0].mxu0
    %v2343 = vadd.f32 %v2272, %v2342
    %v2344 = vpop.f32.mrb[0].mxu0
    %v2345 = vadd.f32 %v2274, %v2344
    %2346 = vdwg.mxu0
    %2347 = vmatprep.subr.mxu0 %v1114
    %2348 = vmatpush1.msra.mxu0 %v1113
    %2349 = vmatprep.subr.mxu0 %v1118
    %2350 = vmatpush1.msra.mxu0 %v1117
    %2351 = vmatprep.subr.mxu0 %v1122
    %2352 = vmatpush1.msra.mxu0 %v1121
    %2353 = vmatprep.subr.mxu0 %v1126
    %2354 = vmatpush1.msra.mxu0 %v1125
    %2355 = vmatprep.subr.mxu0 %v1130
    %2356 = vmatpush1.msra.mxu0 %v1129
    %2357 = vmatprep.subr.mxu0 %v1134
    %2358 = vmatpush1.msra.mxu0 %v1133
    %2359 = vmatprep.subr.mxu0 %v1138
    %2360 = vmatpush1.msra.mxu0 %v1137
    %2361 = vmatprep.subr.mxu0 %v1142
    %2362 = vmatpush1.msra.mxu0 %v1141
    %2363 = vmatprep.subr.mxu0 %v1146
    %2364 = vmatpush1.msra.mxu0 %v1145
    %2365 = vmatprep.subr.mxu0 %v1150
    %2366 = vmatpush1.msra.mxu0 %v1149
    %2367 = vmatprep.subr.mxu0 %v1154
    %2368 = vmatpush1.msra.mxu0 %v1153
    %2369 = vmatprep.subr.mxu0 %v1158
    %2370 = vmatpush1.msra.mxu0 %v1157
    %2371 = vmatprep.subr.mxu0 %v1162
    %2372 = vmatpush1.msra.mxu0 %v1161
    %2373 = vmatprep.subr.mxu0 %v1166
    %2374 = vmatpush1.msra.mxu0 %v1165
    %2375 = vmatprep.subr.mxu0 %v1170
    %2376 = vmatpush1.msra.mxu0 %v1169
    %2377 = vmatprep.subr.mxu0 %v1174
    %2378 = vmatpush1.msra.mxu0 %v1173
    %2379 = vmatprep.subr.mxu0 %v1178
    %2380 = vmatpush1.msra.mxu0 %v1177
    %2381 = vmatprep.subr.mxu0 %v1182
    %2382 = vmatpush1.msra.mxu0 %v1181
    %2383 = vmatprep.subr.mxu0 %v1186
    %2384 = vmatpush1.msra.mxu0 %v1185
    %2385 = vmatprep.subr.mxu0 %v1190
    %2386 = vmatpush1.msra.mxu0 %v1189
    %2387 = vmatprep.subr.mxu0 %v1194
    %2388 = vmatpush1.msra.mxu0 %v1193
    %2389 = vmatprep.subr.mxu0 %v1198
    %2390 = vmatpush1.msra.mxu0 %v1197
    %2391 = vmatprep.subr.mxu0 %v1202
    %2392 = vmatpush1.msra.mxu0 %v1201
    %2393 = vmatprep.subr.mxu0 %v1206
    %2394 = vmatpush1.msra.mxu0 %v1205
    %2395 = vmatprep.subr.mxu0 %v1210
    %2396 = vmatpush1.msra.mxu0 %v1209
    %2397 = vmatprep.subr.mxu0 %v1214
    %2398 = vmatpush1.msra.mxu0 %v1213
    %2399 = vmatprep.subr.mxu0 %v1218
    %2400 = vmatpush1.msra.mxu0 %v1217
    %2401 = vmatprep.subr.mxu0 %v1222
    %2402 = vmatpush1.msra.mxu0 %v1221
    %2403 = vmatprep.subr.mxu0 %v1226
    %2404 = vmatpush1.msra.mxu0 %v1225
    %2405 = vmatprep.subr.mxu0 %v1230
    %2406 = vmatpush1.msra.mxu0 %v1229
    %2407 = vmatprep.subr.mxu0 %v1234
    %2408 = vmatpush1.msra.mxu0 %v1233
    %2409 = vmatprep.subr.mxu0 %v1238
    %2410 = vmatpush1.msra.mxu0 %v1237
    %2411 = vmatprep.mubr.f32.mxu0 %v1736
    %2412 = vmatmul.mubr.f32.gmra.mrb[0].mxu0 %v1728
    %v2413 = vpop.f32.mrb[0].mxu0
    %v2414 = vadd.f32 %v2343, %v2413
    %v2415 = vpop.f32.mrb[0].mxu0
    %v2416 = vadd.f32 %v2345, %v2415
    %2417 = vdwg.mxu0
    %2418 = vmatprep.subr.mxu0 %v1242
    %2419 = vmatpush1.msra.mxu0 %v1241
    %2420 = vmatprep.subr.mxu0 %v1246
    %2421 = vmatpush1.msra.mxu0 %v1245
    %2422 = vmatprep.subr.mxu0 %v1250
    %2423 = vmatpush1.msra.mxu0 %v1249
    %2424 = vmatprep.subr.mxu0 %v1254
    %2425 = vmatpush1.msra.mxu0 %v1253
    %2426 = vmatprep.subr.mxu0 %v1258
    %2427 = vmatpush1.msra.mxu0 %v1257
    %2428 = vmatprep.subr.mxu0 %v1262
    %2429 = vmatpush1.msra.mxu0 %v1261
    %2430 = vmatprep.subr.mxu0 %v1266
    %2431 = vmatpush1.msra.mxu0 %v1265
    %2432 = vmatprep.subr.mxu0 %v1270
    %2433 = vmatpush1.msra.mxu0 %v1269
    %2434 = vmatprep.subr.mxu0 %v1274
    %2435 = vmatpush1.msra.mxu0 %v1273
    %2436 = vmatprep.subr.mxu0 %v1278
    %2437 = vmatpush1.msra.mxu0 %v1277
    %2438 = vmatprep.subr.mxu0 %v1282
    %2439 = vmatpush1.msra.mxu0 %v1281
    %2440 = vmatprep.subr.mxu0 %v1286
    %2441 = vmatpush1.msra.mxu0 %v1285
    %2442 = vmatprep.subr.mxu0 %v1290
    %2443 = vmatpush1.msra.mxu0 %v1289
    %2444 = vmatprep.subr.mxu0 %v1294
    %2445 = vmatpush1.msra.mxu0 %v1293
    %2446 = vmatprep.subr.mxu0 %v1298
    %2447 = vmatpush1.msra.mxu0 %v1297
    %2448 = vmatprep.subr.mxu0 %v1302
    %2449 = vmatpush1.msra.mxu0 %v1301
    %2450 = vmatprep.subr.mxu0 %v1306
    %2451 = vmatpush1.msra.mxu0 %v1305
    %2452 = vmatprep.subr.mxu0 %v1310
    %2453 = vmatpush1.msra.mxu0 %v1309
    %2454 = vmatprep.subr.mxu0 %v1314
    %2455 = vmatpush1.msra.mxu0 %v1313
    %2456 = vmatprep.subr.mxu0 %v1318
    %2457 = vmatpush1.msra.mxu0 %v1317
    %2458 = vmatprep.subr.mxu0 %v1322
    %2459 = vmatpush1.msra.mxu0 %v1321
    %2460 = vmatprep.subr.mxu0 %v1326
    %2461 = vmatpush1.msra.mxu0 %v1325
    %2462 = vmatprep.subr.mxu0 %v1330
    %2463 = vmatpush1.msra.mxu0 %v1329
    %2464 = vmatprep.subr.mxu0 %v1334
    %2465 = vmatpush1.msra.mxu0 %v1333
    %2466 = vmatprep.subr.mxu0 %v1338
    %2467 = vmatpush1.msra.mxu0 %v1337
    %2468 = vmatprep.subr.mxu0 %v1342
    %2469 = vmatpush1.msra.mxu0 %v1341
    %2470 = vmatprep.subr.mxu0 %v1346
    %2471 = vmatpush1.msra.mxu0 %v1345
    %2472 = vmatprep.subr.mxu0 %v1350
    %2473 = vmatpush1.msra.mxu0 %v1349
    %2474 = vmatprep.subr.mxu0 %v1354
    %2475 = vmatpush1.msra.mxu0 %v1353
    %2476 = vmatprep.subr.mxu0 %v1358
    %2477 = vmatpush1.msra.mxu0 %v1357
    %2478 = vmatprep.subr.mxu0 %v1362
    %2479 = vmatpush1.msra.mxu0 %v1361
    %2480 = vmatprep.subr.mxu0 %v1366
    %2481 = vmatpush1.msra.mxu0 %v1365
    %2482 = vmatprep.mubr.f32.mxu0 %v1737
    %2483 = vmatmul.mubr.f32.gmra.mrb[0].mxu0 %v1735
    %v2484 = vpop.f32.mrb[0].mxu0
    %v2485 = vadd.f32 %v2414, %v2484
    %v2486 = vpop.f32.mrb[0].mxu0
    %v2487 = vadd.f32 %v2416, %v2486
    %2488 = vdwg.mxu0
    %2489 = vmatprep.subr.mxu0 %v1370
    %2490 = vmatpush1.msra.mxu0 %v1369
    %2491 = vmatprep.subr.mxu0 %v1374
    %2492 = vmatpush1.msra.mxu0 %v1373
    %2493 = vmatprep.subr.mxu0 %v1378
    %2494 = vmatpush1.msra.mxu0 %v1377
    %2495 = vmatprep.subr.mxu0 %v1382
    %2496 = vmatpush1.msra.mxu0 %v1381
    %2497 = vmatprep.subr.mxu0 %v1386
    %2498 = vmatpush1.msra.mxu0 %v1385
    %2499 = vmatprep.subr.mxu0 %v1390
    %2500 = vmatpush1.msra.mxu0 %v1389
    %2501 = vmatprep.subr.mxu0 %v1394
    %2502 = vmatpush1.msra.mxu0 %v1393
    %2503 = vmatprep.subr.mxu0 %v1398
    %2504 = vmatpush1.msra.mxu0 %v1397
    %2505 = vmatprep.subr.mxu0 %v1402
    %2506 = vmatpush1.msra.mxu0 %v1401
    %2507 = vmatprep.subr.mxu0 %v1406
    %2508 = vmatpush1.msra.mxu0 %v1405
    %2509 = vmatprep.subr.mxu0 %v1410
    %2510 = vmatpush1.msra.mxu0 %v1409
    %2511 = vmatprep.subr.mxu0 %v1414
    %2512 = vmatpush1.msra.mxu0 %v1413
    %2513 = vmatprep.subr.mxu0 %v1418
    %2514 = vmatpush1.msra.mxu0 %v1417
    %2515 = vmatprep.subr.mxu0 %v1422
    %2516 = vmatpush1.msra.mxu0 %v1421
    %2517 = vmatprep.subr.mxu0 %v1426
    %2518 = vmatpush1.msra.mxu0 %v1425
    %2519 = vmatprep.subr.mxu0 %v1430
    %2520 = vmatpush1.msra.mxu0 %v1429
    %2521 = vmatprep.subr.mxu0 %v1434
    %2522 = vmatpush1.msra.mxu0 %v1433
    %2523 = vmatprep.subr.mxu0 %v1438
    %2524 = vmatpush1.msra.mxu0 %v1437
    %2525 = vmatprep.subr.mxu0 %v1442
    %2526 = vmatpush1.msra.mxu0 %v1441
    %2527 = vmatprep.subr.mxu0 %v1446
    %2528 = vmatpush1.msra.mxu0 %v1445
    %2529 = vmatprep.subr.mxu0 %v1450
    %2530 = vmatpush1.msra.mxu0 %v1449
    %2531 = vmatprep.subr.mxu0 %v1454
    %2532 = vmatpush1.msra.mxu0 %v1453
    %2533 = vmatprep.subr.mxu0 %v1458
    %2534 = vmatpush1.msra.mxu0 %v1457
    %2535 = vmatprep.subr.mxu0 %v1462
    %2536 = vmatpush1.msra.mxu0 %v1461
    %2537 = vmatprep.subr.mxu0 %v1466
    %2538 = vmatpush1.msra.mxu0 %v1465
    %2539 = vmatprep.subr.mxu0 %v1470
    %2540 = vmatpush1.msra.mxu0 %v1469
    %2541 = vmatprep.subr.mxu0 %v1474
    %2542 = vmatpush1.msra.mxu0 %v1473
    %2543 = vmatprep.subr.mxu0 %v1478
    %2544 = vmatpush1.msra.mxu0 %v1477
    %2545 = vmatprep.subr.mxu0 %v1482
    %2546 = vmatpush1.msra.mxu0 %v1481
    %2547 = vmatprep.subr.mxu0 %v1486
    %2548 = vmatpush1.msra.mxu0 %v1485
    %2549 = vmatprep.subr.mxu0 %v1490
    %2550 = vmatpush1.msra.mxu0 %v1489
    %2551 = vmatprep.subr.mxu0 %v1494
    %2552 = vmatpush1.msra.mxu0 %v1493
    %2553 = vmatprep.mubr.f32.mxu0 %v1753
    %2554 = vmatmul.mubr.f32.gmra.mrb[0].mxu0 %v1745
    %v2555 = vpop.f32.mrb[0].mxu0
    %v2556 = vadd.f32 %v2485, %v2555
    %v2557 = vpop.f32.mrb[0].mxu0
    %v2558 = vadd.f32 %v2487, %v2557
    %2559 = vdwg.mxu0
    %2560 = vmatprep.subr.mxu0 %v1498
    %2561 = vmatpush1.msra.mxu0 %v1497
    %2562 = vmatprep.subr.mxu0 %v1502
    %2563 = vmatpush1.msra.mxu0 %v1501
    %2564 = vmatprep.subr.mxu0 %v1506
    %2565 = vmatpush1.msra.mxu0 %v1505
    %2566 = vmatprep.subr.mxu0 %v1510
    %2567 = vmatpush1.msra.mxu0 %v1509
    %2568 = vmatprep.subr.mxu0 %v1514
    %2569 = vmatpush1.msra.mxu0 %v1513
    %2570 = vmatprep.subr.mxu0 %v1518
    %2571 = vmatpush1.msra.mxu0 %v1517
    %2572 = vmatprep.subr.mxu0 %v1522
    %2573 = vmatpush1.msra.mxu0 %v1521
    %2574 = vmatprep.subr.mxu0 %v1526
    %2575 = vmatpush1.msra.mxu0 %v1525
    %2576 = vmatprep.subr.mxu0 %v1530
    %2577 = vmatpush1.msra.mxu0 %v1529
    %2578 = vmatprep.subr.mxu0 %v1534
    %2579 = vmatpush1.msra.mxu0 %v1533
    %2580 = vmatprep.subr.mxu0 %v1538
    %2581 = vmatpush1.msra.mxu0 %v1537
    %2582 = vmatprep.subr.mxu0 %v1542
    %2583 = vmatpush1.msra.mxu0 %v1541
    %2584 = vmatprep.subr.mxu0 %v1546
    %2585 = vmatpush1.msra.mxu0 %v1545
    %2586 = vmatprep.subr.mxu0 %v1550
    %2587 = vmatpush1.msra.mxu0 %v1549
    %2588 = vmatprep.subr.mxu0 %v1554
    %2589 = vmatpush1.msra.mxu0 %v1553
    %2590 = vmatprep.subr.mxu0 %v1558
    %2591 = vmatpush1.msra.mxu0 %v1557
    %2592 = vmatprep.subr.mxu0 %v1562
    %2593 = vmatpush1.msra.mxu0 %v1561
    %2594 = vmatprep.subr.mxu0 %v1566
    %2595 = vmatpush1.msra.mxu0 %v1565
    %2596 = vmatprep.subr.mxu0 %v1570
    %2597 = vmatpush1.msra.mxu0 %v1569
    %2598 = vmatprep.subr.mxu0 %v1574
    %2599 = vmatpush1.msra.mxu0 %v1573
    %2600 = vmatprep.subr.mxu0 %v1578
    %2601 = vmatpush1.msra.mxu0 %v1577
    %2602 = vmatprep.subr.mxu0 %v1582
    %2603 = vmatpush1.msra.mxu0 %v1581
    %2604 = vmatprep.subr.mxu0 %v1586
    %2605 = vmatpush1.msra.mxu0 %v1585
    %2606 = vmatprep.subr.mxu0 %v1590
    %2607 = vmatpush1.msra.mxu0 %v1589
    %2608 = vmatprep.subr.mxu0 %v1594
    %2609 = vmatpush1.msra.mxu0 %v1593
    %2610 = vmatprep.subr.mxu0 %v1598
    %2611 = vmatpush1.msra.mxu0 %v1597
    %2612 = vmatprep.subr.mxu0 %v1602
    %2613 = vmatpush1.msra.mxu0 %v1601
    %2614 = vmatprep.subr.mxu0 %v1606
    %2615 = vmatpush1.msra.mxu0 %v1605
    %2616 = vmatprep.subr.mxu0 %v1610
    %2617 = vmatpush1.msra.mxu0 %v1609
    %2618 = vmatprep.subr.mxu0 %v1614
    %2619 = vmatpush1.msra.mxu0 %v1613
    %2620 = vmatprep.subr.mxu0 %v1618
    %2621 = vmatpush1.msra.mxu0 %v1617
    %2622 = vmatprep.subr.mxu0 %v1622
    %2623 = vmatpush1.msra.mxu0 %v1621
    %2624 = vmatprep.mubr.f32.mxu0 %v1754
    %2625 = vmatmul.mubr.f32.gmra.mrb[0].mxu0 %v1752
    %v2626 = vpop.f32.mrb[0].mxu0
    %v2627 = vadd.f32 %v2556, %v2626
    %v2628 = vpop.f32.mrb[0].mxu0
    %v2629 = vadd.f32 %v2558, %v2628
    %2630 = vdwg.mxu0
    %2631 = vmatprep.subr.mxu0 %v92
    %2632 = vmatpush1.msra.mxu0 %v91
    %2633 = vmatprep.subr.mxu0 %v96
    %2634 = vmatpush1.msra.mxu0 %v95
    %2635 = vmatprep.subr.mxu0 %v100
    %2636 = vmatpush1.msra.mxu0 %v99
    %2637 = vmatprep.subr.mxu0 %v104
    %2638 = vmatpush1.msra.mxu0 %v103
    %2639 = vmatprep.subr.mxu0 %v108
    %2640 = vmatpush1.msra.mxu0 %v107
    %2641 = vmatprep.subr.mxu0 %v112
    %2642 = vmatpush1.msra.mxu0 %v111
    %2643 = vmatprep.subr.mxu0 %v116
    %2644 = vmatpush1.msra.mxu0 %v115
    %2645 = vmatprep.subr.mxu0 %v120
    %2646 = vmatpush1.msra.mxu0 %v119
    %2647 = vmatprep.subr.mxu0 %v124
    %2648 = vmatpush1.msra.mxu0 %v123
    %2649 = vmatprep.subr.mxu0 %v128
    %2650 = vmatpush1.msra.mxu0 %v127
    %2651 = vmatprep.subr.mxu0 %v132
    %2652 = vmatpush1.msra.mxu0 %v131
    %2653 = vmatprep.subr.mxu0 %v136
    %2654 = vmatpush1.msra.mxu0 %v135
    %2655 = vmatprep.subr.mxu0 %v140
    %2656 = vmatpush1.msra.mxu0 %v139
    %2657 = vmatprep.subr.mxu0 %v144
    %2658 = vmatpush1.msra.mxu0 %v143
    %2659 = vmatprep.subr.mxu0 %v148
    %2660 = vmatpush1.msra.mxu0 %v147
    %2661 = vmatprep.subr.mxu0 %v152
    %2662 = vmatpush1.msra.mxu0 %v151
    %2663 = vmatprep.subr.mxu0 %v156
    %2664 = vmatpush1.msra.mxu0 %v155
    %2665 = vmatprep.subr.mxu0 %v160
    %2666 = vmatpush1.msra.mxu0 %v159
    %2667 = vmatprep.subr.mxu0 %v164
    %2668 = vmatpush1.msra.mxu0 %v163
    %2669 = vmatprep.subr.mxu0 %v168
    %2670 = vmatpush1.msra.mxu0 %v167
    %2671 = vmatprep.subr.mxu0 %v172
    %2672 = vmatpush1.msra.mxu0 %v171
    %2673 = vmatprep.subr.mxu0 %v176
    %2674 = vmatpush1.msra.mxu0 %v175
    %2675 = vmatprep.subr.mxu0 %v180
    %2676 = vmatpush1.msra.mxu0 %v179
    %2677 = vmatprep.subr.mxu0 %v184
    %2678 = vmatpush1.msra.mxu0 %v183
    %2679 = vmatprep.subr.mxu0 %v188
    %2680 = vmatpush1.msra.mxu0 %v187
    %2681 = vmatprep.subr.mxu0 %v192
    %2682 = vmatpush1.msra.mxu0 %v191
    %2683 = vmatprep.subr.mxu0 %v196
    %2684 = vmatpush1.msra.mxu0 %v195
    %2685 = vmatprep.subr.mxu0 %v200
    %2686 = vmatpush1.msra.mxu0 %v199
    %2687 = vmatprep.subr.mxu0 %v204
    %2688 = vmatpush1.msra.mxu0 %v203
    %2689 = vmatprep.subr.mxu0 %v208
    %2690 = vmatpush1.msra.mxu0 %v207
    %2691 = vmatprep.subr.mxu0 %v212
    %2692 = vmatpush1.msra.mxu0 %v211
    %2693 = vmatprep.subr.mxu0 %v216
    %2694 = vmatpush1.msra.mxu0 %v215
    %2695 = vmatprep.mubr.f32.mxu0 %v1668
    %2696 = vmatmul.mubr.f32.gmra.mrb[0].mxu0 %v1660
    %v2697 = vpop.f32.mrb[0].mxu0
    %v2698 = vadd.f32 %v1638, %v2697
    %v2699 = vpop.f32.mrb[0].mxu0
    %v2700 = vadd.f32 %v1642, %v2699
    %2701 = vdwg.mxu0
    %2702 = vmatprep.subr.mxu0 %v220
    %2703 = vmatpush1.msra.mxu0 %v219
    %2704 = vmatprep.subr.mxu0 %v224
    %2705 = vmatpush1.msra.mxu0 %v223
    %2706 = vmatprep.subr.mxu0 %v228
    %2707 = vmatpush1.msra.mxu0 %v227
    %2708 = vmatprep.subr.mxu0 %v232
    %2709 = vmatpush1.msra.mxu0 %v231
    %2710 = vmatprep.subr.mxu0 %v236
    %2711 = vmatpush1.msra.mxu0 %v235
    %2712 = vmatprep.subr.mxu0 %v240
    %2713 = vmatpush1.msra.mxu0 %v239
    %2714 = vmatprep.subr.mxu0 %v244
    %2715 = vmatpush1.msra.mxu0 %v243
    %2716 = vmatprep.subr.mxu0 %v248
    %2717 = vmatpush1.msra.mxu0 %v247
    %2718 = vmatprep.subr.mxu0 %v252
    %2719 = vmatpush1.msra.mxu0 %v251
    %2720 = vmatprep.subr.mxu0 %v256
    %2721 = vmatpush1.msra.mxu0 %v255
    %2722 = vmatprep.subr.mxu0 %v260
    %2723 = vmatpush1.msra.mxu0 %v259
    %2724 = vmatprep.subr.mxu0 %v264
    %2725 = vmatpush1.msra.mxu0 %v263
    %2726 = vmatprep.subr.mxu0 %v268
    %2727 = vmatpush1.msra.mxu0 %v267
    %2728 = vmatprep.subr.mxu0 %v272
    %2729 = vmatpush1.msra.mxu0 %v271
    %2730 = vmatprep.subr.mxu0 %v276
    %2731 = vmatpush1.msra.mxu0 %v275
    %2732 = vmatprep.subr.mxu0 %v280
    %2733 = vmatpush1.msra.mxu0 %v279
    %2734 = vmatprep.subr.mxu0 %v284
    %2735 = vmatpush1.msra.mxu0 %v283
    %2736 = vmatprep.subr.mxu0 %v288
    %2737 = vmatpush1.msra.mxu0 %v287
    %2738 = vmatprep.subr.mxu0 %v292
    %2739 = vmatpush1.msra.mxu0 %v291
    %2740 = vmatprep.subr.mxu0 %v296
    %2741 = vmatpush1.msra.mxu0 %v295
    %2742 = vmatprep.subr.mxu0 %v300
    %2743 = vmatpush1.msra.mxu0 %v299
    %2744 = vmatprep.subr.mxu0 %v304
    %2745 = vmatpush1.msra.mxu0 %v303
    %2746 = vmatprep.subr.mxu0 %v308
    %2747 = vmatpush1.msra.mxu0 %v307
    %2748 = vmatprep.subr.mxu0 %v312
    %2749 = vmatpush1.msra.mxu0 %v311
    %2750 = vmatprep.subr.mxu0 %v316
    %2751 = vmatpush1.msra.mxu0 %v315
    %2752 = vmatprep.subr.mxu0 %v320
    %2753 = vmatpush1.msra.mxu0 %v319
    %2754 = vmatprep.subr.mxu0 %v324
    %2755 = vmatpush1.msra.mxu0 %v323
    %2756 = vmatprep.subr.mxu0 %v328
    %2757 = vmatpush1.msra.mxu0 %v327
    %2758 = vmatprep.subr.mxu0 %v332
    %2759 = vmatpush1.msra.mxu0 %v331
    %2760 = vmatprep.subr.mxu0 %v336
    %2761 = vmatpush1.msra.mxu0 %v335
    %2762 = vmatprep.subr.mxu0 %v340
    %2763 = vmatpush1.msra.mxu0 %v339
    %2764 = vmatprep.subr.mxu0 %v344
    %2765 = vmatpush1.msra.mxu0 %v343
    %2766 = vmatprep.mubr.f32.mxu0 %v1669
    %2767 = vmatmul.mubr.f32.gmra.mrb[0].mxu0 %v1667
    %v2768 = vpop.f32.mrb[0].mxu0
    %v2769 = vadd.f32 %v2698, %v2768
    %v2770 = vpop.f32.mrb[0].mxu0
    %v2771 = vadd.f32 %v2700, %v2770
    %2772 = vdwg.mxu0
    %2773 = vmatprep.subr.mxu0 %v348
    %2774 = vmatpush1.msra.mxu0 %v347
    %2775 = vmatprep.subr.mxu0 %v352
    %2776 = vmatpush1.msra.mxu0 %v351
    %2777 = vmatprep.subr.mxu0 %v356
    %2778 = vmatpush1.msra.mxu0 %v355
    %2779 = vmatprep.subr.mxu0 %v360
    %2780 = vmatpush1.msra.mxu0 %v359
    %2781 = vmatprep.subr.mxu0 %v364
    %2782 = vmatpush1.msra.mxu0 %v363
    %2783 = vmatprep.subr.mxu0 %v368
    %2784 = vmatpush1.msra.mxu0 %v367
    %2785 = vmatprep.subr.mxu0 %v372
    %2786 = vmatpush1.msra.mxu0 %v371
    %2787 = vmatprep.subr.mxu0 %v376
    %2788 = vmatpush1.msra.mxu0 %v375
    %2789 = vmatprep.subr.mxu0 %v380
    %2790 = vmatpush1.msra.mxu0 %v379
    %2791 = vmatprep.subr.mxu0 %v384
    %2792 = vmatpush1.msra.mxu0 %v383
    %2793 = vmatprep.subr.mxu0 %v388
    %2794 = vmatpush1.msra.mxu0 %v387
    %2795 = vmatprep.subr.mxu0 %v392
    %2796 = vmatpush1.msra.mxu0 %v391
    %2797 = vmatprep.subr.mxu0 %v396
    %2798 = vmatpush1.msra.mxu0 %v395
    %2799 = vmatprep.subr.mxu0 %v400
    %2800 = vmatpush1.msra.mxu0 %v399
    %2801 = vmatprep.subr.mxu0 %v404
    %2802 = vmatpush1.msra.mxu0 %v403
    %2803 = vmatprep.subr.mxu0 %v408
    %2804 = vmatpush1.msra.mxu0 %v407
    %2805 = vmatprep.subr.mxu0 %v412
    %2806 = vmatpush1.msra.mxu0 %v411
    %2807 = vmatprep.subr.mxu0 %v416
    %2808 = vmatpush1.msra.mxu0 %v415
    %2809 = vmatprep.subr.mxu0 %v420
    %2810 = vmatpush1.msra.mxu0 %v419
    %2811 = vmatprep.subr.mxu0 %v424
    %2812 = vmatpush1.msra.mxu0 %v423
    %2813 = vmatprep.subr.mxu0 %v428
    %2814 = vmatpush1.msra.mxu0 %v427
    %2815 = vmatprep.subr.mxu0 %v432
    %2816 = vmatpush1.msra.mxu0 %v431
    %2817 = vmatprep.subr.mxu0 %v436
    %2818 = vmatpush1.msra.mxu0 %v435
    %2819 = vmatprep.subr.mxu0 %v440
    %2820 = vmatpush1.msra.mxu0 %v439
    %2821 = vmatprep.subr.mxu0 %v444
    %2822 = vmatpush1.msra.mxu0 %v443
    %2823 = vmatprep.subr.mxu0 %v448
    %2824 = vmatpush1.msra.mxu0 %v447
    %2825 = vmatprep.subr.mxu0 %v452
    %2826 = vmatpush1.msra.mxu0 %v451
    %2827 = vmatprep.subr.mxu0 %v456
    %2828 = vmatpush1.msra.mxu0 %v455
    %2829 = vmatprep.subr.mxu0 %v460
    %2830 = vmatpush1.msra.mxu0 %v459
    %2831 = vmatprep.subr.mxu0 %v464
    %2832 = vmatpush1.msra.mxu0 %v463
    %2833 = vmatprep.subr.mxu0 %v468
    %2834 = vmatpush1.msra.mxu0 %v467
    %2835 = vmatprep.subr.mxu0 %v472
    %2836 = vmatpush1.msra.mxu0 %v471
    %2837 = vmatprep.mubr.f32.mxu0 %v1685
    %2838 = vmatmul.mubr.f32.gmra.mrb[0].mxu0 %v1677
    %v2839 = vpop.f32.mrb[0].mxu0
    %v2840 = vadd.f32 %v2769, %v2839
    %v2841 = vpop.f32.mrb[0].mxu0
    %v2842 = vadd.f32 %v2771, %v2841
    %2843 = vdwg.mxu0
    %2844 = vmatprep.subr.mxu0 %v476
    %2845 = vmatpush1.msra.mxu0 %v475
    %2846 = vmatprep.subr.mxu0 %v480
    %2847 = vmatpush1.msra.mxu0 %v479
    %2848 = vmatprep.subr.mxu0 %v484
    %2849 = vmatpush1.msra.mxu0 %v483
    %2850 = vmatprep.subr.mxu0 %v488
    %2851 = vmatpush1.msra.mxu0 %v487
    %2852 = vmatprep.subr.mxu0 %v492
    %2853 = vmatpush1.msra.mxu0 %v491
    %2854 = vmatprep.subr.mxu0 %v496
    %2855 = vmatpush1.msra.mxu0 %v495
    %2856 = vmatprep.subr.mxu0 %v500
    %2857 = vmatpush1.msra.mxu0 %v499
    %2858 = vmatprep.subr.mxu0 %v504
    %2859 = vmatpush1.msra.mxu0 %v503
    %2860 = vmatprep.subr.mxu0 %v508
    %2861 = vmatpush1.msra.mxu0 %v507
    %2862 = vmatprep.subr.mxu0 %v512
    %2863 = vmatpush1.msra.mxu0 %v511
    %2864 = vmatprep.subr.mxu0 %v516
    %2865 = vmatpush1.msra.mxu0 %v515
    %2866 = vmatprep.subr.mxu0 %v520
    %2867 = vmatpush1.msra.mxu0 %v519
    %2868 = vmatprep.subr.mxu0 %v524
    %2869 = vmatpush1.msra.mxu0 %v523
    %2870 = vmatprep.subr.mxu0 %v528
    %2871 = vmatpush1.msra.mxu0 %v527
    %2872 = vmatprep.subr.mxu0 %v532
    %2873 = vmatpush1.msra.mxu0 %v531
    %2874 = vmatprep.subr.mxu0 %v536
    %2875 = vmatpush1.msra.mxu0 %v535
    %2876 = vmatprep.subr.mxu0 %v540
    %2877 = vmatpush1.msra.mxu0 %v539
    %2878 = vmatprep.subr.mxu0 %v544
    %2879 = vmatpush1.msra.mxu0 %v543
    %2880 = vmatprep.subr.mxu0 %v548
    %2881 = vmatpush1.msra.mxu0 %v547
    %2882 = vmatprep.subr.mxu0 %v552
    %2883 = vmatpush1.msra.mxu0 %v551
    %2884 = vmatprep.subr.mxu0 %v556
    %2885 = vmatpush1.msra.mxu0 %v555
    %2886 = vmatprep.subr.mxu0 %v560
    %2887 = vmatpush1.msra.mxu0 %v559
    %2888 = vmatprep.subr.mxu0 %v564
    %2889 = vmatpush1.msra.mxu0 %v563
    %2890 = vmatprep.subr.mxu0 %v568
    %2891 = vmatpush1.msra.mxu0 %v567
    %2892 = vmatprep.subr.mxu0 %v572
    %2893 = vmatpush1.msra.mxu0 %v571
    %2894 = vmatprep.subr.mxu0 %v576
    %2895 = vmatpush1.msra.mxu0 %v575
    %2896 = vmatprep.subr.mxu0 %v580
    %2897 = vmatpush1.msra.mxu0 %v579
    %2898 = vmatprep.subr.mxu0 %v584
    %2899 = vmatpush1.msra.mxu0 %v583
    %2900 = vmatprep.subr.mxu0 %v588
    %2901 = vmatpush1.msra.mxu0 %v587
    %2902 = vmatprep.subr.mxu0 %v592
    %2903 = vmatpush1.msra.mxu0 %v591
    %2904 = vmatprep.subr.mxu0 %v596
    %2905 = vmatpush1.msra.mxu0 %v595
    %2906 = vmatprep.subr.mxu0 %v600
    %2907 = vmatpush1.msra.mxu0 %v599
    %2908 = vmatprep.mubr.f32.mxu0 %v1686
    %2909 = vmatmul.mubr.f32.gmra.mrb[0].mxu0 %v1684
    %v2910 = vpop.f32.mrb[0].mxu0
    %v2911 = vadd.f32 %v2840, %v2910
    %v2912 = vpop.f32.mrb[0].mxu0
    %v2913 = vadd.f32 %v2842, %v2912
    %2914 = vdwg.mxu0
    %2915 = vmatprep.subr.mxu0 %v604
    %2916 = vmatpush1.msra.mxu0 %v603
    %2917 = vmatprep.subr.mxu0 %v608
    %2918 = vmatpush1.msra.mxu0 %v607
    %2919 = vmatprep.subr.mxu0 %v612
    %2920 = vmatpush1.msra.mxu0 %v611
    %2921 = vmatprep.subr.mxu0 %v616
    %2922 = vmatpush1.msra.mxu0 %v615
    %2923 = vmatprep.subr.mxu0 %v620
    %2924 = vmatpush1.msra.mxu0 %v619
    %2925 = vmatprep.subr.mxu0 %v624
    %2926 = vmatpush1.msra.mxu0 %v623
    %2927 = vmatprep.subr.mxu0 %v628
    %2928 = vmatpush1.msra.mxu0 %v627
    %2929 = vmatprep.subr.mxu0 %v632
    %2930 = vmatpush1.msra.mxu0 %v631
    %2931 = vmatprep.subr.mxu0 %v636
    %2932 = vmatpush1.msra.mxu0 %v635
    %2933 = vmatprep.subr.mxu0 %v640
    %2934 = vmatpush1.msra.mxu0 %v639
    %2935 = vmatprep.subr.mxu0 %v644
    %2936 = vmatpush1.msra.mxu0 %v643
    %2937 = vmatprep.subr.mxu0 %v648
    %2938 = vmatpush1.msra.mxu0 %v647
    %2939 = vmatprep.subr.mxu0 %v652
    %2940 = vmatpush1.msra.mxu0 %v651
    %2941 = vmatprep.subr.mxu0 %v656
    %2942 = vmatpush1.msra.mxu0 %v655
    %2943 = vmatprep.subr.mxu0 %v660
    %2944 = vmatpush1.msra.mxu0 %v659
    %2945 = vmatprep.subr.mxu0 %v664
    %2946 = vmatpush1.msra.mxu0 %v663
    %2947 = vmatprep.subr.mxu0 %v668
    %2948 = vmatpush1.msra.mxu0 %v667
    %2949 = vmatprep.subr.mxu0 %v672
    %2950 = vmatpush1.msra.mxu0 %v671
    %2951 = vmatprep.subr.mxu0 %v676
    %2952 = vmatpush1.msra.mxu0 %v675
    %2953 = vmatprep.subr.mxu0 %v680
    %2954 = vmatpush1.msra.mxu0 %v679
    %2955 = vmatprep.subr.mxu0 %v684
    %2956 = vmatpush1.msra.mxu0 %v683
    %2957 = vmatprep.subr.mxu0 %v688
    %2958 = vmatpush1.msra.mxu0 %v687
    %2959 = vmatprep.subr.mxu0 %v692
    %2960 = vmatpush1.msra.mxu0 %v691
    %2961 = vmatprep.subr.mxu0 %v696
    %2962 = vmatpush1.msra.mxu0 %v695
    %2963 = vmatprep.subr.mxu0 %v700
    %2964 = vmatpush1.msra.mxu0 %v699
    %2965 = vmatprep.subr.mxu0 %v704
    %2966 = vmatpush1.msra.mxu0 %v703
    %2967 = vmatprep.subr.mxu0 %v708
    %2968 = vmatpush1.msra.mxu0 %v707
    %2969 = vmatprep.subr.mxu0 %v712
    %2970 = vmatpush1.msra.mxu0 %v711
    %2971 = vmatprep.subr.mxu0 %v716
    %2972 = vmatpush1.msra.mxu0 %v715
    %2973 = vmatprep.subr.mxu0 %v720
    %2974 = vmatpush1.msra.mxu0 %v719
    %2975 = vmatprep.subr.mxu0 %v724
    %2976 = vmatpush1.msra.mxu0 %v723
    %2977 = vmatprep.subr.mxu0 %v728
    %2978 = vmatpush1.msra.mxu0 %v727
    %2979 = vmatprep.mubr.f32.mxu0 %v1702
    %2980 = vmatmul.mubr.f32.gmra.mrb[0].mxu0 %v1694
    %v2981 = vpop.f32.mrb[0].mxu0
    %v2982 = vadd.f32 %v2911, %v2981
    %v2983 = vpop.f32.mrb[0].mxu0
    %v2984 = vadd.f32 %v2913, %v2983
    %2985 = vdwg.mxu0
    %2986 = vmatprep.subr.mxu0 %v732
    %2987 = vmatpush1.msra.mxu0 %v731
    %2988 = vmatprep.subr.mxu0 %v736
    %2989 = vmatpush1.msra.mxu0 %v735
    %2990 = vmatprep.subr.mxu0 %v740
    %2991 = vmatpush1.msra.mxu0 %v739
    %2992 = vmatprep.subr.mxu0 %v744
    %2993 = vmatpush1.msra.mxu0 %v743
    %2994 = vmatprep.subr.mxu0 %v748
    %2995 = vmatpush1.msra.mxu0 %v747
    %2996 = vmatprep.subr.mxu0 %v752
    %2997 = vmatpush1.msra.mxu0 %v751
    %2998 = vmatprep.subr.mxu0 %v756
    %2999 = vmatpush1.msra.mxu0 %v755
    %3000 = vmatprep.subr.mxu0 %v760
    %3001 = vmatpush1.msra.mxu0 %v759
    %3002 = vmatprep.subr.mxu0 %v764
    %3003 = vmatpush1.msra.mxu0 %v763
    %3004 = vmatprep.subr.mxu0 %v768
    %3005 = vmatpush1.msra.mxu0 %v767
    %3006 = vmatprep.subr.mxu0 %v772
    %3007 = vmatpush1.msra.mxu0 %v771
    %3008 = vmatprep.subr.mxu0 %v776
    %3009 = vmatpush1.msra.mxu0 %v775
    %3010 = vmatprep.subr.mxu0 %v780
    %3011 = vmatpush1.msra.mxu0 %v779
    %3012 = vmatprep.subr.mxu0 %v784
    %3013 = vmatpush1.msra.mxu0 %v783
    %3014 = vmatprep.subr.mxu0 %v788
    %3015 = vmatpush1.msra.mxu0 %v787
    %3016 = vmatprep.subr.mxu0 %v792
    %3017 = vmatpush1.msra.mxu0 %v791
    %3018 = vmatprep.subr.mxu0 %v796
    %3019 = vmatpush1.msra.mxu0 %v795
    %3020 = vmatprep.subr.mxu0 %v800
    %3021 = vmatpush1.msra.mxu0 %v799
    %3022 = vmatprep.subr.mxu0 %v804
    %3023 = vmatpush1.msra.mxu0 %v803
    %3024 = vmatprep.subr.mxu0 %v808
    %3025 = vmatpush1.msra.mxu0 %v807
    %3026 = vmatprep.subr.mxu0 %v812
    %3027 = vmatpush1.msra.mxu0 %v811
    %3028 = vmatprep.subr.mxu0 %v816
    %3029 = vmatpush1.msra.mxu0 %v815
    %3030 = vmatprep.subr.mxu0 %v820
    %3031 = vmatpush1.msra.mxu0 %v819
    %3032 = vmatprep.subr.mxu0 %v824
    %3033 = vmatpush1.msra.mxu0 %v823
    %3034 = vmatprep.subr.mxu0 %v828
    %3035 = vmatpush1.msra.mxu0 %v827
    %3036 = vmatprep.subr.mxu0 %v832
    %3037 = vmatpush1.msra.mxu0 %v831
    %3038 = vmatprep.subr.mxu0 %v836
    %3039 = vmatpush1.msra.mxu0 %v835
    %3040 = vmatprep.subr.mxu0 %v840
    %3041 = vmatpush1.msra.mxu0 %v839
    %3042 = vmatprep.subr.mxu0 %v844
    %3043 = vmatpush1.msra.mxu0 %v843
    %3044 = vmatprep.subr.mxu0 %v848
    %3045 = vmatpush1.msra.mxu0 %v847
    %3046 = vmatprep.subr.mxu0 %v852
    %3047 = vmatpush1.msra.mxu0 %v851
    %3048 = vmatprep.subr.mxu0 %v856
    %3049 = vmatpush1.msra.mxu0 %v855
    %3050 = vmatprep.mubr.f32.mxu0 %v1703
    %3051 = vmatmul.mubr.f32.gmra.mrb[0].mxu0 %v1701
    %v3052 = vpop.f32.mrb[0].mxu0
    %v3053 = vadd.f32 %v2982, %v3052
    %v3054 = vpop.f32.mrb[0].mxu0
    %v3055 = vadd.f32 %v2984, %v3054
    %3056 = vdwg.mxu0
    %3057 = vmatprep.subr.mxu0 %v860
    %3058 = vmatpush1.msra.mxu0 %v859
    %3059 = vmatprep.subr.mxu0 %v864
    %3060 = vmatpush1.msra.mxu0 %v863
    %3061 = vmatprep.subr.mxu0 %v868
    %3062 = vmatpush1.msra.mxu0 %v867
    %3063 = vmatprep.subr.mxu0 %v872
    %3064 = vmatpush1.msra.mxu0 %v871
    %3065 = vmatprep.subr.mxu0 %v876
    %3066 = vmatpush1.msra.mxu0 %v875
    %3067 = vmatprep.subr.mxu0 %v880
    %3068 = vmatpush1.msra.mxu0 %v879
    %3069 = vmatprep.subr.mxu0 %v884
    %3070 = vmatpush1.msra.mxu0 %v883
    %3071 = vmatprep.subr.mxu0 %v888
    %3072 = vmatpush1.msra.mxu0 %v887
    %3073 = vmatprep.subr.mxu0 %v892
    %3074 = vmatpush1.msra.mxu0 %v891
    %3075 = vmatprep.subr.mxu0 %v896
    %3076 = vmatpush1.msra.mxu0 %v895
    %3077 = vmatprep.subr.mxu0 %v900
    %3078 = vmatpush1.msra.mxu0 %v899
    %3079 = vmatprep.subr.mxu0 %v904
    %3080 = vmatpush1.msra.mxu0 %v903
    %3081 = vmatprep.subr.mxu0 %v908
    %3082 = vmatpush1.msra.mxu0 %v907
    %3083 = vmatprep.subr.mxu0 %v912
    %3084 = vmatpush1.msra.mxu0 %v911
    %3085 = vmatprep.subr.mxu0 %v916
    %3086 = vmatpush1.msra.mxu0 %v915
    %3087 = vmatprep.subr.mxu0 %v920
    %3088 = vmatpush1.msra.mxu0 %v919
    %3089 = vmatprep.subr.mxu0 %v924
    %3090 = vmatpush1.msra.mxu0 %v923
    %3091 = vmatprep.subr.mxu0 %v928
    %3092 = vmatpush1.msra.mxu0 %v927
    %3093 = vmatprep.subr.mxu0 %v932
    %3094 = vmatpush1.msra.mxu0 %v931
    %3095 = vmatprep.subr.mxu0 %v936
    %3096 = vmatpush1.msra.mxu0 %v935
    %3097 = vmatprep.subr.mxu0 %v940
    %3098 = vmatpush1.msra.mxu0 %v939
    %3099 = vmatprep.subr.mxu0 %v944
    %3100 = vmatpush1.msra.mxu0 %v943
    %3101 = vmatprep.subr.mxu0 %v948
    %3102 = vmatpush1.msra.mxu0 %v947
    %3103 = vmatprep.subr.mxu0 %v952
    %3104 = vmatpush1.msra.mxu0 %v951
    %3105 = vmatprep.subr.mxu0 %v956
    %3106 = vmatpush1.msra.mxu0 %v955
    %3107 = vmatprep.subr.mxu0 %v960
    %3108 = vmatpush1.msra.mxu0 %v959
    %3109 = vmatprep.subr.mxu0 %v964
    %3110 = vmatpush1.msra.mxu0 %v963
    %3111 = vmatprep.subr.mxu0 %v968
    %3112 = vmatpush1.msra.mxu0 %v967
    %3113 = vmatprep.subr.mxu0 %v972
    %3114 = vmatpush1.msra.mxu0 %v971
    %3115 = vmatprep.subr.mxu0 %v976
    %3116 = vmatpush1.msra.mxu0 %v975
    %3117 = vmatprep.subr.mxu0 %v980
    %3118 = vmatpush1.msra.mxu0 %v979
    %3119 = vmatprep.subr.mxu0 %v984
    %3120 = vmatpush1.msra.mxu0 %v983
    %3121 = vmatprep.mubr.f32.mxu0 %v1719
    %3122 = vmatmul.mubr.f32.gmra.mrb[0].mxu0 %v1711
    %v3123 = vpop.f32.mrb[0].mxu0
    %v3124 = vadd.f32 %v3053, %v3123
    %v3125 = vpop.f32.mrb[0].mxu0
    %v3126 = vadd.f32 %v3055, %v3125
    %3127 = vdwg.mxu0
    %3128 = vmatprep.subr.mxu0 %v988
    %3129 = vmatpush1.msra.mxu0 %v987
    %3130 = vmatprep.subr.mxu0 %v992
    %3131 = vmatpush1.msra.mxu0 %v991
    %3132 = vmatprep.subr.mxu0 %v996
    %3133 = vmatpush1.msra.mxu0 %v995
    %3134 = vmatprep.subr.mxu0 %v1000
    %3135 = vmatpush1.msra.mxu0 %v999
    %3136 = vmatprep.subr.mxu0 %v1004
    %3137 = vmatpush1.msra.mxu0 %v1003
    %3138 = vmatprep.subr.mxu0 %v1008
    %3139 = vmatpush1.msra.mxu0 %v1007
    %3140 = vmatprep.subr.mxu0 %v1012
    %3141 = vmatpush1.msra.mxu0 %v1011
    %3142 = vmatprep.subr.mxu0 %v1016
    %3143 = vmatpush1.msra.mxu0 %v1015
    %3144 = vmatprep.subr.mxu0 %v1020
    %3145 = vmatpush1.msra.mxu0 %v1019
    %3146 = vmatprep.subr.mxu0 %v1024
    %3147 = vmatpush1.msra.mxu0 %v1023
    %3148 = vmatprep.subr.mxu0 %v1028
    %3149 = vmatpush1.msra.mxu0 %v1027
    %3150 = vmatprep.subr.mxu0 %v1032
    %3151 = vmatpush1.msra.mxu0 %v1031
    %3152 = vmatprep.subr.mxu0 %v1036
    %3153 = vmatpush1.msra.mxu0 %v1035
    %3154 = vmatprep.subr.mxu0 %v1040
    %3155 = vmatpush1.msra.mxu0 %v1039
    %3156 = vmatprep.subr.mxu0 %v1044
    %3157 = vmatpush1.msra.mxu0 %v1043
    %3158 = vmatprep.subr.mxu0 %v1048
    %3159 = vmatpush1.msra.mxu0 %v1047
    %3160 = vmatprep.subr.mxu0 %v1052
    %3161 = vmatpush1.msra.mxu0 %v1051
    %3162 = vmatprep.subr.mxu0 %v1056
    %3163 = vmatpush1.msra.mxu0 %v1055
    %3164 = vmatprep.subr.mxu0 %v1060
    %3165 = vmatpush1.msra.mxu0 %v1059
    %3166 = vmatprep.subr.mxu0 %v1064
    %3167 = vmatpush1.msra.mxu0 %v1063
    %3168 = vmatprep.subr.mxu0 %v1068
    %3169 = vmatpush1.msra.mxu0 %v1067
    %3170 = vmatprep.subr.mxu0 %v1072
    %3171 = vmatpush1.msra.mxu0 %v1071
    %3172 = vmatprep.subr.mxu0 %v1076
    %3173 = vmatpush1.msra.mxu0 %v1075
    %3174 = vmatprep.subr.mxu0 %v1080
    %3175 = vmatpush1.msra.mxu0 %v1079
    %3176 = vmatprep.subr.mxu0 %v1084
    %3177 = vmatpush1.msra.mxu0 %v1083
    %3178 = vmatprep.subr.mxu0 %v1088
    %3179 = vmatpush1.msra.mxu0 %v1087
    %3180 = vmatprep.subr.mxu0 %v1092
    %3181 = vmatpush1.msra.mxu0 %v1091
    %3182 = vmatprep.subr.mxu0 %v1096
    %3183 = vmatpush1.msra.mxu0 %v1095
    %3184 = vmatprep.subr.mxu0 %v1100
    %3185 = vmatpush1.msra.mxu0 %v1099
    %3186 = vmatprep.subr.mxu0 %v1104
    %3187 = vmatpush1.msra.mxu0 %v1103
    %3188 = vmatprep.subr.mxu0 %v1108
    %3189 = vmatpush1.msra.mxu0 %v1107
    %3190 = vmatprep.subr.mxu0 %v1112
    %3191 = vmatpush1.msra.mxu0 %v1111
    %3192 = vmatprep.mubr.f32.mxu0 %v1720
    %3193 = vmatmul.mubr.f32.gmra.mrb[0].mxu0 %v1718
    %v3194 = vpop.f32.mrb[0].mxu0
    %v3195 = vadd.f32 %v3124, %v3194
    %v3196 = vpop.f32.mrb[0].mxu0
    %v3197 = vadd.f32 %v3126, %v3196
    %3198 = vdwg.mxu0
    %3199 = vmatprep.subr.mxu0 %v1116
    %3200 = vmatpush1.msra.mxu0 %v1115
    %3201 = vmatprep.subr.mxu0 %v1120
    %3202 = vmatpush1.msra.mxu0 %v1119
    %3203 = vmatprep.subr.mxu0 %v1124
    %3204 = vmatpush1.msra.mxu0 %v1123
    %3205 = vmatprep.subr.mxu0 %v1128
    %3206 = vmatpush1.msra.mxu0 %v1127
    %3207 = vmatprep.subr.mxu0 %v1132
    %3208 = vmatpush1.msra.mxu0 %v1131
    %3209 = vmatprep.subr.mxu0 %v1136
    %3210 = vmatpush1.msra.mxu0 %v1135
    %3211 = vmatprep.subr.mxu0 %v1140
    %3212 = vmatpush1.msra.mxu0 %v1139
    %3213 = vmatprep.subr.mxu0 %v1144
    %3214 = vmatpush1.msra.mxu0 %v1143
    %3215 = vmatprep.subr.mxu0 %v1148
    %3216 = vmatpush1.msra.mxu0 %v1147
    %3217 = vmatprep.subr.mxu0 %v1152
    %3218 = vmatpush1.msra.mxu0 %v1151
    %3219 = vmatprep.subr.mxu0 %v1156
    %3220 = vmatpush1.msra.mxu0 %v1155
    %3221 = vmatprep.subr.mxu0 %v1160
    %3222 = vmatpush1.msra.mxu0 %v1159
    %3223 = vmatprep.subr.mxu0 %v1164
    %3224 = vmatpush1.msra.mxu0 %v1163
    %3225 = vmatprep.subr.mxu0 %v1168
    %3226 = vmatpush1.msra.mxu0 %v1167
    %3227 = vmatprep.subr.mxu0 %v1172
    %3228 = vmatpush1.msra.mxu0 %v1171
    %3229 = vmatprep.subr.mxu0 %v1176
    %3230 = vmatpush1.msra.mxu0 %v1175
    %3231 = vmatprep.subr.mxu0 %v1180
    %3232 = vmatpush1.msra.mxu0 %v1179
    %3233 = vmatprep.subr.mxu0 %v1184
    %3234 = vmatpush1.msra.mxu0 %v1183
    %3235 = vmatprep.subr.mxu0 %v1188
    %3236 = vmatpush1.msra.mxu0 %v1187
    %3237 = vmatprep.subr.mxu0 %v1192
    %3238 = vmatpush1.msra.mxu0 %v1191
    %3239 = vmatprep.subr.mxu0 %v1196
    %3240 = vmatpush1.msra.mxu0 %v1195
    %3241 = vmatprep.subr.mxu0 %v1200
    %3242 = vmatpush1.msra.mxu0 %v1199
    %3243 = vmatprep.subr.mxu0 %v1204
    %3244 = vmatpush1.msra.mxu0 %v1203
    %3245 = vmatprep.subr.mxu0 %v1208
    %3246 = vmatpush1.msra.mxu0 %v1207
    %3247 = vmatprep.subr.mxu0 %v1212
    %3248 = vmatpush1.msra.mxu0 %v1211
    %3249 = vmatprep.subr.mxu0 %v1216
    %3250 = vmatpush1.msra.mxu0 %v1215
    %3251 = vmatprep.subr.mxu0 %v1220
    %3252 = vmatpush1.msra.mxu0 %v1219
    %3253 = vmatprep.subr.mxu0 %v1224
    %3254 = vmatpush1.msra.mxu0 %v1223
    %3255 = vmatprep.subr.mxu0 %v1228
    %3256 = vmatpush1.msra.mxu0 %v1227
    %3257 = vmatprep.subr.mxu0 %v1232
    %3258 = vmatpush1.msra.mxu0 %v1231
    %3259 = vmatprep.subr.mxu0 %v1236
    %3260 = vmatpush1.msra.mxu0 %v1235
    %3261 = vmatprep.subr.mxu0 %v1240
    %3262 = vmatpush1.msra.mxu0 %v1239
    %3263 = vmatprep.mubr.f32.mxu0 %v1736
    %3264 = vmatmul.mubr.f32.gmra.mrb[0].mxu0 %v1728
    %v3265 = vpop.f32.mrb[0].mxu0
    %v3266 = vadd.f32 %v3195, %v3265
    %v3267 = vpop.f32.mrb[0].mxu0
    %v3268 = vadd.f32 %v3197, %v3267
    %3269 = vdwg.mxu0
    %3270 = vmatprep.subr.mxu0 %v1244
    %3271 = vmatpush1.msra.mxu0 %v1243
    %3272 = vmatprep.subr.mxu0 %v1248
    %3273 = vmatpush1.msra.mxu0 %v1247
    %3274 = vmatprep.subr.mxu0 %v1252
    %3275 = vmatpush1.msra.mxu0 %v1251
    %3276 = vmatprep.subr.mxu0 %v1256
    %3277 = vmatpush1.msra.mxu0 %v1255
    %3278 = vmatprep.subr.mxu0 %v1260
    %3279 = vmatpush1.msra.mxu0 %v1259
    %3280 = vmatprep.subr.mxu0 %v1264
    %3281 = vmatpush1.msra.mxu0 %v1263
    %3282 = vmatprep.subr.mxu0 %v1268
    %3283 = vmatpush1.msra.mxu0 %v1267
    %3284 = vmatprep.subr.mxu0 %v1272
    %3285 = vmatpush1.msra.mxu0 %v1271
    %3286 = vmatprep.subr.mxu0 %v1276
    %3287 = vmatpush1.msra.mxu0 %v1275
    %3288 = vmatprep.subr.mxu0 %v1280
    %3289 = vmatpush1.msra.mxu0 %v1279
    %3290 = vmatprep.subr.mxu0 %v1284
    %3291 = vmatpush1.msra.mxu0 %v1283
    %3292 = vmatprep.subr.mxu0 %v1288
    %3293 = vmatpush1.msra.mxu0 %v1287
    %3294 = vmatprep.subr.mxu0 %v1292
    %3295 = vmatpush1.msra.mxu0 %v1291
    %3296 = vmatprep.subr.mxu0 %v1296
    %3297 = vmatpush1.msra.mxu0 %v1295
    %3298 = vmatprep.subr.mxu0 %v1300
    %3299 = vmatpush1.msra.mxu0 %v1299
    %3300 = vmatprep.subr.mxu0 %v1304
    %3301 = vmatpush1.msra.mxu0 %v1303
    %3302 = vmatprep.subr.mxu0 %v1308
    %3303 = vmatpush1.msra.mxu0 %v1307
    %3304 = vmatprep.subr.mxu0 %v1312
    %3305 = vmatpush1.msra.mxu0 %v1311
    %3306 = vmatprep.subr.mxu0 %v1316
    %3307 = vmatpush1.msra.mxu0 %v1315
    %3308 = vmatprep.subr.mxu0 %v1320
    %3309 = vmatpush1.msra.mxu0 %v1319
    %3310 = vmatprep.subr.mxu0 %v1324
    %3311 = vmatpush1.msra.mxu0 %v1323
    %3312 = vmatprep.subr.mxu0 %v1328
    %3313 = vmatpush1.msra.mxu0 %v1327
    %3314 = vmatprep.subr.mxu0 %v1332
    %3315 = vmatpush1.msra.mxu0 %v1331
    %3316 = vmatprep.subr.mxu0 %v1336
    %3317 = vmatpush1.msra.mxu0 %v1335
    %3318 = vmatprep.subr.mxu0 %v1340
    %3319 = vmatpush1.msra.mxu0 %v1339
    %3320 = vmatprep.subr.mxu0 %v1344
    %3321 = vmatpush1.msra.mxu0 %v1343
    %3322 = vmatprep.subr.mxu0 %v1348
    %3323 = vmatpush1.msra.mxu0 %v1347
    %3324 = vmatprep.subr.mxu0 %v1352
    %3325 = vmatpush1.msra.mxu0 %v1351
    %3326 = vmatprep.subr.mxu0 %v1356
    %3327 = vmatpush1.msra.mxu0 %v1355
    %3328 = vmatprep.subr.mxu0 %v1360
    %3329 = vmatpush1.msra.mxu0 %v1359
    %3330 = vmatprep.subr.mxu0 %v1364
    %3331 = vmatpush1.msra.mxu0 %v1363
    %3332 = vmatprep.subr.mxu0 %v1368
    %3333 = vmatpush1.msra.mxu0 %v1367
    %3334 = vmatprep.mubr.f32.mxu0 %v1737
    %3335 = vmatmul.mubr.f32.gmra.mrb[0].mxu0 %v1735
    %v3336 = vpop.f32.mrb[0].mxu0
    %v3337 = vadd.f32 %v3266, %v3336
    %v3338 = vpop.f32.mrb[0].mxu0
    %v3339 = vadd.f32 %v3268, %v3338
    %3340 = vdwg.mxu0
    %3341 = vmatprep.subr.mxu0 %v1372
    %3342 = vmatpush1.msra.mxu0 %v1371
    %3343 = vmatprep.subr.mxu0 %v1376
    %3344 = vmatpush1.msra.mxu0 %v1375
    %3345 = vmatprep.subr.mxu0 %v1380
    %3346 = vmatpush1.msra.mxu0 %v1379
    %3347 = vmatprep.subr.mxu0 %v1384
    %3348 = vmatpush1.msra.mxu0 %v1383
    %3349 = vmatprep.subr.mxu0 %v1388
    %3350 = vmatpush1.msra.mxu0 %v1387
    %3351 = vmatprep.subr.mxu0 %v1392
    %3352 = vmatpush1.msra.mxu0 %v1391
    %3353 = vmatprep.subr.mxu0 %v1396
    %3354 = vmatpush1.msra.mxu0 %v1395
    %3355 = vmatprep.subr.mxu0 %v1400
    %3356 = vmatpush1.msra.mxu0 %v1399
    %3357 = vmatprep.subr.mxu0 %v1404
    %3358 = vmatpush1.msra.mxu0 %v1403
    %3359 = vmatprep.subr.mxu0 %v1408
    %3360 = vmatpush1.msra.mxu0 %v1407
    %3361 = vmatprep.subr.mxu0 %v1412
    %3362 = vmatpush1.msra.mxu0 %v1411
    %3363 = vmatprep.subr.mxu0 %v1416
    %3364 = vmatpush1.msra.mxu0 %v1415
    %3365 = vmatprep.subr.mxu0 %v1420
    %3366 = vmatpush1.msra.mxu0 %v1419
    %3367 = vmatprep.subr.mxu0 %v1424
    %3368 = vmatpush1.msra.mxu0 %v1423
    %3369 = vmatprep.subr.mxu0 %v1428
    %3370 = vmatpush1.msra.mxu0 %v1427
    %3371 = vmatprep.subr.mxu0 %v1432
    %3372 = vmatpush1.msra.mxu0 %v1431
    %3373 = vmatprep.subr.mxu0 %v1436
    %3374 = vmatpush1.msra.mxu0 %v1435
    %3375 = vmatprep.subr.mxu0 %v1440
    %3376 = vmatpush1.msra.mxu0 %v1439
    %3377 = vmatprep.subr.mxu0 %v1444
    %3378 = vmatpush1.msra.mxu0 %v1443
    %3379 = vmatprep.subr.mxu0 %v1448
    %3380 = vmatpush1.msra.mxu0 %v1447
    %3381 = vmatprep.subr.mxu0 %v1452
    %3382 = vmatpush1.msra.mxu0 %v1451
    %3383 = vmatprep.subr.mxu0 %v1456
    %3384 = vmatpush1.msra.mxu0 %v1455
    %3385 = vmatprep.subr.mxu0 %v1460
    %3386 = vmatpush1.msra.mxu0 %v1459
    %3387 = vmatprep.subr.mxu0 %v1464
    %3388 = vmatpush1.msra.mxu0 %v1463
    %3389 = vmatprep.subr.mxu0 %v1468
    %3390 = vmatpush1.msra.mxu0 %v1467
    %3391 = vmatprep.subr.mxu0 %v1472
    %3392 = vmatpush1.msra.mxu0 %v1471
    %3393 = vmatprep.subr.mxu0 %v1476
    %3394 = vmatpush1.msra.mxu0 %v1475
    %3395 = vmatprep.subr.mxu0 %v1480
    %3396 = vmatpush1.msra.mxu0 %v1479
    %3397 = vmatprep.subr.mxu0 %v1484
    %3398 = vmatpush1.msra.mxu0 %v1483
    %3399 = vmatprep.subr.mxu0 %v1488
    %3400 = vmatpush1.msra.mxu0 %v1487
    %3401 = vmatprep.subr.mxu0 %v1492
    %3402 = vmatpush1.msra.mxu0 %v1491
    %3403 = vmatprep.subr.mxu0 %v1496
    %3404 = vmatpush1.msra.mxu0 %v1495
    %3405 = vmatprep.mubr.f32.mxu0 %v1753
    %3406 = vmatmul.mubr.f32.gmra.mrb[0].mxu0 %v1745
    %v3407 = vpop.f32.mrb[0].mxu0
    %v3408 = vadd.f32 %v3337, %v3407
    %v3409 = vpop.f32.mrb[0].mxu0
    %v3410 = vadd.f32 %v3339, %v3409
    %3411 = vdwg.mxu0
    %3412 = vmatprep.subr.mxu0 %v1500
    %3413 = vmatpush1.msra.mxu0 %v1499
    %3414 = vmatprep.subr.mxu0 %v1504
    %3415 = vmatpush1.msra.mxu0 %v1503
    %3416 = vmatprep.subr.mxu0 %v1508
    %3417 = vmatpush1.msra.mxu0 %v1507
    %3418 = vmatprep.subr.mxu0 %v1512
    %3419 = vmatpush1.msra.mxu0 %v1511
    %3420 = vmatprep.subr.mxu0 %v1516
    %3421 = vmatpush1.msra.mxu0 %v1515
    %3422 = vmatprep.subr.mxu0 %v1520
    %3423 = vmatpush1.msra.mxu0 %v1519
    %3424 = vmatprep.subr.mxu0 %v1524
    %3425 = vmatpush1.msra.mxu0 %v1523
    %3426 = vmatprep.subr.mxu0 %v1528
    %3427 = vmatpush1.msra.mxu0 %v1527
    %3428 = vmatprep.subr.mxu0 %v1532
    %3429 = vmatpush1.msra.mxu0 %v1531
    %3430 = vmatprep.subr.mxu0 %v1536
    %3431 = vmatpush1.msra.mxu0 %v1535
    %3432 = vmatprep.subr.mxu0 %v1540
    %3433 = vmatpush1.msra.mxu0 %v1539
    %3434 = vmatprep.subr.mxu0 %v1544
    %3435 = vmatpush1.msra.mxu0 %v1543
    %3436 = vmatprep.subr.mxu0 %v1548
    %3437 = vmatpush1.msra.mxu0 %v1547
    %3438 = vmatprep.subr.mxu0 %v1552
    %3439 = vmatpush1.msra.mxu0 %v1551
    %3440 = vmatprep.subr.mxu0 %v1556
    %3441 = vmatpush1.msra.mxu0 %v1555
    %3442 = vmatprep.subr.mxu0 %v1560
    %3443 = vmatpush1.msra.mxu0 %v1559
    %3444 = vmatprep.subr.mxu0 %v1564
    %3445 = vmatpush1.msra.mxu0 %v1563
    %3446 = vmatprep.subr.mxu0 %v1568
    %3447 = vmatpush1.msra.mxu0 %v1567
    %3448 = vmatprep.subr.mxu0 %v1572
    %3449 = vmatpush1.msra.mxu0 %v1571
    %3450 = vmatprep.subr.mxu0 %v1576
    %3451 = vmatpush1.msra.mxu0 %v1575
    %3452 = vmatprep.subr.mxu0 %v1580
    %3453 = vmatpush1.msra.mxu0 %v1579
    %3454 = vmatprep.subr.mxu0 %v1584
    %3455 = vmatpush1.msra.mxu0 %v1583
    %3456 = vmatprep.subr.mxu0 %v1588
    %3457 = vmatpush1.msra.mxu0 %v1587
    %3458 = vmatprep.subr.mxu0 %v1592
    %3459 = vmatpush1.msra.mxu0 %v1591
    %3460 = vmatprep.subr.mxu0 %v1596
    %3461 = vmatpush1.msra.mxu0 %v1595
    %3462 = vmatprep.subr.mxu0 %v1600
    %3463 = vmatpush1.msra.mxu0 %v1599
    %3464 = vmatprep.subr.mxu0 %v1604
    %3465 = vmatpush1.msra.mxu0 %v1603
    %3466 = vmatprep.subr.mxu0 %v1608
    %3467 = vmatpush1.msra.mxu0 %v1607
    %3468 = vmatprep.subr.mxu0 %v1612
    %3469 = vmatpush1.msra.mxu0 %v1611
    %3470 = vmatprep.subr.mxu0 %v1616
    %3471 = vmatpush1.msra.mxu0 %v1615
    %3472 = vmatprep.subr.mxu0 %v1620
    %3473 = vmatpush1.msra.mxu0 %v1619
    %3474 = vmatprep.subr.mxu0 %v1624
    %3475 = vmatpush1.msra.mxu0 %v1623
    %3476 = vmatprep.mubr.f32.mxu0 %v1754
    %3477 = vmatmul.mubr.f32.gmra.mrb[0].mxu0 %v1752
    %v3478 = vpop.f32.mrb[0].mxu0
    %v3479 = vadd.f32 %v3408, %v3478
    %v3480 = vpop.f32.mrb[0].mxu0
    %v3481 = vadd.f32 %v3410, %v3480
    %3482 = vdwg.mxu0
    %v3483 = vtanh.pop %v2627
    %v3484 = vtanh.pop %v2629
    %v3485 = vtanh.pop %v3479
    %v3486 = vtanh.pop %v3481
    %v3487 = vld [vmem:[#allocation8] sm:$0xff]
    %v3488 = vld [vmem:[#allocation8 + $0x8] sm:$0xff]
    %v3489 = vld [vmem:[#allocation8 + $0x10] sm:$0xff]
    %v3490 = vld [vmem:[#allocation8 + $0x18] sm:$0xff]
    %v3491 = vld [vmem:[#allocation8 + $0x20] sm:$0xff]
    %v3492 = vld [vmem:[#allocation8 + $0x28] sm:$0xff]
    %v3493 = vld [vmem:[#allocation8 + $0x30] sm:$0xff]
    %v3494 = vld [vmem:[#allocation8 + $0x38] sm:$0xff]
    %v3495 = vld [vmem:[#allocation8 + $0x40] sm:$0xff]
    %v3496 = vld [vmem:[#allocation8 + $0x48] sm:$0xff]
    %v3497 = vld [vmem:[#allocation8 + $0x50] sm:$0xff]
    %v3498 = vld [vmem:[#allocation8 + $0x58] sm:$0xff]
    %v3499 = vld [vmem:[#allocation8 + $0x60] sm:$0xff]
    %v3500 = vld [vmem:[#allocation8 + $0x68] sm:$0xff]
    %v3501 = vld [vmem:[#allocation8 + $0x70] sm:$0xff]
    %v3502 = vld [vmem:[#allocation8 + $0x78] sm:$0xff]
    %v3503 = vld [vmem:[#allocation8 + $0x80] sm:$0xff]
    %v3504 = vld [vmem:[#allocation8 + $0x88] sm:$0xff]
    %v3505 = vld [vmem:[#allocation8 + $0x90] sm:$0xff]
    %v3506 = vld [vmem:[#allocation8 + $0x98] sm:$0xff]
    %v3507 = vld [vmem:[#allocation8 + $0xa0] sm:$0xff]
    %v3508 = vld [vmem:[#allocation8 + $0xa8] sm:$0xff]
    %v3509 = vld [vmem:[#allocation8 + $0xb0] sm:$0xff]
    %v3510 = vld [vmem:[#allocation8 + $0xb8] sm:$0xff]
    %v3511 = vld [vmem:[#allocation8 + $0xc0] sm:$0xff]
    %v3512 = vld [vmem:[#allocation8 + $0xc8] sm:$0xff]
    %v3513 = vld [vmem:[#allocation8 + $0xd0] sm:$0xff]
    %v3514 = vld [vmem:[#allocation8 + $0xd8] sm:$0xff]
    %v3515 = vld [vmem:[#allocation8 + $0xe0] sm:$0xff]
    %v3516 = vld [vmem:[#allocation8 + $0xe8] sm:$0xff]
    %v3517 = vld [vmem:[#allocation8 + $0xf0] sm:$0xff]
    %v3518 = vld [vmem:[#allocation8 + $0xf8] sm:$0xff]
    %v3519 = vld [vmem:[#allocation8 + $0x100] sm:$0xff]
    %v3520 = vld [vmem:[#allocation8 + $0x108] sm:$0xff]
    %v3521 = vld [vmem:[#allocation8 + $0x110] sm:$0xff]
    %v3522 = vld [vmem:[#allocation8 + $0x118] sm:$0xff]
    %v3523 = vld [vmem:[#allocation8 + $0x120] sm:$0xff]
    %v3524 = vld [vmem:[#allocation8 + $0x128] sm:$0xff]
    %v3525 = vld [vmem:[#allocation8 + $0x130] sm:$0xff]
    %v3526 = vld [vmem:[#allocation8 + $0x138] sm:$0xff]
    %v3527 = vld [vmem:[#allocation8 + $0x140] sm:$0xff]
    %v3528 = vld [vmem:[#allocation8 + $0x148] sm:$0xff]
    %v3529 = vld [vmem:[#allocation8 + $0x150] sm:$0xff]
    %v3530 = vld [vmem:[#allocation8 + $0x158] sm:$0xff]
    %v3531 = vld [vmem:[#allocation8 + $0x160] sm:$0xff]
    %v3532 = vld [vmem:[#allocation8 + $0x168] sm:$0xff]
    %v3533 = vld [vmem:[#allocation8 + $0x170] sm:$0xff]
    %v3534 = vld [vmem:[#allocation8 + $0x178] sm:$0xff]
    %v3535 = vld [vmem:[#allocation8 + $0x180] sm:$0xff]
    %v3536 = vld [vmem:[#allocation8 + $0x188] sm:$0xff]
    %v3537 = vld [vmem:[#allocation8 + $0x190] sm:$0xff]
    %v3538 = vld [vmem:[#allocation8 + $0x198] sm:$0xff]
    %v3539 = vld [vmem:[#allocation8 + $0x1a0] sm:$0xff]
    %v3540 = vld [vmem:[#allocation8 + $0x1a8] sm:$0xff]
    %v3541 = vld [vmem:[#allocation8 + $0x1b0] sm:$0xff]
    %v3542 = vld [vmem:[#allocation8 + $0x1b8] sm:$0xff]
    %v3543 = vld [vmem:[#allocation8 + $0x1c0] sm:$0xff]
    %v3544 = vld [vmem:[#allocation8 + $0x1c8] sm:$0xff]
    %v3545 = vld [vmem:[#allocation8 + $0x1d0] sm:$0xff]
    %v3546 = vld [vmem:[#allocation8 + $0x1d8] sm:$0xff]
    %v3547 = vld [vmem:[#allocation8 + $0x1e0] sm:$0xff]
    %v3548 = vld [vmem:[#allocation8 + $0x1e8] sm:$0xff]
    %v3549 = vld [vmem:[#allocation8 + $0x1f0] sm:$0xff]
    %v3550 = vld [vmem:[#allocation8 + $0x1f8] sm:$0xff]
    %v3551 = vld [vmem:[#allocation10] sm:$0x1]
    %v3553 = vlaneseq
    %v3554 = vshrl.u32 %v3553, 7
    %v3555 = vsub.s32 0, %v3554
    %v3556 = vrot.slane %v3551, %v3555
    %3558 = vmatprep.subr.mxu0 0.0
    %3559 = vmatpush1.msra.mxu0 %v3487
    %3560 = vmatprep.subr.mxu0 0.0
    %3561 = vmatpush1.msra.mxu0 %v3488
    %3562 = vmatprep.subr.mxu0 0.0
    %3563 = vmatpush1.msra.mxu0 %v3489
    %3564 = vmatprep.subr.mxu0 0.0
    %3565 = vmatpush1.msra.mxu0 %v3490
    %3566 = vmatprep.subr.mxu0 0.0
    %3567 = vmatpush1.msra.mxu0 %v3491
    %3568 = vmatprep.subr.mxu0 0.0
    %3569 = vmatpush1.msra.mxu0 %v3492
    %3570 = vmatprep.subr.mxu0 0.0
    %3571 = vmatpush1.msra.mxu0 %v3493
    %3572 = vmatprep.subr.mxu0 0.0
    %3573 = vmatpush1.msra.mxu0 %v3494
    %3574 = vmatprep.subr.mxu0 0.0
    %3575 = vmatpush1.msra.mxu0 %v3495
    %3576 = vmatprep.subr.mxu0 0.0
    %3577 = vmatpush1.msra.mxu0 %v3496
    %3578 = vmatprep.subr.mxu0 0.0
    %3579 = vmatpush1.msra.mxu0 %v3497
    %3580 = vmatprep.subr.mxu0 0.0
    %3581 = vmatpush1.msra.mxu0 %v3498
    %3582 = vmatprep.subr.mxu0 0.0
    %3583 = vmatpush1.msra.mxu0 %v3499
    %3584 = vmatprep.subr.mxu0 0.0
    %3585 = vmatpush1.msra.mxu0 %v3500
    %3586 = vmatprep.subr.mxu0 0.0
    %3587 = vmatpush1.msra.mxu0 %v3501
    %3588 = vmatprep.subr.mxu0 0.0
    %3589 = vmatpush1.msra.mxu0 %v3502
    %3590 = vmatprep.subr.mxu0 0.0
    %3591 = vmatpush1.msra.mxu0 %v3503
    %3592 = vmatprep.subr.mxu0 0.0
    %3593 = vmatpush1.msra.mxu0 %v3504
    %3594 = vmatprep.subr.mxu0 0.0
    %3595 = vmatpush1.msra.mxu0 %v3505
    %3596 = vmatprep.subr.mxu0 0.0
    %3597 = vmatpush1.msra.mxu0 %v3506
    %3598 = vmatprep.subr.mxu0 0.0
    %3599 = vmatpush1.msra.mxu0 %v3507
    %3600 = vmatprep.subr.mxu0 0.0
    %3601 = vmatpush1.msra.mxu0 %v3508
    %3602 = vmatprep.subr.mxu0 0.0
    %3603 = vmatpush1.msra.mxu0 %v3509
    %3604 = vmatprep.subr.mxu0 0.0
    %3605 = vmatpush1.msra.mxu0 %v3510
    %3606 = vmatprep.subr.mxu0 0.0
    %3607 = vmatpush1.msra.mxu0 %v3511
    %3608 = vmatprep.subr.mxu0 0.0
    %3609 = vmatpush1.msra.mxu0 %v3512
    %3610 = vmatprep.subr.mxu0 0.0
    %3611 = vmatpush1.msra.mxu0 %v3513
    %3612 = vmatprep.subr.mxu0 0.0
    %3613 = vmatpush1.msra.mxu0 %v3514
    %3614 = vmatprep.subr.mxu0 0.0
    %3615 = vmatpush1.msra.mxu0 %v3515
    %3616 = vmatprep.subr.mxu0 0.0
    %3617 = vmatpush1.msra.mxu0 %v3516
    %3618 = vmatprep.subr.mxu0 0.0
    %3619 = vmatpush1.msra.mxu0 %v3517
    %3620 = vmatprep.subr.mxu0 0.0
    %3621 = vmatpush1.msra.mxu0 %v3518
    %3622 = vmatprep.mubr.f32.mxu0 %v3484
    %3623 = vmatmul.mubr.f32.gmra.mrb[0].mxu0 %v3483
    %v3624 = vpop.f32.mrb[0].mxu0
    %v3625 = vadd.f32 %v3556, %v3624
    %v3626 = vpop.f32.mrb[0].mxu0
    %3627 = vdwg.mxu0
    %3628 = vmatprep.subr.mxu0 0.0
    %3629 = vmatpush1.msra.mxu0 %v3519
    %3630 = vmatprep.subr.mxu0 0.0
    %3631 = vmatpush1.msra.mxu0 %v3520
    %3632 = vmatprep.subr.mxu0 0.0
    %3633 = vmatpush1.msra.mxu0 %v3521
    %3634 = vmatprep.subr.mxu0 0.0
    %3635 = vmatpush1.msra.mxu0 %v3522
    %3636 = vmatprep.subr.mxu0 0.0
    %3637 = vmatpush1.msra.mxu0 %v3523
    %3638 = vmatprep.subr.mxu0 0.0
    %3639 = vmatpush1.msra.mxu0 %v3524
    %3640 = vmatprep.subr.mxu0 0.0
    %3641 = vmatpush1.msra.mxu0 %v3525
    %3642 = vmatprep.subr.mxu0 0.0
    %3643 = vmatpush1.msra.mxu0 %v3526
    %3644 = vmatprep.subr.mxu0 0.0
    %3645 = vmatpush1.msra.mxu0 %v3527
    %3646 = vmatprep.subr.mxu0 0.0
    %3647 = vmatpush1.msra.mxu0 %v3528
    %3648 = vmatprep.subr.mxu0 0.0
    %3649 = vmatpush1.msra.mxu0 %v3529
    %3650 = vmatprep.subr.mxu0 0.0
    %3651 = vmatpush1.msra.mxu0 %v3530
    %3652 = vmatprep.subr.mxu0 0.0
    %3653 = vmatpush1.msra.mxu0 %v3531
    %3654 = vmatprep.subr.mxu0 0.0
    %3655 = vmatpush1.msra.mxu0 %v3532
    %3656 = vmatprep.subr.mxu0 0.0
    %3657 = vmatpush1.msra.mxu0 %v3533
    %3658 = vmatprep.subr.mxu0 0.0
    %3659 = vmatpush1.msra.mxu0 %v3534
    %3660 = vmatprep.subr.mxu0 0.0
    %3661 = vmatpush1.msra.mxu0 %v3535
    %3662 = vmatprep.subr.mxu0 0.0
    %3663 = vmatpush1.msra.mxu0 %v3536
    %3664 = vmatprep.subr.mxu0 0.0
    %3665 = vmatpush1.msra.mxu0 %v3537
    %3666 = vmatprep.subr.mxu0 0.0
    %3667 = vmatpush1.msra.mxu0 %v3538
    %3668 = vmatprep.subr.mxu0 0.0
    %3669 = vmatpush1.msra.mxu0 %v3539
    %3670 = vmatprep.subr.mxu0 0.0
    %3671 = vmatpush1.msra.mxu0 %v3540
    %3672 = vmatprep.subr.mxu0 0.0
    %3673 = vmatpush1.msra.mxu0 %v3541
    %3674 = vmatprep.subr.mxu0 0.0
    %3675 = vmatpush1.msra.mxu0 %v3542
    %3676 = vmatprep.subr.mxu0 0.0
    %3677 = vmatpush1.msra.mxu0 %v3543
    %3678 = vmatprep.subr.mxu0 0.0
    %3679 = vmatpush1.msra.mxu0 %v3544
    %3680 = vmatprep.subr.mxu0 0.0
    %3681 = vmatpush1.msra.mxu0 %v3545
    %3682 = vmatprep.subr.mxu0 0.0
    %3683 = vmatpush1.msra.mxu0 %v3546
    %3684 = vmatprep.subr.mxu0 0.0
    %3685 = vmatpush1.msra.mxu0 %v3547
    %3686 = vmatprep.subr.mxu0 0.0
    %3687 = vmatpush1.msra.mxu0 %v3548
    %3688 = vmatprep.subr.mxu0 0.0
    %3689 = vmatpush1.msra.mxu0 %v3549
    %3690 = vmatprep.subr.mxu0 0.0
    %3691 = vmatpush1.msra.mxu0 %v3550
    %3692 = vmatprep.mubr.f32.mxu0 %v3486
    %3693 = vmatmul.mubr.f32.gmra.mrb[0].mxu0 %v3485
    %v3694 = vpop.f32.mrb[0].mxu0
    %v3695 = vadd.f32 %v3625, %v3694
    %v3696 = vpop.f32.mrb[0].mxu0
    %3697 = vdwg.mxu0
    %3698 = vst [vmem:[#allocation11] sm:$0x3] %v3695
    // Predicated region
    $region42: #{tpu_custom_call.1} parent=1 // pred_check
      _
    $region43: #{tpu_custom_call.1} parent=1 // pred_check_branch
      %3700 = sbr.rel (0) target = $region45
    $region44: #{tpu_custom_call.1} parent=1 // pred_region
      %s3702 = ssub.s32 32, 32
      %3703 = vsyncadd [#allocation4], %s3702
      %s3705 = sshll.u32 [#allocation11], 4
      %s3706 = int_to_ptr.vmem [resolvable:$true] %s3705
      %3708 = dma.vmem_to_hbm [thread:$0]  %s3706, 32, %s5, [#allocation4]
    $region45: #{tpu_custom_call.1} parent=1 // pred_fallthru
      _
    // Predicated region
    $region46: #{tpu_custom_call.1} parent=1 // pred_check
      _
    $region47: #{tpu_custom_call.1} parent=1 // pred_check_branch
      %3710 = sbr.rel (0) target = $region49
    $region48: #{tpu_custom_call.1} parent=1 // pred_region
      %3711 = dma.done [#allocation4], 32
    $region49: #{tpu_custom_call.1} parent=1 // pred_fallthru
      _
    %3712 = vsyncpa [#allocation3], 1
    %3713 = vsyncpa [#allocation6], 1
    %3714 = vsyncpa [#allocation9], 1
    %3715 = vsyncpa [#allocation4], 1

</llo_original>
